<compile_context>
chip_gen: v5e
topology: v5e:2x2
jax: 0.10.0
libtpu: 0.0.40
codegen_flags: <defaults>
</compile_context>

<pallas_src>
import math

import jax
import jax.numpy as jnp
from jax.experimental import pallas as pl
from jax.experimental.pallas import tpu as pltpu

F32 = jnp.float32
BF16 = jnp.bfloat16


def _round_up(x, m):
    return ((x + m - 1) // m) * m


def _pad_rows(x, n_pad):
    if x.shape[0] == n_pad:
        return x
    pad = [(0, n_pad - x.shape[0])] + [(0, 0)] * (x.ndim - 1)
    return jnp.pad(x, pad)


# ----------------------------------------------------------------------------
# Fused decoder-step kernel.  Grid = (batch_tiles, vocab_tiles); the attention +
# GRU part runs once per batch tile (v == 0), the classifier runs per vocab tile.
# ----------------------------------------------------------------------------
def _decoder_step_kernel(
    # batch-tiled inputs (index constant over the vocab axis)
    embed_ref,      # (bn, E)    f32   embedding * dropout (computed wrapper-side)
    lens_ref,       # (bn, 1)    int32
    attn_emb_ref,   # (bn, L, A) bf16
    k_part_ref,     # (bn, L, S) bf16  attn_emb @ Wk, precomputed once per sequence
    fc_emb_ref,     # (bn, F)    f32
    h0_ref,         # (bn, D)    f32
    # VMEM-resident weights (constant index_map, single-buffered)
    wq_ref,         # (D, S)  bf16
    attn_vec_ref,   # (2, S)  f32   row0 = b_attn, row1 = v_attn
    w_fc_ref,       # (F, E)  bf16
    w_ctx_ref,      # (A, E)  bf16
    w_ih_e_ref,     # (E, 3D) bf16
    w_ih_c_ref,     # (E, 3D) bf16
    w_ih_f_ref,     # (E, 3D) bf16
    w_hh_ref,       # (D, 3D) bf16
    gru_bias_ref,   # (2, 3D) f32   row0 = b_ih (+ folded b_fc/b_ctx), row1 = b_hh
    # classifier, streamed over the vocab grid axis
    w_cls_ref,      # (D, tv) bf16
    b_cls_ref,      # (1, tv) f32
    # outputs
    h_out_ref,      # (bn, D)  f32   index (i, 0)
    attn_w_ref,     # (bn, L)  f32   index (i, 0)
    logit_ref,      # (bn, tv) f32   index (i, v)
    # scratch
    h_scratch,      # (bn, D)  f32
):
    @pl.when(pl.program_id(1) == 0)
    def _attention_and_gru():
        bn, L, _ = attn_emb_ref.shape
        D = h0_ref.shape[1]
        h0 = h0_ref[...]
        embed = embed_ref[...]

        # --- 2) Bahdanau additive attention (key part precomputed wrapper-side)
        q_part = jnp.dot(h0.astype(BF16), wq_ref[...],
                         preferred_element_type=F32)                       # (bn, S)
        b_attn = attn_vec_ref[0:1, :]                                      # (1, S)
        v_attn = attn_vec_ref[1:2, :]                                      # (1, S)
        act = jnp.tanh(k_part_ref[...].astype(F32)
                       + q_part[:, None, :] + b_attn[None])                # (bn, L, S)
        score = jnp.sum(act * v_attn[None], axis=-1)                       # (bn, L)

        valid = jax.lax.broadcasted_iota(jnp.int32, (bn, L), 1) < lens_ref[...]
        score = jnp.where(valid, score, jnp.float32(-1e10))
        score = score - jnp.max(score, axis=-1, keepdims=True)
        p = jnp.exp(score)
        inv_den = pl.reciprocal(jnp.sum(p, axis=-1, keepdims=True), approx=True)
        weights = p * inv_den                                              # (bn, L)
        attn_w_ref[...] = weights.astype(attn_w_ref.dtype)

        ctx = jnp.sum(weights[:, :, None] * attn_emb_ref[...].astype(F32),
                      axis=1)                                              # (bn, A)

        # --- 3) projections (their biases were folded into the GRU input bias)
        p_fc = jnp.dot(fc_emb_ref[...].astype(BF16), w_fc_ref[...],
                       preferred_element_type=F32)                         # (bn, E)
        p_ctx = jnp.dot(ctx.astype(BF16), w_ctx_ref[...],
                        preferred_element_type=F32)                        # (bn, E)

        # --- 4) GRU cell (PyTorch gate order r|z|n; rnn_input = [embed|p_ctx|p_fc],
        #        W_ih pre-split row-wise so the kernel never concatenates along lanes)
        gi = (jnp.dot(embed.astype(BF16), w_ih_e_ref[...], preferred_element_type=F32)
              + jnp.dot(p_ctx.astype(BF16), w_ih_c_ref[...], preferred_element_type=F32)
              + jnp.dot(p_fc.astype(BF16), w_ih_f_ref[...], preferred_element_type=F32)
              + gru_bias_ref[0:1, :])                                      # (bn, 3D)
        gh = (jnp.dot(h0.astype(BF16), w_hh_ref[...], preferred_element_type=F32)
              + gru_bias_ref[1:2, :])

        r = jax.nn.sigmoid(gi[:, 0 * D:1 * D] + gh[:, 0 * D:1 * D])
        z = jax.nn.sigmoid(gi[:, 1 * D:2 * D] + gh[:, 1 * D:2 * D])
        n = jnp.tanh(gi[:, 2 * D:3 * D] + r * gh[:, 2 * D:3 * D])
        h_new = (1.0 - z) * n + z * h0

        h_scratch[...] = h_new
        h_out_ref[...] = h_new.astype(h_out_ref.dtype)

    # --- 5) classifier tile: runs every grid step; the next w_cls tile's DMA
    #        overlaps this matmul and (at v==0) the attention/GRU compute above.
    logit_ref[...] = (
        jnp.dot(h_scratch[...].astype(BF16), w_cls_ref[...],
                preferred_element_type=F32)
        + b_cls_ref[...]).astype(logit_ref.dtype)


# ----------------------------------------------------------------------------
# Parameters (PyTorch-equivalent layout, f32) and one-time kernel preparation
# ----------------------------------------------------------------------------
def init_decoder_params(key, *, vocab_size, emb_dim, fc_emb_dim, attn_emb_dim,
                        d_model, attn_size=None):
    attn_size = d_model if attn_size is None else attn_size
    ks = iter(jax.random.split(key, 24))

    def dense(fan_in, shape):
        return jax.random.normal(next(ks), shape, F32) / math.sqrt(fan_in)

    def bias(shape):
        return jax.random.normal(next(ks), shape, F32) * 0.05

    D3 = 3 * d_model
    return dict(
        emb_table=jax.random.normal(next(ks), (vocab_size, emb_dim), F32) * 0.1,
        # h2attn weight split into query / key parts (already in_dim x out_dim)
        wq=dense(d_model + attn_emb_dim, (d_model, attn_size)),
        wk=dense(d_model + attn_emb_dim, (attn_emb_dim, attn_size)),
        b_attn=bias((1, attn_size)),
        v_attn=jax.random.normal(next(ks), (1, attn_size), F32) * 0.1,
        w_fc=dense(fc_emb_dim, (fc_emb_dim, emb_dim)),
        b_fc=bias((1, emb_dim)),
        w_ctx=dense(attn_emb_dim, (attn_emb_dim, emb_dim)),
        b_ctx=bias((1, emb_dim)),
        # GRU weight_ih (transposed, gate order r|z|n) split over [embed|p_ctx|p_fc]
        w_ih_e=dense(3 * emb_dim, (emb_dim, D3)),
        w_ih_c=dense(3 * emb_dim, (emb_dim, D3)),
        w_ih_f=dense(3 * emb_dim, (emb_dim, D3)),
        w_hh=dense(d_model, (d_model, D3)),
        b_ih=bias((1, D3)),
        b_hh=bias((1, D3)),
        w_cls=dense(d_model, (d_model, vocab_size)),
        b_cls=bias((1, vocab_size)),
    )


def prepare_decoder_params(params, *, vocab_tile=1024):
    """One-time conversion into kernel-ready weights: bf16 casts, bias folding
    (b_ih' = b_ih + b_fc @ W_ih_f + b_ctx @ W_ih_c), bias stacking, and classifier
    padding to a multiple of the vocab tile.  Call ONCE, outside the decode loop."""
    V = params['w_cls'].shape[1]
    tv = _round_up(min(vocab_tile, _round_up(V, 128)), 128)
    v_pad = _round_up(V, tv)

    b_ih = (params['b_ih']
            + params['b_fc'] @ params['w_ih_f']
            + params['b_ctx'] @ params['w_ih_c'])
    w_cls = jnp.pad(params['w_cls'], ((0, 0), (0, v_pad - V)))
    b_cls = jnp.pad(params['b_cls'], ((0, 0), (0, v_pad - V)))

    return dict(
        emb_table=params['emb_table'].astype(F32),
        wq=params['wq'].astype(BF16),
        wk=params['wk'].astype(BF16),
        attn_vec=jnp.concatenate([params['b_attn'], params['v_attn']], 0).astype(F32),
        w_fc=params['w_fc'].astype(BF16),
        w_ctx=params['w_ctx'].astype(BF16),
        w_ih_e=params['w_ih_e'].astype(BF16),
        w_ih_c=params['w_ih_c'].astype(BF16),
        w_ih_f=params['w_ih_f'].astype(BF16),
        w_hh=params['w_hh'].astype(BF16),
        gru_bias=jnp.concatenate([b_ih, params['b_hh']], 0).astype(F32),
        w_cls=w_cls.astype(BF16),
        b_cls=b_cls.astype(F32),
        vocab_size=V, vocab_pad=v_pad, vocab_tile=tv,
    )


def precompute_attn_keys(prep, attn_emb):
    """attn_emb is constant across decode steps: project it through Wk once per
    sequence (outside the per-token loop) and feed the result to every step."""
    k = jnp.einsum('nla,as->nls', attn_emb.astype(BF16), prep['wk'],
                   preferred_element_type=F32)
    return k.astype(BF16)


def make_dropout_mask(key, shape, rate):
    """Pre-scaled inverted-dropout mask, generated outside the kernel."""
    keep = jax.random.bernoulli(key, 1.0 - rate, shape)
    return keep.astype(F32) / (1.0 - rate)


# ----------------------------------------------------------------------------
# Wrapper: one decoding step
# ----------------------------------------------------------------------------
def bah_attn_cat_fc_decoder_forward(prep, word, fc_emb, attn_emb, attn_emb_len,
                                    state=None, dropout_mask=None, k_part=None,
                                    *, batch_tile=None, single_buffer_weights=True):
    """word:[N] int, fc_emb:[N,F], attn_emb:[N,L,A], attn_emb_len:[N] int,
    state: None | [N,D] | [1,N,D].  Returns a PyTorch-style output dict."""
    N = word.shape[0]
    D = prep['w_hh'].shape[0]
    L = attn_emb.shape[1]
    V, V_pad, tv = prep['vocab_size'], prep['vocab_pad'], prep['vocab_tile']

    # 1) embedding gather + dropout, done OUTSIDE the kernel (XLA gather).
    embed = jnp.take(prep['emb_table'], word.astype(jnp.int32), axis=0)
    if dropout_mask is not None:
        embed = embed * dropout_mask.astype(F32)

    if k_part is None:
        # TODO(synk): in a decode loop call precompute_attn_keys() once per sequence.
        k_part = precompute_attn_keys(prep, attn_emb)

    h0 = (jnp.zeros((N, D), F32) if state is None
          else (state[0] if state.ndim == 3 else state).astype(F32))

    # Batch tile: prefer >=2 grid steps (DMA pipelining + v7x megacore), cap at 128
    # so the (bn, L, S) attention temporaries stay bounded.
    if batch_tile is None:
        n8 = _round_up(N, 8)
        bn = n8 if n8 < 16 else min(128, max(8, (n8 // 2) // 8 * 8))
    else:
        bn = batch_tile
    assert bn == N or bn % 8 == 0, "batch tile must be 8-aligned (or equal N)"
    N_pad = _round_up(N, bn)

    lens2d = _pad_rows(attn_emb_len.reshape(N, 1).astype(jnp.int32), N_pad)
    batch_inputs = [
        _pad_rows(embed.astype(F32), N_pad),
        lens2d,
        _pad_rows(attn_emb.astype(BF16), N_pad),
        _pad_rows(k_part.astype(BF16), N_pad),
        _pad_rows(fc_emb.astype(F32), N_pad),
        _pad_rows(h0, N_pad),
    ]
    weight_names = ['wq', 'attn_vec', 'w_fc', 'w_ctx',
                    'w_ih_e', 'w_ih_c', 'w_ih_f', 'w_hh', 'gru_bias']
    weights = [prep[k] for k in weight_names]

    grid = (N_pad // bn, V_pad // tv)
    S_attn = prep['wq'].shape[1]

    def batch_spec(arr):
        nd = arr.ndim
        return pl.BlockSpec((bn,) + tuple(arr.shape[1:]),
                            lambda i, v, _n=nd: (i,) + (0,) * (_n - 1))

    def const_spec(arr, single_buffer):
        nd = arr.ndim
        idx = lambda i, v, _n=nd: (0,) * _n
        if single_buffer:   # constant blocks need no double buffer (halves weight VMEM)
            return pl.BlockSpec(tuple(arr.shape), idx, pipeline_mode=pl.Buffered(1))
        return pl.BlockSpec(tuple(arr.shape), idx)

    out_shape = (jax.ShapeDtypeStruct((N_pad, D), F32),
                 jax.ShapeDtypeStruct((N_pad, L), F32),
                 jax.ShapeDtypeStruct((N_pad, V_pad), F32))
    out_specs = (pl.BlockSpec((bn, D), lambda i, v: (i, 0)),
                 pl.BlockSpec((bn, L), lambda i, v: (i, 0)),
                 pl.BlockSpec((bn, tv), lambda i, v: (i, v)))

    def run(single_buffer):
        in_specs = ([batch_spec(a) for a in batch_inputs]
                    + [const_spec(w, single_buffer) for w in weights]
                    + [pl.BlockSpec((D, tv), lambda i, v: (0, v)),
                       pl.BlockSpec((1, tv), lambda i, v: (0, v))])

        # VMEM budget: blocks (+ double buffers) + attention temporaries + headroom.
        def nbytes(a, shape=None, bufs=2):
            s = shape if shape is not None else a.shape
            return bufs * math.prod(s) * jnp.dtype(a.dtype).itemsize
        vmem = sum(nbytes(a, (bn,) + tuple(a.shape[1:])) for a in batch_inputs)
        vmem += sum(nbytes(w, bufs=(1 if single_buffer else 2)) for w in weights)
        vmem += nbytes(prep['w_cls'], (D, tv)) + nbytes(prep['b_cls'], (1, tv))
        vmem += 2 * (bn * D + bn * L + bn * tv) * 4 + bn * D * 4        # outs + scratch
        vmem += 4 * bn * L * S_attn * 4                                 # attn temporaries
        vmem_limit = min(128 * 1024 * 1024, max(16 * 1024 * 1024, int(vmem * 1.5)))

        return pl.pallas_call(
            _decoder_step_kernel,
            out_shape=out_shape,
            grid_spec=pltpu.PrefetchScalarGridSpec(
                num_scalar_prefetch=0,
                grid=grid,
                in_specs=in_specs,
                out_specs=out_specs,
                scratch_shapes=[pltpu.VMEM((bn, D), F32)],
            ),
            compiler_params=pltpu.CompilerParams(
                dimension_semantics=("parallel", "arbitrary"),
                vmem_limit_bytes=vmem_limit,
            ),
        )(*batch_inputs, *weights, prep['w_cls'], prep['b_cls'])

    if single_buffer_weights:
        try:
            h_new, attn_w, logit = run(True)
        except Exception:     # pipeline_mode=Buffered(1) unsupported on this JAX/TPU
            h_new, attn_w, logit = run(False)
    else:
        h_new, attn_w, logit = run(False)

    h_new = h_new[:N]
    return {
        'state': h_new[None, :, :],          # (1, N, D) GRU hidden state
        'embed': h_new[:, None, :],          # (N, 1, D) GRU output for this step
        'logit': logit[:N, None, :V],        # (N, 1, V)
        'attn_weight': attn_w[:N],           # (N, L)
    }


# ----------------------------------------------------------------------------
# Plain-JAX f32 reference (mirrors the PyTorch forward)
# ----------------------------------------------------------------------------
def _reference_forward(params, word, fc_emb, attn_emb, attn_emb_len, h0, drop):
    emb = params['emb_table'][word] * drop
    q_part = h0 @ params['wq']
    k_part = jnp.einsum('nla,as->nls', attn_emb, params['wk'])
    attn_out = jnp.tanh(k_part + q_part[:, None, :] + params['b_attn'])
    score = jnp.sum(attn_out * params['v_attn'], axis=-1)
    L = attn_emb.shape[1]
    valid = jnp.arange(L)[None, :] < attn_emb_len[:, None]
    score = jnp.where(valid, score, -1e10)
    w = jax.nn.softmax(score, axis=-1)
    ctx = jnp.einsum('nl,nla->na', w, attn_emb)
    p_fc = fc_emb @ params['w_fc'] + params['b_fc']
    p_ctx = ctx @ params['w_ctx'] + params['b_ctx']
    gi = (emb @ params['w_ih_e'] + p_ctx @ params['w_ih_c']
          + p_fc @ params['w_ih_f'] + params['b_ih'])
    gh = h0 @ params['w_hh'] + params['b_hh']
    D = h0.shape[1]
    r = jax.nn.sigmoid(gi[:, :D] + gh[:, :D])
    z = jax.nn.sigmoid(gi[:, D:2 * D] + gh[:, D:2 * D])
    n = jnp.tanh(gi[:, 2 * D:] + r * gh[:, 2 * D:])
    h_new = (1.0 - z) * n + z * h0
    logit = h_new @ params['w_cls'] + params['b_cls']
    return h_new, logit, w


# ----------------------------------------------------------------------------
# Demo / self-test
# ----------------------------------------------------------------------------
if __name__ == "__main__":
    # Small demo shapes: feature dims 128-aligned; vocab deliberately NOT aligned
    # (250) to exercise the vocab padding + streamed-classifier path.
    vocab_size, emb_dim, fc_emb_dim, attn_emb_dim, d_model = 250, 128, 128, 128, 128
    N, L = 16, 16

    root = jax.random.PRNGKey(0)
    k_param, k_word, k_fc, k_attn, k_len = jax.random.split(root, 5)
    params = init_decoder_params(k_param, vocab_size=vocab_size, emb_dim=emb_dim,
                                 fc_emb_dim=fc_emb_dim, attn_emb_dim=attn_emb_dim,
                                 d_model=d_model)
    word = jax.random.randint(k_word, (N,), 0, vocab_size, dtype=jnp.int32)
    fc_emb = jax.random.normal(k_fc, (N, fc_emb_dim), F32)
    attn_emb = jax.random.normal(k_attn, (N, L, attn_emb_dim), F32)
    attn_emb_len = jax.random.randint(k_len, (N,), 3, L + 1, dtype=jnp.int32)

    # One-time prep (outside the decode loop): bf16 weights, bias folding, key proj.
    prep = prepare_decoder_params(params, vocab_tile=128)   # -> 2 vocab tiles
    k_part = precompute_attn_keys(prep, attn_emb)           # once per sequence

    # Eval-mode forward (dropout = identity), first decoding step (state=None),
    # batch_tile=8 -> 2 "parallel" batch tiles in the grid.
    out = bah_attn_cat_fc_decoder_forward(prep, word, fc_emb, attn_emb, attn_emb_len,
                                          state=None, dropout_mask=None,
                                          k_part=k_part, batch_tile=8)
    out = jax.block_until_ready(out)

    assert out['state'].shape == (1, N, d_model)
    assert out['embed'].shape == (N, 1, d_model)
    assert out['logit'].shape == (N, 1, vocab_size)
    assert out['attn_weight'].shape == (N, L)

    h_ref, logit_ref, w_ref = _reference_forward(
        params, word, fc_emb, attn_emb, attn_emb_len,
        jnp.zeros((N, d_model), F32), jnp.ones((N, emb_dim), F32))

    # bf16 weights -> slightly looser tolerances than a pure-f32 kernel.
    assert jnp.allclose(out['attn_weight'], w_ref, atol=3e-2, rtol=3e-2), "attn mismatch"
    assert jnp.allclose(out['state'][0], h_ref, atol=5e-2, rtol=5e-2), "hidden mismatch"
    assert jnp.allclose(out['logit'][:, 0, :], logit_ref, atol=5e-2, rtol=5e-2), "logit mismatch"

    print("KERNEL_OK")
</pallas_src>

<mosaic_0001>
module attributes {stable_mosaic.version = 11 : i64} {
  func.func @_decoder_step_kernel(%arg0: i32, %arg1: i32, %arg2: memref<8x128xf32, #tpu.memory_space<vmem>>, %arg3: memref<8x1xi32, #tpu.memory_space<vmem>>, %arg4: memref<8x16x128xbf16, #tpu.memory_space<vmem>>, %arg5: memref<8x16x128xbf16, #tpu.memory_space<vmem>>, %arg6: memref<8x128xf32, #tpu.memory_space<vmem>>, %arg7: memref<8x128xf32, #tpu.memory_space<vmem>>, %arg8: memref<128x128xbf16, #tpu.memory_space<vmem>>, %arg9: memref<2x128xf32, #tpu.memory_space<vmem>>, %arg10: memref<128x128xbf16, #tpu.memory_space<vmem>>, %arg11: memref<128x128xbf16, #tpu.memory_space<vmem>>, %arg12: memref<128x384xbf16, #tpu.memory_space<vmem>>, %arg13: memref<128x384xbf16, #tpu.memory_space<vmem>>, %arg14: memref<128x384xbf16, #tpu.memory_space<vmem>>, %arg15: memref<128x384xbf16, #tpu.memory_space<vmem>>, %arg16: memref<2x384xf32, #tpu.memory_space<vmem>>, %arg17: memref<128x128xbf16, #tpu.memory_space<vmem>>, %arg18: memref<1x128xf32, #tpu.memory_space<vmem>>, %arg19: memref<8x128xf32, #tpu.memory_space<vmem>>, %arg20: memref<8x16xf32, #tpu.memory_space<vmem>>, %arg21: memref<8x128xf32, #tpu.memory_space<vmem>>, %arg22: memref<8x128xf32, #tpu.memory_space<vmem>>) attributes {dimension_semantics = [#tpu.dimension_semantics<parallel>, #tpu.dimension_semantics<arbitrary>], iteration_bounds = array<i64: 2, 2>, scalar_prefetch = 0 : i64, scratch_operands = 1 : i64, tpu.core_type = #tpu.core_type<tc>, window_params = [{transform_indices = @transform_0, window_bounds = array<i64: 8, 128>}, {transform_indices = @transform_1, window_bounds = array<i64: 8, 1>}, {transform_indices = @transform_2, window_bounds = array<i64: 8, 16, 128>}, {transform_indices = @transform_3, window_bounds = array<i64: 8, 16, 128>}, {transform_indices = @transform_4, window_bounds = array<i64: 8, 128>}, {transform_indices = @transform_5, window_bounds = array<i64: 8, 128>}, {pipeline_mode = #tpu.pipeline_mode<synchronous>, transform_indices = @transform_6, window_bounds = array<i64: 128, 128>}, {pipeline_mode = #tpu.pipeline_mode<synchronous>, transform_indices = @transform_7, window_bounds = array<i64: 2, 128>}, {pipeline_mode = #tpu.pipeline_mode<synchronous>, transform_indices = @transform_8, window_bounds = array<i64: 128, 128>}, {pipeline_mode = #tpu.pipeline_mode<synchronous>, transform_indices = @transform_9, window_bounds = array<i64: 128, 128>}, {pipeline_mode = #tpu.pipeline_mode<synchronous>, transform_indices = @transform_10, window_bounds = array<i64: 128, 384>}, {pipeline_mode = #tpu.pipeline_mode<synchronous>, transform_indices = @transform_11, window_bounds = array<i64: 128, 384>}, {pipeline_mode = #tpu.pipeline_mode<synchronous>, transform_indices = @transform_12, window_bounds = array<i64: 128, 384>}, {pipeline_mode = #tpu.pipeline_mode<synchronous>, transform_indices = @transform_13, window_bounds = array<i64: 128, 384>}, {pipeline_mode = #tpu.pipeline_mode<synchronous>, transform_indices = @transform_14, window_bounds = array<i64: 2, 384>}, {transform_indices = @transform_15, window_bounds = array<i64: 128, 128>}, {transform_indices = @transform_16, window_bounds = array<i64: 1, 128>}, {transform_indices = @transform_17, window_bounds = array<i64: 8, 128>}, {transform_indices = @transform_18, window_bounds = array<i64: 8, 16>}, {transform_indices = @transform_19, window_bounds = array<i64: 8, 128>}]} {
    %c0_i32 = arith.constant 0 : i32
    %0 = arith.cmpi eq, %arg1, %c0_i32 : i32
    %1 = arith.extui %0 : i1 to i32
    %c0_i32_0 = arith.constant 0 : i32
    %2 = arith.cmpi ne, %1, %c0_i32_0 : i32
    scf.if %2 {
      %c0_8 = arith.constant 0 : index
      %c0_9 = arith.constant 0 : index
      %11 = vector.load %arg7[%c0_8, %c0_9] : memref<8x128xf32, #tpu.memory_space<vmem>>, vector<8x128xf32>
      %c0_10 = arith.constant 0 : index
      %c0_11 = arith.constant 0 : index
      %12 = vector.load %arg2[%c0_10, %c0_11] : memref<8x128xf32, #tpu.memory_space<vmem>>, vector<8x128xf32>
      %13 = arith.truncf %11 : vector<8x128xf32> to vector<8x128xbf16>
      %c0_12 = arith.constant 0 : index
      %c0_13 = arith.constant 0 : index
      %14 = vector.load %arg8[%c0_12, %c0_13] : memref<128x128xbf16, #tpu.memory_space<vmem>>, vector<128x128xbf16>
      %cst_14 = arith.constant dense<0.000000e+00> : vector<8x128xf32>
      %15 = tpu.matmul %13, %14, %cst_14 {dimension_numbers = #tpu.dot_dimension_numbers<[1], [0], [0], [1], [0, 0, 1, 1], [], []>} : vector<8x128xbf16>, vector<128x128xbf16>, vector<8x128xf32> -> vector<8x128xf32>
      %c0_15 = arith.constant 0 : index
      %c0_16 = arith.constant 0 : index
      %16 = vector.load %arg9[%c0_15, %c0_16] : memref<2x128xf32, #tpu.memory_space<vmem>>, vector<1x128xf32>
      %c1 = arith.constant 1 : index
      %c0_17 = arith.constant 0 : index
      %17 = vector.load %arg9[%c1, %c0_17] : memref<2x128xf32, #tpu.memory_space<vmem>>, vector<1x128xf32>
      %c0_18 = arith.constant 0 : index
      %c0_19 = arith.constant 0 : index
      %c0_20 = arith.constant 0 : index
      %18 = vector.load %arg5[%c0_18, %c0_19, %c0_20] : memref<8x16x128xbf16, #tpu.memory_space<vmem>>, vector<8x16x128xbf16>
      %19 = arith.extf %18 : vector<8x16x128xbf16> to vector<8x16x128xf32>
      %20 = vector.shape_cast %15 : vector<8x128xf32> to vector<8x1x128xf32>
      %21 = vector.broadcast %20 : vector<8x1x128xf32> to vector<8x16x128xf32>
      %22 = arith.addf %19, %21 : vector<8x16x128xf32>
      %23 = vector.shape_cast %16 : vector<1x128xf32> to vector<1x1x128xf32>
      %24 = vector.broadcast %23 : vector<1x1x128xf32> to vector<8x16x128xf32>
      %25 = arith.addf %22, %24 : vector<8x16x128xf32>
      %26 = math.tanh %25 : vector<8x16x128xf32>
      %27 = vector.shape_cast %17 : vector<1x128xf32> to vector<1x1x128xf32>
      %28 = vector.broadcast %27 : vector<1x1x128xf32> to vector<8x16x128xf32>
      %29 = arith.mulf %26, %28 : vector<8x16x128xf32>
      %cst_21 = arith.constant dense<0.000000e+00> : vector<8x16xf32>
      %30 = vector.multi_reduction <add>, %29, %cst_21 [2] : vector<8x16x128xf32> to vector<8x16xf32>
      %31 = tpu.iota {dimensions = array<i32: 1>} : vector<8x16xi32>
      %c0_22 = arith.constant 0 : index
      %c0_23 = arith.constant 0 : index
      %32 = vector.load %arg3[%c0_22, %c0_23] : memref<8x1xi32, #tpu.memory_space<vmem>>, vector<8x1xi32>
      %33 = vector.broadcast %32 : vector<8x1xi32> to vector<8x16xi32>
      %34 = arith.cmpi slt, %31, %33 : vector<8x16xi32>
      %cst_24 = arith.constant -1.000000e+10 : f32
      %35 = vector.broadcast %cst_24 : f32 to vector<8x16xf32>
      %36 = arith.select %34, %30, %35 : vector<8x16xi1>, vector<8x16xf32>
      %cst_25 = arith.constant dense<0xFF800000> : vector<8xf32>
      %37 = vector.multi_reduction <maximumf>, %36, %cst_25 [1] : vector<8x16xf32> to vector<8xf32>
      %38 = vector.shape_cast %37 : vector<8xf32> to vector<8x1xf32>
      %39 = vector.broadcast %38 : vector<8x1xf32> to vector<8x16xf32>
      %40 = arith.subf %36, %39 : vector<8x16xf32>
      %41 = math.exp %40 : vector<8x16xf32>
      %cst_26 = arith.constant dense<0.000000e+00> : vector<8xf32>
      %42 = vector.multi_reduction <add>, %41, %cst_26 [1] : vector<8x16xf32> to vector<8xf32>
      %43 = vector.shape_cast %42 : vector<8xf32> to vector<8x1xf32>
      %44 = tpu.reciprocal %43 {approx = true} : vector<8x1xf32> -> vector<8x1xf32>
      %45 = vector.broadcast %44 : vector<8x1xf32> to vector<8x16xf32>
      %46 = arith.mulf %41, %45 : vector<8x16xf32>
      %c0_27 = arith.constant 0 : index
      %c0_28 = arith.constant 0 : index
      %47 = vector.load %arg20[%c0_27, %c0_28] : memref<8x16xf32, #tpu.memory_space<vmem>>, vector<8x16xf32>
      tpu.vector_store %arg20[%c0_27, %c0_28], %46 {strides = array<i32>} : memref<8x16xf32, #tpu.memory_space<vmem>>, vector<8x16xf32>,
      %48 = vector.shape_cast %46 : vector<8x16xf32> to vector<8x16x1xf32>
      %c0_29 = arith.constant 0 : index
      %c0_30 = arith.constant 0 : index
      %c0_31 = arith.constant 0 : index
      %49 = vector.load %arg4[%c0_29, %c0_30, %c0_31] : memref<8x16x128xbf16, #tpu.memory_space<vmem>>, vector<8x16x128xbf16>
      %50 = arith.extf %49 : vector<8x16x128xbf16> to vector<8x16x128xf32>
      %51 = vector.broadcast %48 : vector<8x16x1xf32> to vector<8x16x128xf32>
      %52 = arith.mulf %51, %50 : vector<8x16x128xf32>
      %cst_32 = arith.constant dense<0.000000e+00> : vector<8x128xf32>
      %53 = vector.multi_reduction <add>, %52, %cst_32 [1] : vector<8x16x128xf32> to vector<8x128xf32>
      %c0_33 = arith.constant 0 : index
      %c0_34 = arith.constant 0 : index
      %54 = vector.load %arg6[%c0_33, %c0_34] : memref<8x128xf32, #tpu.memory_space<vmem>>, vector<8x128xf32>
      %55 = arith.truncf %54 : vector<8x128xf32> to vector<8x128xbf16>
      %c0_35 = arith.constant 0 : index
      %c0_36 = arith.constant 0 : index
      %56 = vector.load %arg10[%c0_35, %c0_36] : memref<128x128xbf16, #tpu.memory_space<vmem>>, vector<128x128xbf16>
      %cst_37 = arith.constant dense<0.000000e+00> : vector<8x128xf32>
      %57 = tpu.matmul %55, %56, %cst_37 {dimension_numbers = #tpu.dot_dimension_numbers<[1], [0], [0], [1], [0, 0, 1, 1], [], []>} : vector<8x128xbf16>, vector<128x128xbf16>, vector<8x128xf32> -> vector<8x128xf32>
      %58 = arith.truncf %53 : vector<8x128xf32> to vector<8x128xbf16>
      %c0_38 = arith.constant 0 : index
      %c0_39 = arith.constant 0 : index
      %59 = vector.load %arg11[%c0_38, %c0_39] : memref<128x128xbf16, #tpu.memory_space<vmem>>, vector<128x128xbf16>
      %cst_40 = arith.constant dense<0.000000e+00> : vector<8x128xf32>
      %60 = tpu.matmul %58, %59, %cst_40 {dimension_numbers = #tpu.dot_dimension_numbers<[1], [0], [0], [1], [0, 0, 1, 1], [], []>} : vector<8x128xbf16>, vector<128x128xbf16>, vector<8x128xf32> -> vector<8x128xf32>
      %61 = arith.truncf %12 : vector<8x128xf32> to vector<8x128xbf16>
      %c0_41 = arith.constant 0 : index
      %c0_42 = arith.constant 0 : index
      %62 = vector.load %arg12[%c0_41, %c0_42] : memref<128x384xbf16, #tpu.memory_space<vmem>>, vector<128x384xbf16>
      %cst_43 = arith.constant dense<0.000000e+00> : vector<8x384xf32>
      %63 = tpu.matmul %61, %62, %cst_43 {dimension_numbers = #tpu.dot_dimension_numbers<[1], [0], [0], [1], [0, 0, 1, 1], [], []>} : vector<8x128xbf16>, vector<128x384xbf16>, vector<8x384xf32> -> vector<8x384xf32>
      %64 = arith.truncf %60 : vector<8x128xf32> to vector<8x128xbf16>
      %c0_44 = arith.constant 0 : index
      %c0_45 = arith.constant 0 : index
      %65 = vector.load %arg13[%c0_44, %c0_45] : memref<128x384xbf16, #tpu.memory_space<vmem>>, vector<128x384xbf16>
      %cst_46 = arith.constant dense<0.000000e+00> : vector<8x384xf32>
      %66 = tpu.matmul %64, %65, %cst_46 {dimension_numbers = #tpu.dot_dimension_numbers<[1], [0], [0], [1], [0, 0, 1, 1], [], []>} : vector<8x128xbf16>, vector<128x384xbf16>, vector<8x384xf32> -> vector<8x384xf32>
      %67 = arith.addf %63, %66 : vector<8x384xf32>
      %68 = arith.truncf %57 : vector<8x128xf32> to vector<8x128xbf16>
      %c0_47 = arith.constant 0 : index
      %c0_48 = arith.constant 0 : index
      %69 = vector.load %arg14[%c0_47, %c0_48] : memref<128x384xbf16, #tpu.memory_space<vmem>>, vector<128x384xbf16>
      %cst_49 = arith.constant dense<0.000000e+00> : vector<8x384xf32>
      %70 = tpu.matmul %68, %69, %cst_49 {dimension_numbers = #tpu.dot_dimension_numbers<[1], [0], [0], [1], [0, 0, 1, 1], [], []>} : vector<8x128xbf16>, vector<128x384xbf16>, vector<8x384xf32> -> vector<8x384xf32>
      %71 = arith.addf %67, %70 : vector<8x384xf32>
      %c0_50 = arith.constant 0 : index
      %c0_51 = arith.constant 0 : index
      %72 = vector.load %arg16[%c0_50, %c0_51] : memref<2x384xf32, #tpu.memory_space<vmem>>, vector<1x384xf32>
      %73 = vector.broadcast %72 : vector<1x384xf32> to vector<8x384xf32>
      %74 = arith.addf %71, %73 : vector<8x384xf32>
      %75 = arith.truncf %11 : vector<8x128xf32> to vector<8x128xbf16>
      %c0_52 = arith.constant 0 : index
      %c0_53 = arith.constant 0 : index
      %76 = vector.load %arg15[%c0_52, %c0_53] : memref<128x384xbf16, #tpu.memory_space<vmem>>, vector<128x384xbf16>
      %cst_54 = arith.constant dense<0.000000e+00> : vector<8x384xf32>
      %77 = tpu.matmul %75, %76, %cst_54 {dimension_numbers = #tpu.dot_dimension_numbers<[1], [0], [0], [1], [0, 0, 1, 1], [], []>} : vector<8x128xbf16>, vector<128x384xbf16>, vector<8x384xf32> -> vector<8x384xf32>
      %c1_55 = arith.constant 1 : index
      %c0_56 = arith.constant 0 : index
      %78 = vector.load %arg16[%c1_55, %c0_56] : memref<2x384xf32, #tpu.memory_space<vmem>>, vector<1x384xf32>
      %79 = vector.broadcast %78 : vector<1x384xf32> to vector<8x384xf32>
      %80 = arith.addf %77, %79 : vector<8x384xf32>
      %81 = vector.extract_strided_slice %74 {offsets = [0, 0], sizes = [8, 128], strides = [1, 1]} : vector<8x384xf32> to vector<8x128xf32>
      %82 = vector.extract_strided_slice %80 {offsets = [0, 0], sizes = [8, 128], strides = [1, 1]} : vector<8x384xf32> to vector<8x128xf32>
      %83 = arith.addf %81, %82 : vector<8x128xf32>
      %84 = arith.negf %83 : vector<8x128xf32>
      %85 = math.exp %84 : vector<8x128xf32>
      %cst_57 = arith.constant 1.000000e+00 : f32
      %86 = vector.broadcast %cst_57 : f32 to vector<8x128xf32>
      %87 = arith.addf %86, %85 : vector<8x128xf32>
      %88 = arith.divf %86, %87 : vector<8x128xf32>
      %89 = vector.extract_strided_slice %74 {offsets = [0, 128], sizes = [8, 128], strides = [1, 1]} : vector<8x384xf32> to vector<8x128xf32>
      %90 = vector.extract_strided_slice %80 {offsets = [0, 128], sizes = [8, 128], strides = [1, 1]} : vector<8x384xf32> to vector<8x128xf32>
      %91 = arith.addf %89, %90 : vector<8x128xf32>
      %92 = arith.negf %91 : vector<8x128xf32>
      %93 = math.exp %92 : vector<8x128xf32>
      %cst_58 = arith.constant 1.000000e+00 : f32
      %94 = vector.broadcast %cst_58 : f32 to vector<8x128xf32>
      %95 = arith.addf %94, %93 : vector<8x128xf32>
      %96 = arith.divf %94, %95 : vector<8x128xf32>
      %97 = vector.extract_strided_slice %74 {offsets = [0, 256], sizes = [8, 128], strides = [1, 1]} : vector<8x384xf32> to vector<8x128xf32>
      %98 = vector.extract_strided_slice %80 {offsets = [0, 256], sizes = [8, 128], strides = [1, 1]} : vector<8x384xf32> to vector<8x128xf32>
      %99 = arith.mulf %88, %98 : vector<8x128xf32>
      %100 = arith.addf %97, %99 : vector<8x128xf32>
      %101 = math.tanh %100 : vector<8x128xf32>
      %cst_59 = arith.constant 1.000000e+00 : f32
      %102 = vector.broadcast %cst_59 : f32 to vector<8x128xf32>
      %103 = arith.subf %102, %96 : vector<8x128xf32>
      %104 = arith.mulf %103, %101 : vector<8x128xf32>
      %105 = arith.mulf %96, %11 : vector<8x128xf32>
      %106 = arith.addf %104, %105 : vector<8x128xf32>
      %c0_60 = arith.constant 0 : index
      %c0_61 = arith.constant 0 : index
      %107 = vector.load %arg22[%c0_60, %c0_61] : memref<8x128xf32, #tpu.memory_space<vmem>>, vector<8x128xf32>
      tpu.vector_store %arg22[%c0_60, %c0_61], %106 {strides = array<i32>} : memref<8x128xf32, #tpu.memory_space<vmem>>, vector<8x128xf32>,
      %c0_62 = arith.constant 0 : index
      %c0_63 = arith.constant 0 : index
      %108 = vector.load %arg19[%c0_62, %c0_63] : memref<8x128xf32, #tpu.memory_space<vmem>>, vector<8x128xf32>
      tpu.vector_store %arg19[%c0_62, %c0_63], %106 {strides = array<i32>} : memref<8x128xf32, #tpu.memory_space<vmem>>, vector<8x128xf32>,
    } else {
    }
    %c0 = arith.constant 0 : index
    %c0_1 = arith.constant 0 : index
    %3 = vector.load %arg22[%c0, %c0_1] : memref<8x128xf32, #tpu.memory_space<vmem>>, vector<8x128xf32>
    %4 = arith.truncf %3 : vector<8x128xf32> to vector<8x128xbf16>
    %c0_2 = arith.constant 0 : index
    %c0_3 = arith.constant 0 : index
    %5 = vector.load %arg17[%c0_2, %c0_3] : memref<128x128xbf16, #tpu.memory_space<vmem>>, vector<128x128xbf16>
    %cst = arith.constant dense<0.000000e+00> : vector<8x128xf32>
    %6 = tpu.matmul %4, %5, %cst {dimension_numbers = #tpu.dot_dimension_numbers<[1], [0], [0], [1], [0, 0, 1, 1], [], []>} : vector<8x128xbf16>, vector<128x128xbf16>, vector<8x128xf32> -> vector<8x128xf32>
    %c0_4 = arith.constant 0 : index
    %c0_5 = arith.constant 0 : index
    %7 = vector.load %arg18[%c0_4, %c0_5] : memref<1x128xf32, #tpu.memory_space<vmem>>, vector<1x128xf32>
    %8 = vector.broadcast %7 : vector<1x128xf32> to vector<8x128xf32>
    %9 = arith.addf %6, %8 : vector<8x128xf32>
    %c0_6 = arith.constant 0 : index
    %c0_7 = arith.constant 0 : index
    %10 = vector.load %arg21[%c0_6, %c0_7] : memref<8x128xf32, #tpu.memory_space<vmem>>, vector<8x128xf32>
    tpu.vector_store %arg21[%c0_6, %c0_7], %9 {strides = array<i32>} : memref<8x128xf32, #tpu.memory_space<vmem>>, vector<8x128xf32>,
    return
  }
  func.func @transform_0(%arg0: i32, %arg1: i32) -> (i32, i32) {
    %c0_i32 = arith.constant 0 : i32
    %c0_i32_0 = arith.constant 0 : i32
    return %arg0, %c0_i32 : i32, i32
  }
  func.func @transform_1(%arg0: i32, %arg1: i32) -> (i32, i32) {
    %c0_i32 = arith.constant 0 : i32
    %c0_i32_0 = arith.constant 0 : i32
    return %arg0, %c0_i32 : i32, i32
  }
  func.func @transform_2(%arg0: i32, %arg1: i32) -> (i32, i32, i32) {
    %c0_i32 = arith.constant 0 : i32
    %c0_i32_0 = arith.constant 0 : i32
    %c0_i32_1 = arith.constant 0 : i32
    return %arg0, %c0_i32, %c0_i32_0 : i32, i32, i32
  }
  func.func @transform_3(%arg0: i32, %arg1: i32) -> (i32, i32, i32) {
    %c0_i32 = arith.constant 0 : i32
    %c0_i32_0 = arith.constant 0 : i32
    %c0_i32_1 = arith.constant 0 : i32
    return %arg0, %c0_i32, %c0_i32_0 : i32, i32, i32
  }
  func.func @transform_4(%arg0: i32, %arg1: i32) -> (i32, i32) {
    %c0_i32 = arith.constant 0 : i32
    %c0_i32_0 = arith.constant 0 : i32
    return %arg0, %c0_i32 : i32, i32
  }
  func.func @transform_5(%arg0: i32, %arg1: i32) -> (i32, i32) {
    %c0_i32 = arith.constant 0 : i32
    %c0_i32_0 = arith.constant 0 : i32
    return %arg0, %c0_i32 : i32, i32
  }
  func.func @transform_6(%arg0: i32, %arg1: i32) -> (i32, i32) {
    %c0_i32 = arith.constant 0 : i32
    %c0_i32_0 = arith.constant 0 : i32
    %c0_i32_1 = arith.constant 0 : i32
    return %c0_i32, %c0_i32_0 : i32, i32
  }
  func.func @transform_7(%arg0: i32, %arg1: i32) -> (i32, i32) {
    %c0_i32 = arith.constant 0 : i32
    %c0_i32_0 = arith.constant 0 : i32
    %c0_i32_1 = arith.constant 0 : i32
    return %c0_i32, %c0_i32_0 : i32, i32
  }
  func.func @transform_8(%arg0: i32, %arg1: i32) -> (i32, i32) {
    %c0_i32 = arith.constant 0 : i32
    %c0_i32_0 = arith.constant 0 : i32
    %c0_i32_1 = arith.constant 0 : i32
    return %c0_i32, %c0_i32_0 : i32, i32
  }
  func.func @transform_9(%arg0: i32, %arg1: i32) -> (i32, i32) {
    %c0_i32 = arith.constant 0 : i32
    %c0_i32_0 = arith.constant 0 : i32
    %c0_i32_1 = arith.constant 0 : i32
    return %c0_i32, %c0_i32_0 : i32, i32
  }
  func.func @transform_10(%arg0: i32, %arg1: i32) -> (i32, i32) {
    %c0_i32 = arith.constant 0 : i32
    %c0_i32_0 = arith.constant 0 : i32
    %c0_i32_1 = arith.constant 0 : i32
    return %c0_i32, %c0_i32_0 : i32, i32
  }
  func.func @transform_11(%arg0: i32, %arg1: i32) -> (i32, i32) {
    %c0_i32 = arith.constant 0 : i32
    %c0_i32_0 = arith.constant 0 : i32
    %c0_i32_1 = arith.constant 0 : i32
    return %c0_i32, %c0_i32_0 : i32, i32
  }
  func.func @transform_12(%arg0: i32, %arg1: i32) -> (i32, i32) {
    %c0_i32 = arith.constant 0 : i32
    %c0_i32_0 = arith.constant 0 : i32
    %c0_i32_1 = arith.constant 0 : i32
    return %c0_i32, %c0_i32_0 : i32, i32
  }
  func.func @transform_13(%arg0: i32, %arg1: i32) -> (i32, i32) {
    %c0_i32 = arith.constant 0 : i32
    %c0_i32_0 = arith.constant 0 : i32
    %c0_i32_1 = arith.constant 0 : i32
    return %c0_i32, %c0_i32_0 : i32, i32
  }
  func.func @transform_14(%arg0: i32, %arg1: i32) -> (i32, i32) {
    %c0_i32 = arith.constant 0 : i32
    %c0_i32_0 = arith.constant 0 : i32
    %c0_i32_1 = arith.constant 0 : i32
    return %c0_i32, %c0_i32_0 : i32, i32
  }
  func.func @transform_15(%arg0: i32, %arg1: i32) -> (i32, i32) {
    %c0_i32 = arith.constant 0 : i32
    %c0_i32_0 = arith.constant 0 : i32
    return %c0_i32, %arg1 : i32, i32
  }
  func.func @transform_16(%arg0: i32, %arg1: i32) -> (i32, i32) {
    %c0_i32 = arith.constant 0 : i32
    %c0_i32_0 = arith.constant 0 : i32
    return %c0_i32, %arg1 : i32, i32
  }
  func.func @transform_17(%arg0: i32, %arg1: i32) -> (i32, i32) {
    %c0_i32 = arith.constant 0 : i32
    %c0_i32_0 = arith.constant 0 : i32
    return %arg0, %c0_i32 : i32, i32
  }
  func.func @transform_18(%arg0: i32, %arg1: i32) -> (i32, i32) {
    %c0_i32 = arith.constant 0 : i32
    %c0_i32_0 = arith.constant 0 : i32
    return %arg0, %c0_i32 : i32, i32
  }
  func.func @transform_19(%arg0: i32, %arg1: i32) -> (i32, i32) {
    %c0_i32 = arith.constant 0 : i32
    return %arg0, %arg1 : i32, i32
  }
}

module attributes {stable_mosaic.version = 11 : i64} {
  func.func @_decoder_step_kernel(%arg0: i32, %arg1: i32, %arg2: memref<8x128xf32, #tpu.memory_space<vmem>>, %arg3: memref<8x1xi32, #tpu.memory_space<vmem>>, %arg4: memref<8x16x128xbf16, #tpu.memory_space<vmem>>, %arg5: memref<8x16x128xbf16, #tpu.memory_space<vmem>>, %arg6: memref<8x128xf32, #tpu.memory_space<vmem>>, %arg7: memref<8x128xf32, #tpu.memory_space<vmem>>, %arg8: memref<128x128xbf16, #tpu.memory_space<vmem>>, %arg9: memref<2x128xf32, #tpu.memory_space<vmem>>, %arg10: memref<128x128xbf16, #tpu.memory_space<vmem>>, %arg11: memref<128x128xbf16, #tpu.memory_space<vmem>>, %arg12: memref<128x384xbf16, #tpu.memory_space<vmem>>, %arg13: memref<128x384xbf16, #tpu.memory_space<vmem>>, %arg14: memref<128x384xbf16, #tpu.memory_space<vmem>>, %arg15: memref<128x384xbf16, #tpu.memory_space<vmem>>, %arg16: memref<2x384xf32, #tpu.memory_space<vmem>>, %arg17: memref<128x128xbf16, #tpu.memory_space<vmem>>, %arg18: memref<1x128xf32, #tpu.memory_space<vmem>>, %arg19: memref<8x128xf32, #tpu.memory_space<vmem>>, %arg20: memref<8x16xf32, #tpu.memory_space<vmem>>, %arg21: memref<8x128xf32, #tpu.memory_space<vmem>>, %arg22: memref<8x128xf32, #tpu.memory_space<vmem>>) attributes {dimension_semantics = [#tpu.dimension_semantics<parallel>, #tpu.dimension_semantics<arbitrary>], iteration_bounds = array<i64: 2, 2>, scalar_prefetch = 0 : i64, scratch_operands = 1 : i64, tpu.core_type = #tpu.core_type<tc>, window_params = [{transform_indices = @transform_0, window_bounds = array<i64: 8, 128>}, {transform_indices = @transform_1, window_bounds = array<i64: 8, 1>}, {transform_indices = @transform_2, window_bounds = array<i64: 8, 16, 128>}, {transform_indices = @transform_3, window_bounds = array<i64: 8, 16, 128>}, {transform_indices = @transform_4, window_bounds = array<i64: 8, 128>}, {transform_indices = @transform_5, window_bounds = array<i64: 8, 128>}, {pipeline_mode = #tpu.pipeline_mode<synchronous>, transform_indices = @transform_6, window_bounds = array<i64: 128, 128>}, {pipeline_mode = #tpu.pipeline_mode<synchronous>, transform_indices = @transform_7, window_bounds = array<i64: 2, 128>}, {pipeline_mode = #tpu.pipeline_mode<synchronous>, transform_indices = @transform_8, window_bounds = array<i64: 128, 128>}, {pipeline_mode = #tpu.pipeline_mode<synchronous>, transform_indices = @transform_9, window_bounds = array<i64: 128, 128>}, {pipeline_mode = #tpu.pipeline_mode<synchronous>, transform_indices = @transform_10, window_bounds = array<i64: 128, 384>}, {pipeline_mode = #tpu.pipeline_mode<synchronous>, transform_indices = @transform_11, window_bounds = array<i64: 128, 384>}, {pipeline_mode = #tpu.pipeline_mode<synchronous>, transform_indices = @transform_12, window_bounds = array<i64: 128, 384>}, {pipeline_mode = #tpu.pipeline_mode<synchronous>, transform_indices = @transform_13, window_bounds = array<i64: 128, 384>}, {pipeline_mode = #tpu.pipeline_mode<synchronous>, transform_indices = @transform_14, window_bounds = array<i64: 2, 384>}, {transform_indices = @transform_15, window_bounds = array<i64: 128, 128>}, {transform_indices = @transform_16, window_bounds = array<i64: 1, 128>}, {transform_indices = @transform_17, window_bounds = array<i64: 8, 128>}, {transform_indices = @transform_18, window_bounds = array<i64: 8, 16>}, {transform_indices = @transform_19, window_bounds = array<i64: 8, 128>}]} {
    %c0_i32 = arith.constant 0 : i32
    %0 = arith.cmpi eq, %arg1, %c0_i32 : i32
    %1 = arith.extui %0 : i1 to i32
    %c0_i32_0 = arith.constant 0 : i32
    %2 = arith.cmpi ne, %1, %c0_i32_0 : i32
    scf.if %2 {
      %c0_8 = arith.constant 0 : index
      %c0_9 = arith.constant 0 : index
      %11 = vector.load %arg7[%c0_8, %c0_9] : memref<8x128xf32, #tpu.memory_space<vmem>>, vector<8x128xf32>
      %c0_10 = arith.constant 0 : index
      %c0_11 = arith.constant 0 : index
      %12 = vector.load %arg2[%c0_10, %c0_11] : memref<8x128xf32, #tpu.memory_space<vmem>>, vector<8x128xf32>
      %13 = arith.truncf %11 : vector<8x128xf32> to vector<8x128xbf16>
      %c0_12 = arith.constant 0 : index
      %c0_13 = arith.constant 0 : index
      %14 = vector.load %arg8[%c0_12, %c0_13] : memref<128x128xbf16, #tpu.memory_space<vmem>>, vector<128x128xbf16>
      %cst_14 = arith.constant dense<0.000000e+00> : vector<8x128xf32>
      %15 = tpu.matmul %13, %14, %cst_14 {dimension_numbers = #tpu.dot_dimension_numbers<[1], [0], [0], [1], [0, 0, 1, 1], [], []>} : vector<8x128xbf16>, vector<128x128xbf16>, vector<8x128xf32> -> vector<8x128xf32>
      %c0_15 = arith.constant 0 : index
      %c0_16 = arith.constant 0 : index
      %16 = vector.load %arg9[%c0_15, %c0_16] : memref<2x128xf32, #tpu.memory_space<vmem>>, vector<1x128xf32>
      %c1 = arith.constant 1 : index
      %c0_17 = arith.constant 0 : index
      %17 = vector.load %arg9[%c1, %c0_17] : memref<2x128xf32, #tpu.memory_space<vmem>>, vector<1x128xf32>
      %c0_18 = arith.constant 0 : index
      %c0_19 = arith.constant 0 : index
      %c0_20 = arith.constant 0 : index
      %18 = vector.load %arg5[%c0_18, %c0_19, %c0_20] : memref<8x16x128xbf16, #tpu.memory_space<vmem>>, vector<8x16x128xbf16>
      %19 = arith.extf %18 : vector<8x16x128xbf16> to vector<8x16x128xf32>
      %20 = vector.shape_cast %15 : vector<8x128xf32> to vector<8x1x128xf32>
      %21 = vector.broadcast %20 : vector<8x1x128xf32> to vector<8x16x128xf32>
      %22 = arith.addf %19, %21 : vector<8x16x128xf32>
      %23 = vector.shape_cast %16 : vector<1x128xf32> to vector<1x1x128xf32>
      %24 = vector.broadcast %23 : vector<1x1x128xf32> to vector<8x16x128xf32>
      %25 = arith.addf %22, %24 : vector<8x16x128xf32>
      %26 = math.tanh %25 : vector<8x16x128xf32>
      %27 = vector.shape_cast %17 : vector<1x128xf32> to vector<1x1x128xf32>
      %28 = vector.broadcast %27 : vector<1x1x128xf32> to vector<8x16x128xf32>
      %29 = arith.mulf %26, %28 : vector<8x16x128xf32>
      %cst_21 = arith.constant dense<0.000000e+00> : vector<8x16xf32>
      %30 = vector.multi_reduction <add>, %29, %cst_21 [2] : vector<8x16x128xf32> to vector<8x16xf32>
      %31 = tpu.iota {dimensions = array<i32: 1>} : vector<8x16xi32>
      %c0_22 = arith.constant 0 : index
      %c0_23 = arith.constant 0 : index
      %32 = vector.load %arg3[%c0_22, %c0_23] : memref<8x1xi32, #tpu.memory_space<vmem>>, vector<8x1xi32>
      %33 = vector.broadcast %32 : vector<8x1xi32> to vector<8x16xi32>
      %34 = arith.cmpi slt, %31, %33 : vector<8x16xi32>
      %cst_24 = arith.constant -1.000000e+10 : f32
      %35 = vector.broadcast %cst_24 : f32 to vector<8x16xf32>
      %36 = arith.select %34, %30, %35 : vector<8x16xi1>, vector<8x16xf32>
      %cst_25 = arith.constant dense<0xFF800000> : vector<8xf32>
      %37 = vector.multi_reduction <maximumf>, %36, %cst_25 [1] : vector<8x16xf32> to vector<8xf32>
      %38 = vector.shape_cast %37 : vector<8xf32> to vector<8x1xf32>
      %39 = vector.broadcast %38 : vector<8x1xf32> to vector<8x16xf32>
      %40 = arith.subf %36, %39 : vector<8x16xf32>
      %41 = math.exp %40 : vector<8x16xf32>
      %cst_26 = arith.constant dense<0.000000e+00> : vector<8xf32>
      %42 = vector.multi_reduction <add>, %41, %cst_26 [1] : vector<8x16xf32> to vector<8xf32>
      %43 = vector.shape_cast %42 : vector<8xf32> to vector<8x1xf32>
      %44 = tpu.reciprocal %43 {approx = true} : vector<8x1xf32> -> vector<8x1xf32>
      %45 = vector.broadcast %44 : vector<8x1xf32> to vector<8x16xf32>
      %46 = arith.mulf %41, %45 : vector<8x16xf32>
      %c0_27 = arith.constant 0 : index
      %c0_28 = arith.constant 0 : index
      %47 = vector.load %arg20[%c0_27, %c0_28] : memref<8x16xf32, #tpu.memory_space<vmem>>, vector<8x16xf32>
      tpu.vector_store %arg20[%c0_27, %c0_28], %46 {strides = array<i32>} : memref<8x16xf32, #tpu.memory_space<vmem>>, vector<8x16xf32>,
      %48 = vector.shape_cast %46 : vector<8x16xf32> to vector<8x16x1xf32>
      %c0_29 = arith.constant 0 : index
      %c0_30 = arith.constant 0 : index
      %c0_31 = arith.constant 0 : index
      %49 = vector.load %arg4[%c0_29, %c0_30, %c0_31] : memref<8x16x128xbf16, #tpu.memory_space<vmem>>, vector<8x16x128xbf16>
      %50 = arith.extf %49 : vector<8x16x128xbf16> to vector<8x16x128xf32>
      %51 = vector.broadcast %48 : vector<8x16x1xf32> to vector<8x16x128xf32>
      %52 = arith.mulf %51, %50 : vector<8x16x128xf32>
      %cst_32 = arith.constant dense<0.000000e+00> : vector<8x128xf32>
      %53 = vector.multi_reduction <add>, %52, %cst_32 [1] : vector<8x16x128xf32> to vector<8x128xf32>
      %c0_33 = arith.constant 0 : index
      %c0_34 = arith.constant 0 : index
      %54 = vector.load %arg6[%c0_33, %c0_34] : memref<8x128xf32, #tpu.memory_space<vmem>>, vector<8x128xf32>
      %55 = arith.truncf %54 : vector<8x128xf32> to vector<8x128xbf16>
      %c0_35 = arith.constant 0 : index
      %c0_36 = arith.constant 0 : index
      %56 = vector.load %arg10[%c0_35, %c0_36] : memref<128x128xbf16, #tpu.memory_space<vmem>>, vector<128x128xbf16>
      %cst_37 = arith.constant dense<0.000000e+00> : vector<8x128xf32>
      %57 = tpu.matmul %55, %56, %cst_37 {dimension_numbers = #tpu.dot_dimension_numbers<[1], [0], [0], [1], [0, 0, 1, 1], [], []>} : vector<8x128xbf16>, vector<128x128xbf16>, vector<8x128xf32> -> vector<8x128xf32>
      %58 = arith.truncf %53 : vector<8x128xf32> to vector<8x128xbf16>
      %c0_38 = arith.constant 0 : index
      %c0_39 = arith.constant 0 : index
      %59 = vector.load %arg11[%c0_38, %c0_39] : memref<128x128xbf16, #tpu.memory_space<vmem>>, vector<128x128xbf16>
      %cst_40 = arith.constant dense<0.000000e+00> : vector<8x128xf32>
      %60 = tpu.matmul %58, %59, %cst_40 {dimension_numbers = #tpu.dot_dimension_numbers<[1], [0], [0], [1], [0, 0, 1, 1], [], []>} : vector<8x128xbf16>, vector<128x128xbf16>, vector<8x128xf32> -> vector<8x128xf32>
      %61 = arith.truncf %12 : vector<8x128xf32> to vector<8x128xbf16>
      %c0_41 = arith.constant 0 : index
      %c0_42 = arith.constant 0 : index
      %62 = vector.load %arg12[%c0_41, %c0_42] : memref<128x384xbf16, #tpu.memory_space<vmem>>, vector<128x384xbf16>
      %cst_43 = arith.constant dense<0.000000e+00> : vector<8x384xf32>
      %63 = tpu.matmul %61, %62, %cst_43 {dimension_numbers = #tpu.dot_dimension_numbers<[1], [0], [0], [1], [0, 0, 1, 1], [], []>} : vector<8x128xbf16>, vector<128x384xbf16>, vector<8x384xf32> -> vector<8x384xf32>
      %64 = arith.truncf %60 : vector<8x128xf32> to vector<8x128xbf16>
      %c0_44 = arith.constant 0 : index
      %c0_45 = arith.constant 0 : index
      %65 = vector.load %arg13[%c0_44, %c0_45] : memref<128x384xbf16, #tpu.memory_space<vmem>>, vector<128x384xbf16>
      %cst_46 = arith.constant dense<0.000000e+00> : vector<8x384xf32>
      %66 = tpu.matmul %64, %65, %cst_46 {dimension_numbers = #tpu.dot_dimension_numbers<[1], [0], [0], [1], [0, 0, 1, 1], [], []>} : vector<8x128xbf16>, vector<128x384xbf16>, vector<8x384xf32> -> vector<8x384xf32>
      %67 = arith.addf %63, %66 : vector<8x384xf32>
      %68 = arith.truncf %57 : vector<8x128xf32> to vector<8x128xbf16>
      %c0_47 = arith.constant 0 : index
      %c0_48 = arith.constant 0 : index
      %69 = vector.load %arg14[%c0_47, %c0_48] : memref<128x384xbf16, #tpu.memory_space<vmem>>, vector<128x384xbf16>
      %cst_49 = arith.constant dense<0.000000e+00> : vector<8x384xf32>
      %70 = tpu.matmul %68, %69, %cst_49 {dimension_numbers = #tpu.dot_dimension_numbers<[1], [0], [0], [1], [0, 0, 1, 1], [], []>} : vector<8x128xbf16>, vector<128x384xbf16>, vector<8x384xf32> -> vector<8x384xf32>
      %71 = arith.addf %67, %70 : vector<8x384xf32>
      %c0_50 = arith.constant 0 : index
      %c0_51 = arith.constant 0 : index
      %72 = vector.load %arg16[%c0_50, %c0_51] : memref<2x384xf32, #tpu.memory_space<vmem>>, vector<1x384xf32>
      %73 = vector.broadcast %72 : vector<1x384xf32> to vector<8x384xf32>
      %74 = arith.addf %71, %73 : vector<8x384xf32>
      %75 = arith.truncf %11 : vector<8x128xf32> to vector<8x128xbf16>
      %c0_52 = arith.constant 0 : index
      %c0_53 = arith.constant 0 : index
      %76 = vector.load %arg15[%c0_52, %c0_53] : memref<128x384xbf16, #tpu.memory_space<vmem>>, vector<128x384xbf16>
      %cst_54 = arith.constant dense<0.000000e+00> : vector<8x384xf32>
      %77 = tpu.matmul %75, %76, %cst_54 {dimension_numbers = #tpu.dot_dimension_numbers<[1], [0], [0], [1], [0, 0, 1, 1], [], []>} : vector<8x128xbf16>, vector<128x384xbf16>, vector<8x384xf32> -> vector<8x384xf32>
      %c1_55 = arith.constant 1 : index
      %c0_56 = arith.constant 0 : index
      %78 = vector.load %arg16[%c1_55, %c0_56] : memref<2x384xf32, #tpu.memory_space<vmem>>, vector<1x384xf32>
      %79 = vector.broadcast %78 : vector<1x384xf32> to vector<8x384xf32>
      %80 = arith.addf %77, %79 : vector<8x384xf32>
      %81 = vector.extract_strided_slice %74 {offsets = [0, 0], sizes = [8, 128], strides = [1, 1]} : vector<8x384xf32> to vector<8x128xf32>
      %82 = vector.extract_strided_slice %80 {offsets = [0, 0], sizes = [8, 128], strides = [1, 1]} : vector<8x384xf32> to vector<8x128xf32>
      %83 = arith.addf %81, %82 : vector<8x128xf32>
      %84 = arith.negf %83 : vector<8x128xf32>
      %85 = math.exp %84 : vector<8x128xf32>
      %cst_57 = arith.constant 1.000000e+00 : f32
      %86 = vector.broadcast %cst_57 : f32 to vector<8x128xf32>
      %87 = arith.addf %86, %85 : vector<8x128xf32>
      %88 = arith.divf %86, %87 : vector<8x128xf32>
      %89 = vector.extract_strided_slice %74 {offsets = [0, 128], sizes = [8, 128], strides = [1, 1]} : vector<8x384xf32> to vector<8x128xf32>
      %90 = vector.extract_strided_slice %80 {offsets = [0, 128], sizes = [8, 128], strides = [1, 1]} : vector<8x384xf32> to vector<8x128xf32>
      %91 = arith.addf %89, %90 : vector<8x128xf32>
      %92 = arith.negf %91 : vector<8x128xf32>
      %93 = math.exp %92 : vector<8x128xf32>
      %cst_58 = arith.constant 1.000000e+00 : f32
      %94 = vector.broadcast %cst_58 : f32 to vector<8x128xf32>
      %95 = arith.addf %94, %93 : vector<8x128xf32>
      %96 = arith.divf %94, %95 : vector<8x128xf32>
      %97 = vector.extract_strided_slice %74 {offsets = [0, 256], sizes = [8, 128], strides = [1, 1]} : vector<8x384xf32> to vector<8x128xf32>
      %98 = vector.extract_strided_slice %80 {offsets = [0, 256], sizes = [8, 128], strides = [1, 1]} : vector<8x384xf32> to vector<8x128xf32>
      %99 = arith.mulf %88, %98 : vector<8x128xf32>
      %100 = arith.addf %97, %99 : vector<8x128xf32>
      %101 = math.tanh %100 : vector<8x128xf32>
      %cst_59 = arith.constant 1.000000e+00 : f32
      %102 = vector.broadcast %cst_59 : f32 to vector<8x128xf32>
      %103 = arith.subf %102, %96 : vector<8x128xf32>
      %104 = arith.mulf %103, %101 : vector<8x128xf32>
      %105 = arith.mulf %96, %11 : vector<8x128xf32>
      %106 = arith.addf %104, %105 : vector<8x128xf32>
      %c0_60 = arith.constant 0 : index
      %c0_61 = arith.constant 0 : index
      %107 = vector.load %arg22[%c0_60, %c0_61] : memref<8x128xf32, #tpu.memory_space<vmem>>, vector<8x128xf32>
      tpu.vector_store %arg22[%c0_60, %c0_61], %106 {strides = array<i32>} : memref<8x128xf32, #tpu.memory_space<vmem>>, vector<8x128xf32>,
      %c0_62 = arith.constant 0 : index
      %c0_63 = arith.constant 0 : index
      %108 = vector.load %arg19[%c0_62, %c0_63] : memref<8x128xf32, #tpu.memory_space<vmem>>, vector<8x128xf32>
      tpu.vector_store %arg19[%c0_62, %c0_63], %106 {strides = array<i32>} : memref<8x128xf32, #tpu.memory_space<vmem>>, vector<8x128xf32>,
    } else {
    }
    %c0 = arith.constant 0 : index
    %c0_1 = arith.constant 0 : index
    %3 = vector.load %arg22[%c0, %c0_1] : memref<8x128xf32, #tpu.memory_space<vmem>>, vector<8x128xf32>
    %4 = arith.truncf %3 : vector<8x128xf32> to vector<8x128xbf16>
    %c0_2 = arith.constant 0 : index
    %c0_3 = arith.constant 0 : index
    %5 = vector.load %arg17[%c0_2, %c0_3] : memref<128x128xbf16, #tpu.memory_space<vmem>>, vector<128x128xbf16>
    %cst = arith.constant dense<0.000000e+00> : vector<8x128xf32>
    %6 = tpu.matmul %4, %5, %cst {dimension_numbers = #tpu.dot_dimension_numbers<[1], [0], [0], [1], [0, 0, 1, 1], [], []>} : vector<8x128xbf16>, vector<128x128xbf16>, vector<8x128xf32> -> vector<8x128xf32>
    %c0_4 = arith.constant 0 : index
    %c0_5 = arith.constant 0 : index
    %7 = vector.load %arg18[%c0_4, %c0_5] : memref<1x128xf32, #tpu.memory_space<vmem>>, vector<1x128xf32>
    %8 = vector.broadcast %7 : vector<1x128xf32> to vector<8x128xf32>
    %9 = arith.addf %6, %8 : vector<8x128xf32>
    %c0_6 = arith.constant 0 : index
    %c0_7 = arith.constant 0 : index
    %10 = vector.load %arg21[%c0_6, %c0_7] : memref<8x128xf32, #tpu.memory_space<vmem>>, vector<8x128xf32>
    tpu.vector_store %arg21[%c0_6, %c0_7], %9 {strides = array<i32>} : memref<8x128xf32, #tpu.memory_space<vmem>>, vector<8x128xf32>,
    return
  }
  func.func @transform_0(%arg0: i32, %arg1: i32) -> (i32, i32) {
    %c0_i32 = arith.constant 0 : i32
    %c0_i32_0 = arith.constant 0 : i32
    return %arg0, %c0_i32 : i32, i32
  }
  func.func @transform_1(%arg0: i32, %arg1: i32) -> (i32, i32) {
    %c0_i32 = arith.constant 0 : i32
    %c0_i32_0 = arith.constant 0 : i32
    return %arg0, %c0_i32 : i32, i32
  }
  func.func @transform_2(%arg0: i32, %arg1: i32) -> (i32, i32, i32) {
    %c0_i32 = arith.constant 0 : i32
    %c0_i32_0 = arith.constant 0 : i32
    %c0_i32_1 = arith.constant 0 : i32
    return %arg0, %c0_i32, %c0_i32_0 : i32, i32, i32
  }
  func.func @transform_3(%arg0: i32, %arg1: i32) -> (i32, i32, i32) {
    %c0_i32 = arith.constant 0 : i32
    %c0_i32_0 = arith.constant 0 : i32
    %c0_i32_1 = arith.constant 0 : i32
    return %arg0, %c0_i32, %c0_i32_0 : i32, i32, i32
  }
  func.func @transform_4(%arg0: i32, %arg1: i32) -> (i32, i32) {
    %c0_i32 = arith.constant 0 : i32
    %c0_i32_0 = arith.constant 0 : i32
    return %arg0, %c0_i32 : i32, i32
  }
  func.func @transform_5(%arg0: i32, %arg1: i32) -> (i32, i32) {
    %c0_i32 = arith.constant 0 : i32
    %c0_i32_0 = arith.constant 0 : i32
    return %arg0, %c0_i32 : i32, i32
  }
  func.func @transform_6(%arg0: i32, %arg1: i32) -> (i32, i32) {
    %c0_i32 = arith.constant 0 : i32
    %c0_i32_0 = arith.constant 0 : i32
    %c0_i32_1 = arith.constant 0 : i32
    return %c0_i32, %c0_i32_0 : i32, i32
  }
  func.func @transform_7(%arg0: i32, %arg1: i32) -> (i32, i32) {
    %c0_i32 = arith.constant 0 : i32
    %c0_i32_0 = arith.constant 0 : i32
    %c0_i32_1 = arith.constant 0 : i32
    return %c0_i32, %c0_i32_0 : i32, i32
  }
  func.func @transform_8(%arg0: i32, %arg1: i32) -> (i32, i32) {
    %c0_i32 = arith.constant 0 : i32
    %c0_i32_0 = arith.constant 0 : i32
    %c0_i32_1 = arith.constant 0 : i32
    return %c0_i32, %c0_i32_0 : i32, i32
  }
  func.func @transform_9(%arg0: i32, %arg1: i32) -> (i32, i32) {
    %c0_i32 = arith.constant 0 : i32
    %c0_i32_0 = arith.constant 0 : i32
    %c0_i32_1 = arith.constant 0 : i32
    return %c0_i32, %c0_i32_0 : i32, i32
  }
  func.func @transform_10(%arg0: i32, %arg1: i32) -> (i32, i32) {
    %c0_i32 = arith.constant 0 : i32
    %c0_i32_0 = arith.constant 0 : i32
    %c0_i32_1 = arith.constant 0 : i32
    return %c0_i32, %c0_i32_0 : i32, i32
  }
  func.func @transform_11(%arg0: i32, %arg1: i32) -> (i32, i32) {
    %c0_i32 = arith.constant 0 : i32
    %c0_i32_0 = arith.constant 0 : i32
    %c0_i32_1 = arith.constant 0 : i32
    return %c0_i32, %c0_i32_0 : i32, i32
  }
  func.func @transform_12(%arg0: i32, %arg1: i32) -> (i32, i32) {
    %c0_i32 = arith.constant 0 : i32
    %c0_i32_0 = arith.constant 0 : i32
    %c0_i32_1 = arith.constant 0 : i32
    return %c0_i32, %c0_i32_0 : i32, i32
  }
  func.func @transform_13(%arg0: i32, %arg1: i32) -> (i32, i32) {
    %c0_i32 = arith.constant 0 : i32
    %c0_i32_0 = arith.constant 0 : i32
    %c0_i32_1 = arith.constant 0 : i32
    return %c0_i32, %c0_i32_0 : i32, i32
  }
  func.func @transform_14(%arg0: i32, %arg1: i32) -> (i32, i32) {
    %c0_i32 = arith.constant 0 : i32
    %c0_i32_0 = arith.constant 0 : i32
    %c0_i32_1 = arith.constant 0 : i32
    return %c0_i32, %c0_i32_0 : i32, i32
  }
  func.func @transform_15(%arg0: i32, %arg1: i32) -> (i32, i32) {
    %c0_i32 = arith.constant 0 : i32
    %c0_i32_0 = arith.constant 0 : i32
    return %c0_i32, %arg1 : i32, i32
  }
  func.func @transform_16(%arg0: i32, %arg1: i32) -> (i32, i32) {
    %c0_i32 = arith.constant 0 : i32
    %c0_i32_0 = arith.constant 0 : i32
    return %c0_i32, %arg1 : i32, i32
  }
  func.func @transform_17(%arg0: i32, %arg1: i32) -> (i32, i32) {
    %c0_i32 = arith.constant 0 : i32
    %c0_i32_0 = arith.constant 0 : i32
    return %arg0, %c0_i32 : i32, i32
  }
  func.func @transform_18(%arg0: i32, %arg1: i32) -> (i32, i32) {
    %c0_i32 = arith.constant 0 : i32
    %c0_i32_0 = arith.constant 0 : i32
    return %arg0, %c0_i32 : i32, i32
  }
  func.func @transform_19(%arg0: i32, %arg1: i32) -> (i32, i32) {
    %c0_i32 = arith.constant 0 : i32
    return %arg0, %arg1 : i32, i32
  }
}

</mosaic_0001>

<llo_original>
// kernel: tpu_custom_call.1
$region0: #{tpu_custom_call.1}
  #allocation0 [shape = 'u32[]', space=smem, size = 0x4, offset = 0x4, fixed_abs, tag = 'smem constant byte address 0x4 - core index']
  #allocation1 [shape = 'u32[72,128]{1,0:T(1,128)}', space=vmem, size = 0x9000, scoped, tag = 'internal scratch']
  #allocation2 [shape = 'f32[8,128]{1,0:T(8,128)}', space=vmem, size = 0x1000, scoped, tag = 'scratch operand']
  %s0 = inlined_call_operand.vmem [shape: f32[16,128], index: 0, kind: input, shape index: {}]
  %s1 = inlined_call_operand.vmem [shape: s32[16,1], index: 1, kind: input, shape index: {}]
  %s2 = inlined_call_operand.hbm [shape: bf16[16,16,128], index: 2, kind: input, shape index: {}]
  %s3 = inlined_call_operand.hbm [shape: bf16[16,16,128], index: 3, kind: input, shape index: {}]
  %s4 = inlined_call_operand.hbm [shape: f32[16,128], index: 4, kind: input, shape index: {}]
  %s5 = inlined_call_operand.hbm [shape: f32[16,128], index: 5, kind: input, shape index: {}]
  %s6 = inlined_call_operand.hbm [shape: bf16[128,128], index: 6, kind: input, shape index: {}]
  %s7 = inlined_call_operand.hbm [shape: f32[2,128], index: 7, kind: input, shape index: {}]
  %s8 = inlined_call_operand.hbm [shape: bf16[128,128], index: 8, kind: input, shape index: {}]
  %s9 = inlined_call_operand.hbm [shape: bf16[128,128], index: 9, kind: input, shape index: {}]
  %s10 = inlined_call_operand.hbm [shape: bf16[128,384], index: 10, kind: input, shape index: {}]
  %s11 = inlined_call_operand.hbm [shape: bf16[128,384], index: 11, kind: input, shape index: {}]
  %s12 = inlined_call_operand.hbm [shape: bf16[128,384], index: 12, kind: input, shape index: {}]
  %s13 = inlined_call_operand.hbm [shape: bf16[128,384], index: 13, kind: input, shape index: {}]
  %s14 = inlined_call_operand.vmem [shape: f32[2,384], index: 14, kind: input, shape index: {}]
  %s15 = inlined_call_operand.hbm [shape: bf16[128,256], index: 15, kind: input, shape index: {}]
  %s16 = inlined_call_operand.vmem [shape: f32[1,256], index: 16, kind: input, shape index: {}]
  %s17 = inlined_call_operand.hbm [shape: f32[16,128], index: 17, kind: output, shape index: {0}]
  %s18 = inlined_call_operand.hbm [shape: f32[16,16], index: 18, kind: output, shape index: {1}]
  %s19 = inlined_call_operand.hbm [shape: f32[16,256], index: 19, kind: output, shape index: {2}]
  %20 = xla_tuple %s17, %s18, %s19
  %s21 = sld [smem:[#allocation0]]
  $region173: #{tpu_custom_call.1} parent=0
    _
  %s23 = ssub.s32 1, %s21
  %s24 = scalar_select 0, %s23, %s21
  $region1: #{tpu_custom_call.1} parent=0
    #allocation3 [shape = 'u8[65536]{0}', space=vmem, size = 0x10000, scoped, tag = 'input window, operand 2']
    #allocation4 [shape = 's32[2]{0}', space=sflag, size = 0x8, scoped, tag = 'scoped memory for tpu_custom_call.1']
    #allocation5 [shape = 's32[2]{0}', space=sflag, size = 0x8, scoped, tag = 'scoped memory for tpu_custom_call.1']
    #allocation6 [shape = 'u8[65536]{0}', space=vmem, size = 0x10000, scoped, tag = 'input window, operand 3']
    #allocation7 [shape = 's32[2]{0}', space=sflag, size = 0x8, scoped, tag = 'scoped memory for tpu_custom_call.1']
    #allocation8 [shape = 'u8[8192]{0}', space=vmem, size = 0x2000, scoped, tag = 'input window, operand 4']
    #allocation9 [shape = 'u8[8192]{0}', space=vmem, size = 0x2000, scoped, tag = 'input window, operand 5']
    #allocation10 [shape = 's32[2]{0}', space=sflag, size = 0x8, scoped, tag = 'scoped memory for tpu_custom_call.1']
    #allocation11 [shape = 'u8[32768]{0}', space=vmem, size = 0x8000, scoped, tag = 'input window, operand 6, single buffered']
    #allocation12 [shape = 'u8[1024]{0}', space=vmem, size = 0x400, scoped, tag = 'input window, operand 7, single buffered']
    #allocation13 [shape = 's32[1]{0}', space=sflag, size = 0x4, scoped, tag = 'scoped memory for tpu_custom_call.1']
    #allocation14 [shape = 'u8[32768]{0}', space=vmem, size = 0x8000, scoped, tag = 'input window, operand 8, single buffered']
    #allocation15 [shape = 'u8[32768]{0}', space=vmem, size = 0x8000, scoped, tag = 'input window, operand 9, single buffered']
    #allocation16 [shape = 's32[1]{0}', space=sflag, size = 0x4, scoped, tag = 'scoped memory for tpu_custom_call.1']
    #allocation17 [shape = 'u8[98304]{0}', space=vmem, size = 0x18000, scoped, tag = 'input window, operand 10, single buffered']
    #allocation18 [shape = 'u8[98304]{0}', space=vmem, size = 0x18000, scoped, tag = 'input window, operand 11, single buffered']
    #allocation19 [shape = 's32[1]{0}', space=sflag, size = 0x4, scoped, tag = 'scoped memory for tpu_custom_call.1']
    #allocation20 [shape = 'u8[98304]{0}', space=vmem, size = 0x18000, scoped, tag = 'input window, operand 12, single buffered']
    #allocation21 [shape = 'u8[98304]{0}', space=vmem, size = 0x18000, scoped, tag = 'input window, operand 13, single buffered']
    #allocation22 [shape = 's32[1]{0}', space=sflag, size = 0x4, scoped, tag = 'scoped memory for tpu_custom_call.1']
    #allocation23 [shape = 'u8[65536]{0}', space=vmem, size = 0x10000, scoped, tag = 'input window, operand 15']
    #allocation24 [shape = 'u8[8192]{0}', space=vmem, size = 0x2000, scoped, tag = 'output window, operand 0']
    #allocation25 [shape = 'u8[8192]{0}', space=vmem, size = 0x2000, scoped, tag = 'output window, operand 1']
    #allocation26 [shape = 's32[2]{0}', space=sflag, size = 0x8, scoped, tag = 'scoped memory for tpu_custom_call.1']
    #allocation27 [shape = 'u8[8192]{0}', space=vmem, size = 0x2000, scoped, tag = 'output window, operand 2']
    %25 = vsyncpa [#allocation4], 0
    %s26 = scalar_lea.sflag [#allocation4], 1
    %27 = vsyncpa %s26, 0
    %28 = vsyncpa [#allocation7], 0
    %s29 = scalar_lea.sflag [#allocation7], 1
    %30 = vsyncpa %s29, 0
    %31 = vsyncpa [#allocation10], 0
    %s32 = scalar_lea.sflag [#allocation10], 1
    %33 = vsyncpa %s32, 0
    %34 = vsyncpa [#allocation13], 0
    %35 = vsyncpa [#allocation16], 0
    %36 = vsyncpa [#allocation19], 0
    %37 = vsyncpa [#allocation22], 0
    %38 = vsyncpa [#allocation5], 0
    %s39 = scalar_lea.sflag [#allocation5], 1
    %40 = vsyncpa %s39, 0
    %41 = vsyncpa [#allocation26], 0
    %s42 = scalar_lea.sflag [#allocation26], 1
    %43 = vsyncpa %s42, 0
    loop: start=0, step=1, limit=6
    $region2: #{tpu_custom_call.1} parent=1 // loop_pre_header
      _
    $region3: #{tpu_custom_call.1} parent=1 // loop_header
      %s45 = sphi 0, %s49
      %p46 = scmp.ge.s32.totalorder %s45, 6
      %s52 = sphi 0, %s64
      %s53 = sphi 0, %s60
      %s54 = sphi 0, %s52
      %s55 = sphi 0, %s53
      %s56 = sphi 0, %s54
      %s57 = sphi 0, %s55
      %s67 = sphi 0, %s69
      %s70 = sphi 0, %s67
      %s71 = sphi 0, %s70
      %s87 = sphi 0, %s71
      %s93 = sphi 0, %s95
      %s96 = sphi 0, %s93
      %s97 = sphi 0, %s96
      %s113 = sphi 0, %s97
      %s119 = sphi 0, %s121
      %s122 = sphi 0, %s119
      %s123 = sphi 0, %s122
      %s139 = sphi 0, %s123
      %s145 = sphi 0, %s147
      %s148 = sphi 0, %s145
      %s149 = sphi 0, %s148
      %s165 = sphi 0, %s149
      %s171 = sphi 0, %s173
      %s174 = sphi 0, %s171
      %s175 = sphi 0, %s174
      %s191 = sphi 0, %s175
      %s197 = sphi 0, %s199
      %s200 = sphi 0, %s197
      %s201 = sphi 0, %s200
      %s217 = sphi 0, %s201
      %s221 = sphi 0, %s221
      %s223 = sphi 0, %s221
      %s224 = sphi 0, %s223
      %s238 = sphi 0, %s224
      %s242 = sphi 0, %s242
      %s244 = sphi 0, %s242
      %s245 = sphi 0, %s244
      %s259 = sphi 0, %s245
      %s263 = sphi 0, %s263
      %s265 = sphi 0, %s263
      %s266 = sphi 0, %s265
      %s280 = sphi 0, %s266
      %s284 = sphi 0, %s284
      %s286 = sphi 0, %s284
      %s287 = sphi 0, %s286
      %s301 = sphi 0, %s287
      %s305 = sphi 0, %s305
      %s307 = sphi 0, %s305
      %s308 = sphi 0, %s307
      %s322 = sphi 0, %s308
      %s326 = sphi 0, %s326
      %s328 = sphi 0, %s326
      %s329 = sphi 0, %s328
      %s343 = sphi 0, %s329
      %s347 = sphi 0, %s347
      %s349 = sphi 0, %s347
      %s350 = sphi 0, %s349
      %s364 = sphi 0, %s350
      %s368 = sphi 0, %s368
      %s370 = sphi 0, %s368
      %s371 = sphi 0, %s370
      %s385 = sphi 0, %s371
      %s389 = sphi 0, %s389
      %s391 = sphi 0, %s389
      %s392 = sphi 0, %s391
      %s406 = sphi 0, %s392
      %s412 = sphi 0, %s414
      %s415 = sphi 0, %s412
      %s416 = sphi 0, %s415
      %s432 = sphi 0, %s416
      %s438 = sphi 0, %s440
      %s441 = sphi 0, %s438
      %s442 = sphi 0, %s441
      %s458 = sphi 0, %s442
      %s464 = sphi 0, %s466
      %s467 = sphi 0, %s464
      %s468 = sphi 0, %s467
      %s484 = sphi 0, %s468
      %s490 = sphi 0, %s492
      %s493 = sphi 0, %s490
      %s494 = sphi 0, %s493
      %s510 = sphi 0, %s494
      %s518 = sphi 0, %s520
      %s521 = sphi 0, %s518
      %s522 = sphi 0, %s521
      %s538 = sphi 0, %s522
    $region4: #{tpu_custom_call.1} parent=1 // loop_header_branch
      %48 = sbr.rel (%p46) target = $region8
    $region5: #{tpu_custom_call.1} parent=1 // loop_body
      %s50 = ssub.s32 %s45, 1
      %s51 = ssub.s32 %s45, 2
      %s58 = sadd.s32 1, %s53
      %p59 = scmp.ge.s32.totalorder %s58, 2
      %s60 = scalar_select %p59, 0, %s58
      %s61 = sadd.s32 1, %s52
      %s62 = scalar_select %p59, %s61, %s52
      %p63 = scmp.ge.s32.totalorder %s62, 2
      %s64 = scalar_select %p63, 0, %s62
      %s65 = ssub.s32 %s52, %s64
      %p66 = scmp.eq.s32.totalorder %s65, 0
      %s68 = sadd.s32 %s67, 1
      %s69 = scalar_select %p66, %s67, %s68
      %p72 = pneg %p66
      %p73 = scmp.eq.s32.totalorder %s45, 3
      %p74 = por %p72, %p73
      %p75 = scmp.ne.s32.totalorder %s67, %s70
      %p76 = scmp.eq.s32.totalorder %s45, 0
      %p77 = por %p75, %p76
      %p78 = scmp.ne.s32.totalorder %s67, %s70
      %p79 = scmp.eq.s32.totalorder %s50, 3
      %p80 = por %p78, %p79
      %p81 = scmp.ne.s32.totalorder %s70, %s71
      %p82 = scmp.eq.s32.totalorder %s50, 0
      %p83 = por %p81, %p82
      %p84 = scmp.ne.s32.totalorder %s70, %s71
      %p85 = scmp.eq.s32.totalorder %s51, 3
      %p86 = por %p84, %p85
      %p88 = scmp.ne.s32.totalorder %s71, %s87
      %p89 = scmp.eq.s32.totalorder %s51, 0
      %p90 = por %p88, %p89
      %s91 = ssub.s32 %s52, %s64
      %p92 = scmp.eq.s32.totalorder %s91, 0
      %s94 = sadd.s32 %s93, 1
      %s95 = scalar_select %p92, %s93, %s94
      %p98 = pneg %p92
      %p99 = scmp.eq.s32.totalorder %s45, 3
      %p100 = por %p98, %p99
      %p101 = scmp.ne.s32.totalorder %s93, %s96
      %p102 = scmp.eq.s32.totalorder %s45, 0
      %p103 = por %p101, %p102
      %p104 = scmp.ne.s32.totalorder %s93, %s96
      %p105 = scmp.eq.s32.totalorder %s50, 3
      %p106 = por %p104, %p105
      %p107 = scmp.ne.s32.totalorder %s96, %s97
      %p108 = scmp.eq.s32.totalorder %s50, 0
      %p109 = por %p107, %p108
      %p110 = scmp.ne.s32.totalorder %s96, %s97
      %p111 = scmp.eq.s32.totalorder %s51, 3
      %p112 = por %p110, %p111
      %p114 = scmp.ne.s32.totalorder %s97, %s113
      %p115 = scmp.eq.s32.totalorder %s51, 0
      %p116 = por %p114, %p115
      %s117 = ssub.s32 %s52, %s64
      %p118 = scmp.eq.s32.totalorder %s117, 0
      %s120 = sadd.s32 %s119, 1
      %s121 = scalar_select %p118, %s119, %s120
      %p124 = pneg %p118
      %p125 = scmp.eq.s32.totalorder %s45, 3
      %p126 = por %p124, %p125
      %p127 = scmp.ne.s32.totalorder %s119, %s122
      %p128 = scmp.eq.s32.totalorder %s45, 0
      %p129 = por %p127, %p128
      %p130 = scmp.ne.s32.totalorder %s119, %s122
      %p131 = scmp.eq.s32.totalorder %s50, 3
      %p132 = por %p130, %p131
      %p133 = scmp.ne.s32.totalorder %s122, %s123
      %p134 = scmp.eq.s32.totalorder %s50, 0
      %p135 = por %p133, %p134
      %p136 = scmp.ne.s32.totalorder %s122, %s123
      %p137 = scmp.eq.s32.totalorder %s51, 3
      %p138 = por %p136, %p137
      %p140 = scmp.ne.s32.totalorder %s123, %s139
      %p141 = scmp.eq.s32.totalorder %s51, 0
      %p142 = por %p140, %p141
      %s143 = ssub.s32 %s52, %s64
      %p144 = scmp.eq.s32.totalorder %s143, 0
      %s146 = sadd.s32 %s145, 1
      %s147 = scalar_select %p144, %s145, %s146
      %p150 = pneg %p144
      %p151 = scmp.eq.s32.totalorder %s45, 3
      %p152 = por %p150, %p151
      %p153 = scmp.ne.s32.totalorder %s145, %s148
      %p154 = scmp.eq.s32.totalorder %s45, 0
      %p155 = por %p153, %p154
      %p156 = scmp.ne.s32.totalorder %s145, %s148
      %p157 = scmp.eq.s32.totalorder %s50, 3
      %p158 = por %p156, %p157
      %p159 = scmp.ne.s32.totalorder %s148, %s149
      %p160 = scmp.eq.s32.totalorder %s50, 0
      %p161 = por %p159, %p160
      %p162 = scmp.ne.s32.totalorder %s148, %s149
      %p163 = scmp.eq.s32.totalorder %s51, 3
      %p164 = por %p162, %p163
      %p166 = scmp.ne.s32.totalorder %s149, %s165
      %p167 = scmp.eq.s32.totalorder %s51, 0
      %p168 = por %p166, %p167
      %s169 = ssub.s32 %s52, %s64
      %p170 = scmp.eq.s32.totalorder %s169, 0
      %s172 = sadd.s32 %s171, 1
      %s173 = scalar_select %p170, %s171, %s172
      %p176 = pneg %p170
      %p177 = scmp.eq.s32.totalorder %s45, 3
      %p178 = por %p176, %p177
      %p179 = scmp.ne.s32.totalorder %s171, %s174
      %p180 = scmp.eq.s32.totalorder %s45, 0
      %p181 = por %p179, %p180
      %p182 = scmp.ne.s32.totalorder %s171, %s174
      %p183 = scmp.eq.s32.totalorder %s50, 3
      %p184 = por %p182, %p183
      %p185 = scmp.ne.s32.totalorder %s174, %s175
      %p186 = scmp.eq.s32.totalorder %s50, 0
      %p187 = por %p185, %p186
      %p188 = scmp.ne.s32.totalorder %s174, %s175
      %p189 = scmp.eq.s32.totalorder %s51, 3
      %p190 = por %p188, %p189
      %p192 = scmp.ne.s32.totalorder %s175, %s191
      %p193 = scmp.eq.s32.totalorder %s51, 0
      %p194 = por %p192, %p193
      %s195 = ssub.s32 %s52, %s64
      %p196 = scmp.eq.s32.totalorder %s195, 0
      %s198 = sadd.s32 %s197, 1
      %s199 = scalar_select %p196, %s197, %s198
      %p202 = pneg %p196
      %p203 = scmp.eq.s32.totalorder %s45, 3
      %p204 = por %p202, %p203
      %p205 = scmp.ne.s32.totalorder %s197, %s200
      %p206 = scmp.eq.s32.totalorder %s45, 0
      %p207 = por %p205, %p206
      %p208 = scmp.ne.s32.totalorder %s197, %s200
      %p209 = scmp.eq.s32.totalorder %s50, 3
      %p210 = por %p208, %p209
      %p211 = scmp.ne.s32.totalorder %s200, %s201
      %p212 = scmp.eq.s32.totalorder %s50, 0
      %p213 = por %p211, %p212
      %p214 = scmp.ne.s32.totalorder %s200, %s201
      %p215 = scmp.eq.s32.totalorder %s51, 3
      %p216 = por %p214, %p215
      %p218 = scmp.ne.s32.totalorder %s201, %s217
      %p219 = scmp.eq.s32.totalorder %s51, 0
      %p220 = por %p218, %p219
      %s222 = sadd.s32 %s221, 1
      %p225 = scmp.eq.s32.totalorder %s45, 3
      %p226 = scmp.ne.s32.totalorder %s221, %s223
      %p227 = scmp.eq.s32.totalorder %s45, 0
      %p228 = por %p226, %p227
      %p229 = scmp.ne.s32.totalorder %s221, %s223
      %p230 = scmp.eq.s32.totalorder %s50, 3
      %p231 = por %p229, %p230
      %p232 = scmp.ne.s32.totalorder %s223, %s224
      %p233 = scmp.eq.s32.totalorder %s50, 0
      %p234 = por %p232, %p233
      %p235 = scmp.ne.s32.totalorder %s223, %s224
      %p236 = scmp.eq.s32.totalorder %s51, 3
      %p237 = por %p235, %p236
      %p239 = scmp.ne.s32.totalorder %s224, %s238
      %p240 = scmp.eq.s32.totalorder %s51, 0
      %p241 = por %p239, %p240
      %s243 = sadd.s32 %s242, 1
      %p246 = scmp.eq.s32.totalorder %s45, 3
      %p247 = scmp.ne.s32.totalorder %s242, %s244
      %p248 = scmp.eq.s32.totalorder %s45, 0
      %p249 = por %p247, %p248
      %p250 = scmp.ne.s32.totalorder %s242, %s244
      %p251 = scmp.eq.s32.totalorder %s50, 3
      %p252 = por %p250, %p251
      %p253 = scmp.ne.s32.totalorder %s244, %s245
      %p254 = scmp.eq.s32.totalorder %s50, 0
      %p255 = por %p253, %p254
      %p256 = scmp.ne.s32.totalorder %s244, %s245
      %p257 = scmp.eq.s32.totalorder %s51, 3
      %p258 = por %p256, %p257
      %p260 = scmp.ne.s32.totalorder %s245, %s259
      %p261 = scmp.eq.s32.totalorder %s51, 0
      %p262 = por %p260, %p261
      %s264 = sadd.s32 %s263, 1
      %p267 = scmp.eq.s32.totalorder %s45, 3
      %p268 = scmp.ne.s32.totalorder %s263, %s265
      %p269 = scmp.eq.s32.totalorder %s45, 0
      %p270 = por %p268, %p269
      %p271 = scmp.ne.s32.totalorder %s263, %s265
      %p272 = scmp.eq.s32.totalorder %s50, 3
      %p273 = por %p271, %p272
      %p274 = scmp.ne.s32.totalorder %s265, %s266
      %p275 = scmp.eq.s32.totalorder %s50, 0
      %p276 = por %p274, %p275
      %p277 = scmp.ne.s32.totalorder %s265, %s266
      %p278 = scmp.eq.s32.totalorder %s51, 3
      %p279 = por %p277, %p278
      %p281 = scmp.ne.s32.totalorder %s266, %s280
      %p282 = scmp.eq.s32.totalorder %s51, 0
      %p283 = por %p281, %p282
      %s285 = sadd.s32 %s284, 1
      %p288 = scmp.eq.s32.totalorder %s45, 3
      %p289 = scmp.ne.s32.totalorder %s284, %s286
      %p290 = scmp.eq.s32.totalorder %s45, 0
      %p291 = por %p289, %p290
      %p292 = scmp.ne.s32.totalorder %s284, %s286
      %p293 = scmp.eq.s32.totalorder %s50, 3
      %p294 = por %p292, %p293
      %p295 = scmp.ne.s32.totalorder %s286, %s287
      %p296 = scmp.eq.s32.totalorder %s50, 0
      %p297 = por %p295, %p296
      %p298 = scmp.ne.s32.totalorder %s286, %s287
      %p299 = scmp.eq.s32.totalorder %s51, 3
      %p300 = por %p298, %p299
      %p302 = scmp.ne.s32.totalorder %s287, %s301
      %p303 = scmp.eq.s32.totalorder %s51, 0
      %p304 = por %p302, %p303
      %s306 = sadd.s32 %s305, 1
      %p309 = scmp.eq.s32.totalorder %s45, 3
      %p310 = scmp.ne.s32.totalorder %s305, %s307
      %p311 = scmp.eq.s32.totalorder %s45, 0
      %p312 = por %p310, %p311
      %p313 = scmp.ne.s32.totalorder %s305, %s307
      %p314 = scmp.eq.s32.totalorder %s50, 3
      %p315 = por %p313, %p314
      %p316 = scmp.ne.s32.totalorder %s307, %s308
      %p317 = scmp.eq.s32.totalorder %s50, 0
      %p318 = por %p316, %p317
      %p319 = scmp.ne.s32.totalorder %s307, %s308
      %p320 = scmp.eq.s32.totalorder %s51, 3
      %p321 = por %p319, %p320
      %p323 = scmp.ne.s32.totalorder %s308, %s322
      %p324 = scmp.eq.s32.totalorder %s51, 0
      %p325 = por %p323, %p324
      %s327 = sadd.s32 %s326, 1
      %p330 = scmp.eq.s32.totalorder %s45, 3
      %p331 = scmp.ne.s32.totalorder %s326, %s328
      %p332 = scmp.eq.s32.totalorder %s45, 0
      %p333 = por %p331, %p332
      %p334 = scmp.ne.s32.totalorder %s326, %s328
      %p335 = scmp.eq.s32.totalorder %s50, 3
      %p336 = por %p334, %p335
      %p337 = scmp.ne.s32.totalorder %s328, %s329
      %p338 = scmp.eq.s32.totalorder %s50, 0
      %p339 = por %p337, %p338
      %p340 = scmp.ne.s32.totalorder %s328, %s329
      %p341 = scmp.eq.s32.totalorder %s51, 3
      %p342 = por %p340, %p341
      %p344 = scmp.ne.s32.totalorder %s329, %s343
      %p345 = scmp.eq.s32.totalorder %s51, 0
      %p346 = por %p344, %p345
      %s348 = sadd.s32 %s347, 1
      %p351 = scmp.eq.s32.totalorder %s45, 3
      %p352 = scmp.ne.s32.totalorder %s347, %s349
      %p353 = scmp.eq.s32.totalorder %s45, 0
      %p354 = por %p352, %p353
      %p355 = scmp.ne.s32.totalorder %s347, %s349
      %p356 = scmp.eq.s32.totalorder %s50, 3
      %p357 = por %p355, %p356
      %p358 = scmp.ne.s32.totalorder %s349, %s350
      %p359 = scmp.eq.s32.totalorder %s50, 0
      %p360 = por %p358, %p359
      %p361 = scmp.ne.s32.totalorder %s349, %s350
      %p362 = scmp.eq.s32.totalorder %s51, 3
      %p363 = por %p361, %p362
      %p365 = scmp.ne.s32.totalorder %s350, %s364
      %p366 = scmp.eq.s32.totalorder %s51, 0
      %p367 = por %p365, %p366
      %s369 = sadd.s32 %s368, 1
      %p372 = scmp.eq.s32.totalorder %s45, 3
      %p373 = scmp.ne.s32.totalorder %s368, %s370
      %p374 = scmp.eq.s32.totalorder %s45, 0
      %p375 = por %p373, %p374
      %p376 = scmp.ne.s32.totalorder %s368, %s370
      %p377 = scmp.eq.s32.totalorder %s50, 3
      %p378 = por %p376, %p377
      %p379 = scmp.ne.s32.totalorder %s370, %s371
      %p380 = scmp.eq.s32.totalorder %s50, 0
      %p381 = por %p379, %p380
      %p382 = scmp.ne.s32.totalorder %s370, %s371
      %p383 = scmp.eq.s32.totalorder %s51, 3
      %p384 = por %p382, %p383
      %p386 = scmp.ne.s32.totalorder %s371, %s385
      %p387 = scmp.eq.s32.totalorder %s51, 0
      %p388 = por %p386, %p387
      %s390 = sadd.s32 %s389, 1
      %p393 = scmp.eq.s32.totalorder %s45, 3
      %p394 = scmp.ne.s32.totalorder %s389, %s391
      %p395 = scmp.eq.s32.totalorder %s45, 0
      %p396 = por %p394, %p395
      %p397 = scmp.ne.s32.totalorder %s389, %s391
      %p398 = scmp.eq.s32.totalorder %s50, 3
      %p399 = por %p397, %p398
      %p400 = scmp.ne.s32.totalorder %s391, %s392
      %p401 = scmp.eq.s32.totalorder %s50, 0
      %p402 = por %p400, %p401
      %p403 = scmp.ne.s32.totalorder %s391, %s392
      %p404 = scmp.eq.s32.totalorder %s51, 3
      %p405 = por %p403, %p404
      %p407 = scmp.ne.s32.totalorder %s392, %s406
      %p408 = scmp.eq.s32.totalorder %s51, 0
      %p409 = por %p407, %p408
      %s410 = ssub.s32 %s53, %s60
      %p411 = scmp.eq.s32.totalorder %s410, 0
      %s413 = sadd.s32 %s412, 1
      %s414 = scalar_select %p411, %s412, %s413
      %p417 = pneg %p411
      %p418 = scmp.eq.s32.totalorder %s45, 3
      %p419 = por %p417, %p418
      %p420 = scmp.ne.s32.totalorder %s412, %s415
      %p421 = scmp.eq.s32.totalorder %s45, 0
      %p422 = por %p420, %p421
      %p423 = scmp.ne.s32.totalorder %s412, %s415
      %p424 = scmp.eq.s32.totalorder %s50, 3
      %p425 = por %p423, %p424
      %p426 = scmp.ne.s32.totalorder %s415, %s416
      %p427 = scmp.eq.s32.totalorder %s50, 0
      %p428 = por %p426, %p427
      %p429 = scmp.ne.s32.totalorder %s415, %s416
      %p430 = scmp.eq.s32.totalorder %s51, 3
      %p431 = por %p429, %p430
      %p433 = scmp.ne.s32.totalorder %s416, %s432
      %p434 = scmp.eq.s32.totalorder %s51, 0
      %p435 = por %p433, %p434
      %s436 = ssub.s32 %s53, %s60
      %p437 = scmp.eq.s32.totalorder %s436, 0
      %s439 = sadd.s32 %s438, 1
      %s440 = scalar_select %p437, %s438, %s439
      %p443 = pneg %p437
      %p444 = scmp.eq.s32.totalorder %s45, 3
      %p445 = por %p443, %p444
      %p446 = scmp.ne.s32.totalorder %s438, %s441
      %p447 = scmp.eq.s32.totalorder %s45, 0
      %p448 = por %p446, %p447
      %p449 = scmp.ne.s32.totalorder %s438, %s441
      %p450 = scmp.eq.s32.totalorder %s50, 3
      %p451 = por %p449, %p450
      %p452 = scmp.ne.s32.totalorder %s441, %s442
      %p453 = scmp.eq.s32.totalorder %s50, 0
      %p454 = por %p452, %p453
      %p455 = scmp.ne.s32.totalorder %s441, %s442
      %p456 = scmp.eq.s32.totalorder %s51, 3
      %p457 = por %p455, %p456
      %p459 = scmp.ne.s32.totalorder %s442, %s458
      %p460 = scmp.eq.s32.totalorder %s51, 0
      %p461 = por %p459, %p460
      %s462 = ssub.s32 %s52, %s64
      %p463 = scmp.eq.s32.totalorder %s462, 0
      %s465 = sadd.s32 %s464, 1
      %s466 = scalar_select %p463, %s464, %s465
      %p469 = pneg %p463
      %p470 = scmp.eq.s32.totalorder %s45, 3
      %p471 = por %p469, %p470
      %p472 = scmp.ne.s32.totalorder %s464, %s467
      %p473 = scmp.eq.s32.totalorder %s45, 0
      %p474 = por %p472, %p473
      %p475 = scmp.ne.s32.totalorder %s464, %s467
      %p476 = scmp.eq.s32.totalorder %s50, 3
      %p477 = por %p475, %p476
      %p478 = scmp.ne.s32.totalorder %s467, %s468
      %p479 = scmp.eq.s32.totalorder %s50, 0
      %p480 = por %p478, %p479
      %p481 = scmp.ne.s32.totalorder %s467, %s468
      %p482 = scmp.eq.s32.totalorder %s51, 3
      %p483 = por %p481, %p482
      %p485 = scmp.ne.s32.totalorder %s468, %s484
      %p486 = scmp.eq.s32.totalorder %s51, 0
      %p487 = por %p485, %p486
      %s488 = ssub.s32 %s52, %s64
      %p489 = scmp.eq.s32.totalorder %s488, 0
      %s491 = sadd.s32 %s490, 1
      %s492 = scalar_select %p489, %s490, %s491
      %p495 = pneg %p489
      %p496 = scmp.eq.s32.totalorder %s45, 3
      %p497 = por %p495, %p496
      %p498 = scmp.ne.s32.totalorder %s490, %s493
      %p499 = scmp.eq.s32.totalorder %s45, 0
      %p500 = por %p498, %p499
      %p501 = scmp.ne.s32.totalorder %s490, %s493
      %p502 = scmp.eq.s32.totalorder %s50, 3
      %p503 = por %p501, %p502
      %p504 = scmp.ne.s32.totalorder %s493, %s494
      %p505 = scmp.eq.s32.totalorder %s50, 0
      %p506 = por %p504, %p505
      %p507 = scmp.ne.s32.totalorder %s493, %s494
      %p508 = scmp.eq.s32.totalorder %s51, 3
      %p509 = por %p507, %p508
      %p511 = scmp.ne.s32.totalorder %s494, %s510
      %p512 = scmp.eq.s32.totalorder %s51, 0
      %p513 = por %p511, %p512
      %s514 = ssub.s32 %s52, %s64
      %s515 = ssub.s32 %s53, %s60
      %s516 = sor.u32 %s514, %s515
      %p517 = scmp.eq.s32.totalorder %s516, 0
      %s519 = sadd.s32 %s518, 1
      %s520 = scalar_select %p517, %s518, %s519
      %p523 = pneg %p517
      %p524 = scmp.eq.s32.totalorder %s45, 3
      %p525 = por %p523, %p524
      %p526 = scmp.ne.s32.totalorder %s518, %s521
      %p527 = scmp.eq.s32.totalorder %s45, 0
      %p528 = por %p526, %p527
      %p529 = scmp.ne.s32.totalorder %s518, %s521
      %p530 = scmp.eq.s32.totalorder %s50, 3
      %p531 = por %p529, %p530
      %p532 = scmp.ne.s32.totalorder %s521, %s522
      %p533 = scmp.eq.s32.totalorder %s50, 0
      %p534 = por %p532, %p533
      %p535 = scmp.ne.s32.totalorder %s521, %s522
      %p536 = scmp.eq.s32.totalorder %s51, 3
      %p537 = por %p535, %p536
      %p539 = scmp.ne.s32.totalorder %s522, %s538
      %p540 = scmp.eq.s32.totalorder %s51, 0
      %p541 = por %p539, %p540
      %p542 = scmp.le.s32.totalorder 1, %s45
      %p543 = scmp.lt.s32.totalorder %s45, 5
      %p544 = pnand %p542, %p543
      %p545 = pneg %p544
      // Predicated region
      $region9: #{tpu_custom_call.1} parent=5 // pred_check
        _
      $region10: #{tpu_custom_call.1} parent=5 // pred_check_branch
        %547 = sbr.rel (%p544) target = $region12
      $region11: #{tpu_custom_call.1} parent=5 // pred_region
        %s548 = ssub.s32 %s45, 1
        // Predicated region
        $region13: #{tpu_custom_call.1} parent=11 // pred_check
          %p549 = pneg %p234
        $region14: #{tpu_custom_call.1} parent=11 // pred_check_branch
          %551 = sbr.rel (%p549) target = $region16
        $region15: #{tpu_custom_call.1} parent=11 // pred_region
          %553 = vsyncadd [#allocation10], 0
          %s554 = sshll.u32 %s6, 4
          %s555 = int_to_ptr.hbm [resolvable:$true] %s554
          %s556 = sshll.u32 [#allocation11], 4
          %s557 = int_to_ptr.vmem [resolvable:$true] %s556
          %562 = dma.hbm_to_vmem [thread:$0]  %s555, 1024, %s557, [#allocation10], 64, 64, 4
        $region16: #{tpu_custom_call.1} parent=11 // pred_fallthru
          _
        // Predicated region
        $region17: #{tpu_custom_call.1} parent=11 // pred_check
          %p563 = pneg %p255
        $region18: #{tpu_custom_call.1} parent=11 // pred_check_branch
          %565 = sbr.rel (%p563) target = $region20
        $region19: #{tpu_custom_call.1} parent=11 // pred_region
          %567 = vsyncadd [#allocation13], 0
          %s569 = sshll.u32 %s7, 4
          %s570 = int_to_ptr.hbm [resolvable:$true] %s569
          %s571 = sshll.u32 [#allocation12], 4
          %s572 = int_to_ptr.vmem [resolvable:$true] %s571
          %574 = dma.hbm_to_vmem [thread:$0]  %s570, 32, %s572, [#allocation13]
        $region20: #{tpu_custom_call.1} parent=11 // pred_fallthru
          _
        // Predicated region
        $region21: #{tpu_custom_call.1} parent=11 // pred_check
          %p575 = pneg %p276
        $region22: #{tpu_custom_call.1} parent=11 // pred_check_branch
          %577 = sbr.rel (%p575) target = $region24
        $region23: #{tpu_custom_call.1} parent=11 // pred_region
          %579 = vsyncadd [#allocation13], 0
          %s580 = sshll.u32 %s8, 4
          %s581 = int_to_ptr.hbm [resolvable:$true] %s580
          %s582 = sshll.u32 [#allocation14], 4
          %s583 = int_to_ptr.vmem [resolvable:$true] %s582
          %588 = dma.hbm_to_vmem [thread:$0]  %s581, 1024, %s583, [#allocation13], 64, 64, 4
        $region24: #{tpu_custom_call.1} parent=11 // pred_fallthru
          _
        // Predicated region
        $region25: #{tpu_custom_call.1} parent=11 // pred_check
          %p589 = pneg %p297
        $region26: #{tpu_custom_call.1} parent=11 // pred_check_branch
          %591 = sbr.rel (%p589) target = $region28
        $region27: #{tpu_custom_call.1} parent=11 // pred_region
          %593 = vsyncadd [#allocation16], 0
          %s594 = sshll.u32 %s9, 4
          %s595 = int_to_ptr.hbm [resolvable:$true] %s594
          %s596 = sshll.u32 [#allocation15], 4
          %s597 = int_to_ptr.vmem [resolvable:$true] %s596
          %602 = dma.hbm_to_vmem [thread:$0]  %s595, 1024, %s597, [#allocation16], 64, 64, 4
        $region28: #{tpu_custom_call.1} parent=11 // pred_fallthru
          _
        // Predicated region
        $region29: #{tpu_custom_call.1} parent=11 // pred_check
          %p603 = pneg %p318
        $region30: #{tpu_custom_call.1} parent=11 // pred_check_branch
          %605 = sbr.rel (%p603) target = $region32
        $region31: #{tpu_custom_call.1} parent=11 // pred_region
          %607 = vsyncadd [#allocation16], 0
          %s608 = sshll.u32 %s10, 4
          %s609 = int_to_ptr.hbm [resolvable:$true] %s608
          %s610 = sshll.u32 [#allocation17], 4
          %s611 = int_to_ptr.vmem [resolvable:$true] %s610
          %616 = dma.hbm_to_vmem [thread:$0]  %s609, 3072, %s611, [#allocation16], 192, 192, 12
        $region32: #{tpu_custom_call.1} parent=11 // pred_fallthru
          _
        // Predicated region
        $region33: #{tpu_custom_call.1} parent=11 // pred_check
          %p617 = pneg %p339
        $region34: #{tpu_custom_call.1} parent=11 // pred_check_branch
          %619 = sbr.rel (%p617) target = $region36
        $region35: #{tpu_custom_call.1} parent=11 // pred_region
          %621 = vsyncadd [#allocation19], 0
          %s622 = sshll.u32 %s11, 4
          %s623 = int_to_ptr.hbm [resolvable:$true] %s622
          %s624 = sshll.u32 [#allocation18], 4
          %s625 = int_to_ptr.vmem [resolvable:$true] %s624
          %630 = dma.hbm_to_vmem [thread:$0]  %s623, 3072, %s625, [#allocation19], 192, 192, 12
        $region36: #{tpu_custom_call.1} parent=11 // pred_fallthru
          _
        // Predicated region
        $region37: #{tpu_custom_call.1} parent=11 // pred_check
          %p631 = pneg %p360
        $region38: #{tpu_custom_call.1} parent=11 // pred_check_branch
          %633 = sbr.rel (%p631) target = $region40
        $region39: #{tpu_custom_call.1} parent=11 // pred_region
          %635 = vsyncadd [#allocation19], 0
          %s636 = sshll.u32 %s12, 4
          %s637 = int_to_ptr.hbm [resolvable:$true] %s636
          %s638 = sshll.u32 [#allocation20], 4
          %s639 = int_to_ptr.vmem [resolvable:$true] %s638
          %644 = dma.hbm_to_vmem [thread:$0]  %s637, 3072, %s639, [#allocation19], 192, 192, 12
        $region40: #{tpu_custom_call.1} parent=11 // pred_fallthru
          _
        // Predicated region
        $region41: #{tpu_custom_call.1} parent=11 // pred_check
          %p645 = pneg %p381
        $region42: #{tpu_custom_call.1} parent=11 // pred_check_branch
          %647 = sbr.rel (%p645) target = $region44
        $region43: #{tpu_custom_call.1} parent=11 // pred_region
          %649 = vsyncadd [#allocation22], 0
          %s650 = sshll.u32 %s13, 4
          %s651 = int_to_ptr.hbm [resolvable:$true] %s650
          %s652 = sshll.u32 [#allocation21], 4
          %s653 = int_to_ptr.vmem [resolvable:$true] %s652
          %658 = dma.hbm_to_vmem [thread:$0]  %s651, 3072, %s653, [#allocation22], 192, 192, 12
        $region44: #{tpu_custom_call.1} parent=11 // pred_fallthru
          _
        // Predicated region
        $region45: #{tpu_custom_call.1} parent=11 // pred_check
          %p659 = pneg %p402
        $region46: #{tpu_custom_call.1} parent=11 // pred_check_branch
          %661 = sbr.rel (%p659) target = $region48
        $region47: #{tpu_custom_call.1} parent=11 // pred_region
          _
        $region48: #{tpu_custom_call.1} parent=11 // pred_fallthru
          _
      $region12: #{tpu_custom_call.1} parent=5 // pred_fallthru
        _
      %p662 = scmp.lt.s32.totalorder %s45, 4
      // Predicated region
      $region49: #{tpu_custom_call.1} parent=5 // pred_check
        %p663 = pneg %p662
      $region50: #{tpu_custom_call.1} parent=5 // pred_check_branch
        %665 = sbr.rel (%p663) target = $region52
      $region51: #{tpu_custom_call.1} parent=5 // pred_region
        // Predicated region
        $region53: #{tpu_custom_call.1} parent=51 // pred_check
          %p666 = pneg %p77
        $region54: #{tpu_custom_call.1} parent=51 // pred_check_branch
          %668 = sbr.rel (%p666) target = $region56
        $region55: #{tpu_custom_call.1} parent=51 // pred_region
          %p669 = scmp.lt.s32.totalorder %s52, 1
          %s670 = scalar_select %p669, %s52, 1
          %s671 = smul.addr %s670, 8
          %s672 = scalar_lea.vmem %s0, %s671
        $region56: #{tpu_custom_call.1} parent=51 // pred_fallthru
          _
        // Predicated region
        $region57: #{tpu_custom_call.1} parent=51 // pred_check
          %p673 = pneg %p103
        $region58: #{tpu_custom_call.1} parent=51 // pred_check_branch
          %675 = sbr.rel (%p673) target = $region60
        $region59: #{tpu_custom_call.1} parent=51 // pred_region
          %p676 = scmp.lt.s32.totalorder %s52, 1
          %s677 = scalar_select %p676, %s52, 1
          %s678 = smul.addr %s677, 8
          %s679 = scalar_lea.vmem %s1, %s678
        $region60: #{tpu_custom_call.1} parent=51 // pred_fallthru
          _
        // Predicated region
        $region61: #{tpu_custom_call.1} parent=51 // pred_check
          %p680 = pneg %p129
        $region62: #{tpu_custom_call.1} parent=51 // pred_check_branch
          %682 = sbr.rel (%p680) target = $region64
        $region63: #{tpu_custom_call.1} parent=51 // pred_region
          %s683 = sand.u32 %s45, 1
          %s684 = scalar_lea.sflag [#allocation4], %s683
          %s685 = sand.u32 %s119, 1
          %s686 = smul.addr %s685, 64
          %s687 = scalar_lea.vmem [#allocation3], %s686
          %s688 = smul.u32 8, %s52
          %690 = vsyncadd %s684, 0
          %s691 = smul.addr %s688, 2
          %s692 = smul.addr %s691, 4
          %s693 = scalar_lea.hbm %s2, %s692
          %s694 = sshll.u32 %s693, 4
          %s695 = int_to_ptr.hbm [resolvable:$true] %s694
          %s696 = sshll.u32 %s687, 4
          %s697 = int_to_ptr.vmem [resolvable:$true] %s696
          %702 = dma.hbm_to_vmem [thread:$0]  %s695, 1024, %s697, %s684, 64, 64, 4
        $region64: #{tpu_custom_call.1} parent=51 // pred_fallthru
          _
        // Predicated region
        $region65: #{tpu_custom_call.1} parent=51 // pred_check
          %p703 = pneg %p155
        $region66: #{tpu_custom_call.1} parent=51 // pred_check_branch
          %705 = sbr.rel (%p703) target = $region68
        $region67: #{tpu_custom_call.1} parent=51 // pred_region
          %s706 = sand.u32 %s45, 1
          %s707 = scalar_lea.sflag [#allocation7], %s706
          %s708 = sand.u32 %s145, 1
          %s709 = smul.addr %s708, 64
          %s710 = scalar_lea.vmem [#allocation6], %s709
          %s711 = smul.u32 8, %s52
          %713 = vsyncadd %s707, 0
          %s714 = smul.addr %s711, 2
          %s715 = smul.addr %s714, 4
          %s716 = scalar_lea.hbm %s3, %s715
          %s717 = sshll.u32 %s716, 4
          %s718 = int_to_ptr.hbm [resolvable:$true] %s717
          %s719 = sshll.u32 %s710, 4
          %s720 = int_to_ptr.vmem [resolvable:$true] %s719
          %725 = dma.hbm_to_vmem [thread:$0]  %s718, 1024, %s720, %s707, 64, 64, 4
        $region68: #{tpu_custom_call.1} parent=51 // pred_fallthru
          _
        // Predicated region
        $region69: #{tpu_custom_call.1} parent=51 // pred_check
          %p726 = pneg %p181
        $region70: #{tpu_custom_call.1} parent=51 // pred_check_branch
          %728 = sbr.rel (%p726) target = $region72
        $region71: #{tpu_custom_call.1} parent=51 // pred_region
          %s729 = sand.u32 %s45, 1
          %s730 = scalar_lea.sflag [#allocation7], %s729
          %s731 = sand.u32 %s171, 1
          %s732 = smul.addr %s731, 8
          %s733 = scalar_lea.vmem [#allocation8], %s732
          %735 = vsyncadd %s730, 0
          %s736 = smul.addr %s52, 8
          %s737 = scalar_lea.hbm %s4, %s736
          %s739 = sshll.u32 %s737, 4
          %s740 = int_to_ptr.hbm [resolvable:$true] %s739
          %s741 = sshll.u32 %s733, 4
          %s742 = int_to_ptr.vmem [resolvable:$true] %s741
          %744 = dma.hbm_to_vmem [thread:$0]  %s740, 128, %s742, %s730
        $region72: #{tpu_custom_call.1} parent=51 // pred_fallthru
          _
        // Predicated region
        $region73: #{tpu_custom_call.1} parent=51 // pred_check
          %p745 = pneg %p207
        $region74: #{tpu_custom_call.1} parent=51 // pred_check_branch
          %747 = sbr.rel (%p745) target = $region76
        $region75: #{tpu_custom_call.1} parent=51 // pred_region
          %s748 = sand.u32 %s45, 1
          %s749 = scalar_lea.sflag [#allocation10], %s748
          %s750 = sand.u32 %s197, 1
          %s751 = smul.addr %s750, 8
          %s752 = scalar_lea.vmem [#allocation9], %s751
          %754 = vsyncadd %s749, 0
          %s755 = smul.addr %s52, 8
          %s756 = scalar_lea.hbm %s5, %s755
          %s758 = sshll.u32 %s756, 4
          %s759 = int_to_ptr.hbm [resolvable:$true] %s758
          %s760 = sshll.u32 %s752, 4
          %s761 = int_to_ptr.vmem [resolvable:$true] %s760
          %763 = dma.hbm_to_vmem [thread:$0]  %s759, 128, %s761, %s749
        $region76: #{tpu_custom_call.1} parent=51 // pred_fallthru
          _
        // Predicated region
        $region77: #{tpu_custom_call.1} parent=51 // pred_check
          %p764 = pneg %p422
        $region78: #{tpu_custom_call.1} parent=51 // pred_check_branch
          %766 = sbr.rel (%p764) target = $region80
        $region79: #{tpu_custom_call.1} parent=51 // pred_region
          %s767 = sand.u32 %s45, 1
          %s768 = scalar_lea.sflag [#allocation4], %s767
          %s769 = sand.u32 %s412, 1
          %s770 = smul.addr %s769, 64
          %s771 = scalar_lea.vmem [#allocation23], %s770
          %773 = vsyncadd %s768, 0
          %s774 = smul.addr %s53, 4
          %s775 = scalar_lea.hbm %s15, %s774
          %s776 = sshll.u32 %s775, 4
          %s777 = int_to_ptr.hbm [resolvable:$true] %s776
          %s778 = sshll.u32 %s771, 4
          %s779 = int_to_ptr.vmem [resolvable:$true] %s778
          %784 = dma.hbm_to_vmem [thread:$0]  %s777, 1024, %s779, %s768, 128, 64, 4
        $region80: #{tpu_custom_call.1} parent=51 // pred_fallthru
          _
        // Predicated region
        $region81: #{tpu_custom_call.1} parent=51 // pred_check
          %p785 = pneg %p448
        $region82: #{tpu_custom_call.1} parent=51 // pred_check_branch
          %787 = sbr.rel (%p785) target = $region84
        $region83: #{tpu_custom_call.1} parent=51 // pred_region
          %p788 = scmp.lt.s32.totalorder %s53, 1
          %s789 = scalar_select %p788, %s53, 1
          %s790 = scalar_lea.vmem %s16, %s789
        $region84: #{tpu_custom_call.1} parent=51 // pred_fallthru
          _
      $region52: #{tpu_custom_call.1} parent=5 // pred_fallthru
        _
      %p791 = scmp.le.s32.totalorder 1, %s45
      %p792 = scmp.lt.s32.totalorder %s45, 5
      %p793 = pnand %p791, %p792
      %p794 = pneg %p793
      // Predicated region
      $region85: #{tpu_custom_call.1} parent=5 // pred_check
        _
      $region86: #{tpu_custom_call.1} parent=5 // pred_check_branch
        %796 = sbr.rel (%p793) target = $region88
      $region87: #{tpu_custom_call.1} parent=5 // pred_region
        %s797 = ssub.s32 %s45, 1
        %s798 = sand.u32 %s50, 1
        %s799 = scalar_lea.sflag [#allocation4], %s798
        %s800 = sand.u32 %s122, 1
        %s801 = smul.addr %s800, 64
        %s802 = scalar_lea.vmem [#allocation3], %s801
        // Predicated region
        $region89: #{tpu_custom_call.1} parent=87 // pred_check
          %p803 = pneg %p135
        $region90: #{tpu_custom_call.1} parent=87 // pred_check_branch
          %805 = sbr.rel (%p803) target = $region92
        $region91: #{tpu_custom_call.1} parent=87 // pred_region
          %807 = dma.done %s799, 1024
        $region92: #{tpu_custom_call.1} parent=87 // pred_fallthru
          _
        %s808 = sand.u32 %s50, 1
        %s809 = scalar_lea.sflag [#allocation7], %s808
        %s810 = sand.u32 %s148, 1
        %s811 = smul.addr %s810, 64
        %s812 = scalar_lea.vmem [#allocation6], %s811
        // Predicated region
        $region93: #{tpu_custom_call.1} parent=87 // pred_check
          %p813 = pneg %p161
        $region94: #{tpu_custom_call.1} parent=87 // pred_check_branch
          %815 = sbr.rel (%p813) target = $region96
        $region95: #{tpu_custom_call.1} parent=87 // pred_region
          %817 = dma.done %s809, 1024
        $region96: #{tpu_custom_call.1} parent=87 // pred_fallthru
          _
        %s818 = sand.u32 %s50, 1
        %s819 = scalar_lea.sflag [#allocation7], %s818
        %s820 = sand.u32 %s174, 1
        %s821 = smul.addr %s820, 8
        %s822 = scalar_lea.vmem [#allocation8], %s821
        // Predicated region
        $region97: #{tpu_custom_call.1} parent=87 // pred_check
          %p823 = pneg %p187
        $region98: #{tpu_custom_call.1} parent=87 // pred_check_branch
          %825 = sbr.rel (%p823) target = $region100
        $region99: #{tpu_custom_call.1} parent=87 // pred_region
          %827 = dma.done %s819, 128
        $region100: #{tpu_custom_call.1} parent=87 // pred_fallthru
          _
        %s828 = sand.u32 %s50, 1
        %s829 = scalar_lea.sflag [#allocation10], %s828
        %s830 = sand.u32 %s200, 1
        %s831 = smul.addr %s830, 8
        %s832 = scalar_lea.vmem [#allocation9], %s831
        // Predicated region
        $region101: #{tpu_custom_call.1} parent=87 // pred_check
          %p833 = pneg %p213
        $region102: #{tpu_custom_call.1} parent=87 // pred_check_branch
          %835 = sbr.rel (%p833) target = $region104
        $region103: #{tpu_custom_call.1} parent=87 // pred_region
          %837 = dma.done %s829, 128
        $region104: #{tpu_custom_call.1} parent=87 // pred_fallthru
          _
        // Predicated region
        $region105: #{tpu_custom_call.1} parent=87 // pred_check
          %p838 = pneg %p234
        $region106: #{tpu_custom_call.1} parent=87 // pred_check_branch
          %840 = sbr.rel (%p838) target = $region108
        $region107: #{tpu_custom_call.1} parent=87 // pred_region
          %842 = dma.done [#allocation10], 1024
        $region108: #{tpu_custom_call.1} parent=87 // pred_fallthru
          _
        // Predicated region
        $region109: #{tpu_custom_call.1} parent=87 // pred_check
          %p843 = pneg %p255
        $region110: #{tpu_custom_call.1} parent=87 // pred_check_branch
          %845 = sbr.rel (%p843) target = $region112
        $region111: #{tpu_custom_call.1} parent=87 // pred_region
          %847 = dma.done [#allocation13], 32
        $region112: #{tpu_custom_call.1} parent=87 // pred_fallthru
          _
        // Predicated region
        $region113: #{tpu_custom_call.1} parent=87 // pred_check
          %p848 = pneg %p276
        $region114: #{tpu_custom_call.1} parent=87 // pred_check_branch
          %850 = sbr.rel (%p848) target = $region116
        $region115: #{tpu_custom_call.1} parent=87 // pred_region
          %852 = dma.done [#allocation13], 1024
        $region116: #{tpu_custom_call.1} parent=87 // pred_fallthru
          _
        // Predicated region
        $region117: #{tpu_custom_call.1} parent=87 // pred_check
          %p853 = pneg %p297
        $region118: #{tpu_custom_call.1} parent=87 // pred_check_branch
          %855 = sbr.rel (%p853) target = $region120
        $region119: #{tpu_custom_call.1} parent=87 // pred_region
          %857 = dma.done [#allocation16], 1024
        $region120: #{tpu_custom_call.1} parent=87 // pred_fallthru
          _
        // Predicated region
        $region121: #{tpu_custom_call.1} parent=87 // pred_check
          %p858 = pneg %p318
        $region122: #{tpu_custom_call.1} parent=87 // pred_check_branch
          %860 = sbr.rel (%p858) target = $region124
        $region123: #{tpu_custom_call.1} parent=87 // pred_region
          %862 = dma.done [#allocation16], 3072
        $region124: #{tpu_custom_call.1} parent=87 // pred_fallthru
          _
        // Predicated region
        $region125: #{tpu_custom_call.1} parent=87 // pred_check
          %p863 = pneg %p339
        $region126: #{tpu_custom_call.1} parent=87 // pred_check_branch
          %865 = sbr.rel (%p863) target = $region128
        $region127: #{tpu_custom_call.1} parent=87 // pred_region
          %867 = dma.done [#allocation19], 3072
        $region128: #{tpu_custom_call.1} parent=87 // pred_fallthru
          _
        // Predicated region
        $region129: #{tpu_custom_call.1} parent=87 // pred_check
          %p868 = pneg %p360
        $region130: #{tpu_custom_call.1} parent=87 // pred_check_branch
          %870 = sbr.rel (%p868) target = $region132
        $region131: #{tpu_custom_call.1} parent=87 // pred_region
          %872 = dma.done [#allocation19], 3072
        $region132: #{tpu_custom_call.1} parent=87 // pred_fallthru
          _
        // Predicated region
        $region133: #{tpu_custom_call.1} parent=87 // pred_check
          %p873 = pneg %p381
        $region134: #{tpu_custom_call.1} parent=87 // pred_check_branch
          %875 = sbr.rel (%p873) target = $region136
        $region135: #{tpu_custom_call.1} parent=87 // pred_region
          %877 = dma.done [#allocation22], 3072
        $region136: #{tpu_custom_call.1} parent=87 // pred_fallthru
          _
        %s878 = sand.u32 %s50, 1
        %s879 = scalar_lea.sflag [#allocation4], %s878
        %s880 = sand.u32 %s415, 1
        %s881 = smul.addr %s880, 64
        %s882 = scalar_lea.vmem [#allocation23], %s881
        // Predicated region
        $region137: #{tpu_custom_call.1} parent=87 // pred_check
          %p883 = pneg %p428
        $region138: #{tpu_custom_call.1} parent=87 // pred_check_branch
          %885 = sbr.rel (%p883) target = $region140
        $region139: #{tpu_custom_call.1} parent=87 // pred_region
          %887 = dma.done %s879, 1024
        $region140: #{tpu_custom_call.1} parent=87 // pred_fallthru
          _
        %p888 = scmp.lt.s32.totalorder %s54, 1
        %s889 = scalar_select %p888, %s54, 1
        %s890 = smul.addr %s889, 8
        %s891 = scalar_lea.vmem %s0, %s890
        %p892 = pneg %p83
        %p893 = pneg %p80
        %p894 = scmp.lt.s32.totalorder %s54, 1
        %s895 = scalar_select %p894, %s54, 1
        %s896 = smul.addr %s895, 8
        %s897 = scalar_lea.vmem %s1, %s896
        %p898 = pneg %p109
        %p899 = pneg %p106
        %s900 = sand.u32 %s50, 1
        %s901 = scalar_lea.sflag [#allocation4], %s900
        %s902 = sand.u32 %s122, 1
        %s903 = smul.addr %s902, 64
        %s904 = scalar_lea.vmem [#allocation3], %s903
        %p905 = pneg %p135
        %p906 = pneg %p132
        %s907 = sand.u32 %s50, 1
        %s908 = scalar_lea.sflag [#allocation7], %s907
        %s909 = sand.u32 %s148, 1
        %s910 = smul.addr %s909, 64
        %s911 = scalar_lea.vmem [#allocation6], %s910
        %p912 = pneg %p161
        %p913 = pneg %p158
        %s914 = sand.u32 %s50, 1
        %s915 = scalar_lea.sflag [#allocation7], %s914
        %s916 = sand.u32 %s174, 1
        %s917 = smul.addr %s916, 8
        %s918 = scalar_lea.vmem [#allocation8], %s917
        %p919 = pneg %p187
        %p920 = pneg %p184
        %s921 = sand.u32 %s50, 1
        %s922 = scalar_lea.sflag [#allocation10], %s921
        %s923 = sand.u32 %s200, 1
        %s924 = smul.addr %s923, 8
        %s925 = scalar_lea.vmem [#allocation9], %s924
        %p926 = pneg %p213
        %p927 = pneg %p210
        %p928 = pneg %p234
        %p929 = pneg %p231
        %p930 = pneg %p255
        %p931 = pneg %p252
        %p932 = pneg %p276
        %p933 = pneg %p273
        %p934 = pneg %p297
        %p935 = pneg %p294
        %p936 = pneg %p318
        %p937 = pneg %p315
        %p938 = pneg %p339
        %p939 = pneg %p336
        %p940 = pneg %p360
        %p941 = pneg %p357
        %p942 = pneg %p381
        %p943 = pneg %p378
        %p944 = pneg %p402
        %p945 = pneg %p399
        %s946 = sand.u32 %s50, 1
        %s947 = scalar_lea.sflag [#allocation4], %s946
        %s948 = sand.u32 %s415, 1
        %s949 = smul.addr %s948, 64
        %s950 = scalar_lea.vmem [#allocation23], %s949
        %p951 = pneg %p428
        %p952 = pneg %p425
        %p953 = scmp.lt.s32.totalorder %s55, 1
        %s954 = scalar_select %p953, %s55, 1
        %s955 = scalar_lea.vmem %s16, %s954
        %p956 = pneg %p454
        %p957 = pneg %p451
        %p958 = pneg %p480
        %p959 = pneg %p477
        %s960 = sand.u32 %s467, 1
        %s961 = scalar_lea.sflag [#allocation5], %s960
        %s962 = sand.u32 %s467, 1
        %s963 = smul.addr %s962, 8
        %s964 = scalar_lea.vmem [#allocation24], %s963
        %p965 = pneg %p506
        %p966 = pneg %p503
        %s967 = sand.u32 %s50, 1
        %s968 = scalar_lea.sflag [#allocation26], %s967
        %s969 = sand.u32 %s493, 1
        %s970 = smul.addr %s969, 8
        %s971 = scalar_lea.vmem [#allocation25], %s970
        %p972 = pneg %p534
        %p973 = pneg %p531
        %s974 = sand.u32 %s50, 1
        %s975 = scalar_lea.sflag [#allocation26], %s974
        %s976 = sand.u32 %s521, 1
        %s977 = smul.addr %s976, 8
        %s978 = scalar_lea.vmem [#allocation27], %s977
        %p979 = scmp.lt.s32.totalorder %s54, 1
        %s980 = scalar_select %p979, %s54, 1
        %s981 = smul.addr %s980, 8
        %s982 = scalar_lea.vmem %s0, %s981
        %p983 = scmp.lt.s32.totalorder %s54, 1
        %s984 = scalar_select %p983, %s54, 1
        %s985 = smul.addr %s984, 8
        %s986 = scalar_lea.vmem %s1, %s985
        %s987 = smul.u32 8, %s54
        %s988 = smul.u32 8, %s54
        %p989 = scmp.lt.s32.totalorder %s55, 1
        %s990 = scalar_select %p989, %s55, 1
        %s991 = scalar_lea.vmem %s16, %s990
        %p992 = scmp.eq.s32.totalorder %s55, 0
        // Predicated region
        $region141: #{tpu_custom_call.1} parent=87 // pred_check
          %p993 = pneg %p992
        $region142: #{tpu_custom_call.1} parent=87 // pred_check_branch
          %995 = sbr.rel (%p993) target = $region144
        $region143: #{tpu_custom_call.1} parent=87 // pred_region
          %v996 = vld [vmem:[%s832] sm:$0xff]
          %v997 = vld [vmem:[%s982] sm:$0xff]
          %v998 = vpack.c.bf16 %v996, %v996
          %v999 = vld [vmem:[#allocation11] sm:$0xf]
          %v1000 = vld [vmem:[#allocation11 + $0x4] sm:$0xf]
          %v1001 = vld [vmem:[#allocation11 + $0x8] sm:$0xf]
          %v1002 = vld [vmem:[#allocation11 + $0xc] sm:$0xf]
          %v1003 = vld [vmem:[#allocation11 + $0x10] sm:$0xf]
          %v1004 = vld [vmem:[#allocation11 + $0x14] sm:$0xf]
          %v1005 = vld [vmem:[#allocation11 + $0x18] sm:$0xf]
          %v1006 = vld [vmem:[#allocation11 + $0x1c] sm:$0xf]
          %v1007 = vld [vmem:[#allocation11 + $0x20] sm:$0xf]
          %v1008 = vld [vmem:[#allocation11 + $0x24] sm:$0xf]
          %v1009 = vld [vmem:[#allocation11 + $0x28] sm:$0xf]
          %v1010 = vld [vmem:[#allocation11 + $0x2c] sm:$0xf]
          %v1011 = vld [vmem:[#allocation11 + $0x30] sm:$0xf]
          %v1012 = vld [vmem:[#allocation11 + $0x34] sm:$0xf]
          %v1013 = vld [vmem:[#allocation11 + $0x38] sm:$0xf]
          %v1014 = vld [vmem:[#allocation11 + $0x3c] sm:$0xf]
          %v1031 = vunpack.c.l.b16 %v999
          %v1032 = vunpack.c.l.b16 %v1000
          %v1033 = vunpack.c.l.b16 %v1001
          %v1034 = vunpack.c.l.b16 %v1002
          %v1035 = vunpack.c.l.b16 %v1003
          %v1036 = vunpack.c.l.b16 %v1004
          %v1037 = vunpack.c.l.b16 %v1005
          %v1038 = vunpack.c.l.b16 %v1006
          %v1039 = vunpack.c.l.b16 %v1007
          %v1040 = vunpack.c.l.b16 %v1008
          %v1041 = vunpack.c.l.b16 %v1009
          %v1042 = vunpack.c.l.b16 %v1010
          %v1043 = vunpack.c.l.b16 %v1011
          %v1044 = vunpack.c.l.b16 %v1012
          %v1045 = vunpack.c.l.b16 %v1013
          %v1046 = vunpack.c.l.b16 %v1014
          %v1047 = vpack.c.b16 %v1032, %v1031
          %v1048 = vpack.c.b16 %v1034, %v1033
          %v1049 = vpack.c.b16 %v1036, %v1035
          %v1050 = vpack.c.b16 %v1038, %v1037
          %v1051 = vpack.c.b16 %v1040, %v1039
          %v1052 = vpack.c.b16 %v1042, %v1041
          %v1053 = vpack.c.b16 %v1044, %v1043
          %v1054 = vpack.c.b16 %v1046, %v1045
          %1063 = vmatpush.bf16.msra.mxu0 %v1054
          %1064 = vmatpush.bf16.msra.mxu0 %v1053
          %1065 = vmatpush.bf16.msra.mxu0 %v1052
          %1066 = vmatpush.bf16.msra.mxu0 %v1051
          %1067 = vmatpush.bf16.msra.mxu0 %v1050
          %1068 = vmatpush.bf16.msra.mxu0 %v1049
          %1069 = vmatpush.bf16.msra.mxu0 %v1048
          %1070 = vmatpush.bf16.msra.mxu0 %v1047
          %1071 = vmatmul.bf16.gmra.mxu0 %v998
          %v1072 = vpop.f32.mrf.mxu0
          %v1073 = vadd.f32 0.0, %v1072
          %v1074 = vpop.f32.mrf.mxu0
          %1075 = vdwg.mxu0
          %v1076 = vld [vmem:[#allocation12] sm:$0x1]
          %v1077 = vld [vmem:[#allocation12 + $0x1] sm:$0x1]
          %v1078 = vld [vmem:[%s812] sm:$0xf]
          %v1079 = vld [vmem:[%s812 + $0x4] sm:$0xf]
          %v1080 = vld [vmem:[%s812 + $0x8] sm:$0xf]
          %v1081 = vld [vmem:[%s812 + $0xc] sm:$0xf]
          %v1082 = vld [vmem:[%s812 + $0x10] sm:$0xf]
          %v1083 = vld [vmem:[%s812 + $0x14] sm:$0xf]
          %v1084 = vld [vmem:[%s812 + $0x18] sm:$0xf]
          %v1085 = vld [vmem:[%s812 + $0x1c] sm:$0xf]
          %v1086 = vld [vmem:[%s812 + $0x20] sm:$0xf]
          %v1087 = vld [vmem:[%s812 + $0x24] sm:$0xf]
          %v1088 = vld [vmem:[%s812 + $0x28] sm:$0xf]
          %v1089 = vld [vmem:[%s812 + $0x2c] sm:$0xf]
          %v1090 = vld [vmem:[%s812 + $0x30] sm:$0xf]
          %v1091 = vld [vmem:[%s812 + $0x34] sm:$0xf]
          %v1092 = vld [vmem:[%s812 + $0x38] sm:$0xf]
          %v1093 = vld [vmem:[%s812 + $0x3c] sm:$0xf]
          %v1094 = vunpack.c.l.bf16 %v1078
          %v1095 = vunpack.c.l.bf16 %v1079
          %v1096 = vunpack.c.l.bf16 %v1080
          %v1097 = vunpack.c.l.bf16 %v1081
          %v1098 = vunpack.c.l.bf16 %v1082
          %v1099 = vunpack.c.l.bf16 %v1083
          %v1100 = vunpack.c.l.bf16 %v1084
          %v1101 = vunpack.c.l.bf16 %v1085
          %v1102 = vunpack.c.l.bf16 %v1086
          %v1103 = vunpack.c.l.bf16 %v1087
          %v1104 = vunpack.c.l.bf16 %v1088
          %v1105 = vunpack.c.l.bf16 %v1089
          %v1106 = vunpack.c.l.bf16 %v1090
          %v1107 = vunpack.c.l.bf16 %v1091
          %v1108 = vunpack.c.l.bf16 %v1092
          %v1109 = vunpack.c.l.bf16 %v1093
          %v1111 = vrot.slane %v1073, 1
          %v1112 = vrot.slane %v1073, 2
          %v1113 = vrot.slane %v1073, 3
          %v1114 = vrot.slane %v1073, 4
          %v1115 = vrot.slane %v1073, 5
          %v1116 = vrot.slane %v1073, 6
          %v1117 = vrot.slane %v1073, 7
          %v1118 = vperm.slane %v1073, 0
          %v1119 = vperm.slane %v1111, 0
          %v1120 = vperm.slane %v1112, 0
          %v1121 = vperm.slane %v1113, 0
          %v1122 = vperm.slane %v1114, 0
          %v1123 = vperm.slane %v1115, 0
          %v1124 = vperm.slane %v1116, 0
          %v1125 = vperm.slane %v1117, 0
          %v1134 = vadd.f32 %v1094, %v1118
          %v1135 = vadd.f32 %v1095, %v1118
          %v1136 = vadd.f32 %v1096, %v1119
          %v1137 = vadd.f32 %v1097, %v1119
          %v1138 = vadd.f32 %v1098, %v1120
          %v1139 = vadd.f32 %v1099, %v1120
          %v1140 = vadd.f32 %v1100, %v1121
          %v1141 = vadd.f32 %v1101, %v1121
          %v1142 = vadd.f32 %v1102, %v1122
          %v1143 = vadd.f32 %v1103, %v1122
          %v1144 = vadd.f32 %v1104, %v1123
          %v1145 = vadd.f32 %v1105, %v1123
          %v1146 = vadd.f32 %v1106, %v1124
          %v1147 = vadd.f32 %v1107, %v1124
          %v1148 = vadd.f32 %v1108, %v1125
          %v1149 = vadd.f32 %v1109, %v1125
          %v1150 = vperm.slane %v1076, 0
          %v1151 = vadd.f32 %v1134, %v1150
          %v1152 = vadd.f32 %v1135, %v1150
          %v1153 = vadd.f32 %v1136, %v1150
          %v1154 = vadd.f32 %v1137, %v1150
          %v1155 = vadd.f32 %v1138, %v1150
          %v1156 = vadd.f32 %v1139, %v1150
          %v1157 = vadd.f32 %v1140, %v1150
          %v1158 = vadd.f32 %v1141, %v1150
          %v1159 = vadd.f32 %v1142, %v1150
          %v1160 = vadd.f32 %v1143, %v1150
          %v1161 = vadd.f32 %v1144, %v1150
          %v1162 = vadd.f32 %v1145, %v1150
          %v1163 = vadd.f32 %v1146, %v1150
          %v1164 = vadd.f32 %v1147, %v1150
          %v1165 = vadd.f32 %v1148, %v1150
          %v1166 = vadd.f32 %v1149, %v1150
          %v1167 = vtanh.pop %v1151
          %v1168 = vtanh.pop %v1152
          %v1169 = vtanh.pop %v1153
          %v1170 = vtanh.pop %v1154
          %v1171 = vtanh.pop %v1155
          %v1172 = vtanh.pop %v1156
          %v1173 = vtanh.pop %v1157
          %v1174 = vtanh.pop %v1158
          %v1175 = vtanh.pop %v1159
          %v1176 = vtanh.pop %v1160
          %v1177 = vtanh.pop %v1161
          %v1178 = vtanh.pop %v1162
          %v1179 = vtanh.pop %v1163
          %v1180 = vtanh.pop %v1164
          %v1181 = vtanh.pop %v1165
          %v1182 = vtanh.pop %v1166
          %v1183 = vperm.slane %v1077, 0
          %v1184 = vmul.f32 %v1167, %v1183
          %v1185 = vmul.f32 %v1168, %v1183
          %v1186 = vmul.f32 %v1169, %v1183
          %v1187 = vmul.f32 %v1170, %v1183
          %v1188 = vmul.f32 %v1171, %v1183
          %v1189 = vmul.f32 %v1172, %v1183
          %v1190 = vmul.f32 %v1173, %v1183
          %v1191 = vmul.f32 %v1174, %v1183
          %v1192 = vmul.f32 %v1175, %v1183
          %v1193 = vmul.f32 %v1176, %v1183
          %v1194 = vmul.f32 %v1177, %v1183
          %v1195 = vmul.f32 %v1178, %v1183
          %v1196 = vmul.f32 %v1179, %v1183
          %v1197 = vmul.f32 %v1180, %v1183
          %v1198 = vmul.f32 %v1181, %v1183
          %v1199 = vmul.f32 %v1182, %v1183
          %1200 = vadd.xlane.f32.xlu0 %v1184
          %v1201 = vpop.xlane.xlu0 %1200
          %1202 = vadd.xlane.f32.xlu0 %v1185
          %v1203 = vpop.xlane.xlu0 %1202
          %1204 = vadd.xlane.f32.xlu0 %v1186
          %v1205 = vpop.xlane.xlu0 %1204
          %1206 = vadd.xlane.f32.xlu0 %v1187
          %v1207 = vpop.xlane.xlu0 %1206
          %1208 = vadd.xlane.f32.xlu0 %v1188
          %v1209 = vpop.xlane.xlu0 %1208
          %1210 = vadd.xlane.f32.xlu0 %v1189
          %v1211 = vpop.xlane.xlu0 %1210
          %1212 = vadd.xlane.f32.xlu0 %v1190
          %v1213 = vpop.xlane.xlu0 %1212
          %1214 = vadd.xlane.f32.xlu0 %v1191
          %v1215 = vpop.xlane.xlu0 %1214
          %1216 = vadd.xlane.f32.xlu0 %v1192
          %v1217 = vpop.xlane.xlu0 %1216
          %1218 = vadd.xlane.f32.xlu0 %v1193
          %v1219 = vpop.xlane.xlu0 %1218
          %1220 = vadd.xlane.f32.xlu0 %v1194
          %v1221 = vpop.xlane.xlu0 %1220
          %1222 = vadd.xlane.f32.xlu0 %v1195
          %v1223 = vpop.xlane.xlu0 %1222
          %1224 = vadd.xlane.f32.xlu0 %v1196
          %v1225 = vpop.xlane.xlu0 %1224
          %1226 = vadd.xlane.f32.xlu0 %v1197
          %v1227 = vpop.xlane.xlu0 %1226
          %1228 = vadd.xlane.f32.xlu0 %v1198
          %v1229 = vpop.xlane.xlu0 %1228
          %1230 = vadd.xlane.f32.xlu0 %v1199
          %v1231 = vpop.xlane.xlu0 %1230
          %v1232 = vlaneseq
          %v1233 = vand.u32 %v1232, 127
          %v1234 = vld [vmem:[%s986] sm:$0xff]
          %1235 = vset.pattern.permute.xlu0 0
          %1236 = vperm.xlu0 %1235, %v1234
          %v1237 = vpop.permute.xlu0 %1236
          %vm1238 = vcmp.lt.s32.totalorder %v1233, %v1237
          %v1255 = vperm.slane %v1201, %v1233
          %v1256 = vadd.s32 %v1233, 4294967288
          %v1257 = vperm.slane %v1203, %v1256
          %vm1258 = vcmask 130112
          %v1259 = vsel %vm1258, %v1257, %v1255
          %v1260 = vperm.slane %v1205, %v1233
          %v1261 = vperm.slane %v1207, %v1256
          %v1262 = vsel %vm1258, %v1261, %v1260
          %v1263 = vperm.slane %v1209, %v1233
          %v1264 = vperm.slane %v1211, %v1256
          %v1265 = vsel %vm1258, %v1264, %v1263
          %v1266 = vperm.slane %v1213, %v1233
          %v1267 = vperm.slane %v1215, %v1256
          %v1268 = vsel %vm1258, %v1267, %v1266
          %v1269 = vperm.slane %v1217, %v1233
          %v1270 = vperm.slane %v1219, %v1256
          %v1271 = vsel %vm1258, %v1270, %v1269
          %v1272 = vperm.slane %v1221, %v1233
          %v1273 = vperm.slane %v1223, %v1256
          %v1274 = vsel %vm1258, %v1273, %v1272
          %v1275 = vperm.slane %v1225, %v1233
          %v1276 = vperm.slane %v1227, %v1256
          %v1277 = vsel %vm1258, %v1276, %v1275
          %v1278 = vperm.slane %v1229, %v1233
          %v1279 = vperm.slane %v1231, %v1256
          %v1280 = vsel %vm1258, %v1279, %v1278
          %vm1281 = vcmask 1041409
          %v1282 = vsel %vm1281, %v1262, %v1259
          %vm1283 = vcmask 1042434
          %v1284 = vsel %vm1283, %v1265, %v1282
          %vm1285 = vcmask 1043459
          %v1286 = vsel %vm1285, %v1268, %v1284
          %vm1287 = vcmask 1044484
          %v1288 = vsel %vm1287, %v1271, %v1286
          %vm1289 = vcmask 1045509
          %v1290 = vsel %vm1289, %v1274, %v1288
          %vm1291 = vcmask 1046534
          %v1292 = vsel %vm1291, %v1277, %v1290
          %vm1293 = vcmask 1047559
          %v1294 = vsel %vm1293, %v1280, %v1292
          %v1296 = vsel %vm1238, %v1294, -1e+10
          %vm1297 = vcmask 130048
          %v1298 = vsel %vm1297, %v1296, -inf
          %1299 = vmax.xlane.f32.xlu0 %v1298
          %v1300 = vpop.xlane.xlu0 %1299
          %v1301 = vsub.f32 %v1296, %v1300
          %v1302 = vmul.f32 %v1301, 1.442695
          %v1303 = vpow.pop %v1302
          %v1304 = vsel %vm1297, %v1303, 0.0
          %1305 = vadd.xlane.f32.xlu0 %v1304
          %v1306 = vpop.xlane.xlu0 %1305
          %v1307 = vrcp.pop %v1306
          %v1308 = vmul.f32 %v1303, %v1307
          %1309 = vst.msk [vmem:[%s971] sm:$0xff] %vm1297, %v1308
          %v1310 = vperm.slane %v1308, 0
          %v1311 = vlaneseq
          %v1312 = vshrl.u32 %v1311, 7
          %1314 = vset.pattern.permute.xlu0 %v1312
          %1315 = vperm.xlu0 %1314, %v1310
          %v1316 = vpop.permute.xlu0 %1315
          %v1317 = vlaneseq
          %v1318 = vshrl.u32 %v1317, 7
          %v1319 = vadd.s32 %v1318, 8
          %1320 = vset.pattern.permute.xlu0 %v1319
          %1321 = vperm.xlu0 %1320, %v1310
          %v1322 = vpop.permute.xlu0 %1321
          %v1323 = vperm.slane %v1308, 1
          %v1324 = vlaneseq
          %v1325 = vshrl.u32 %v1324, 7
          %1327 = vset.pattern.permute.xlu0 %v1325
          %1328 = vperm.xlu0 %1327, %v1323
          %v1329 = vpop.permute.xlu0 %1328
          %v1330 = vlaneseq
          %v1331 = vshrl.u32 %v1330, 7
          %v1332 = vadd.s32 %v1331, 8
          %1333 = vset.pattern.permute.xlu0 %v1332
          %1334 = vperm.xlu0 %1333, %v1323
          %v1335 = vpop.permute.xlu0 %1334
          %v1336 = vperm.slane %v1308, 2
          %v1337 = vlaneseq
          %v1338 = vshrl.u32 %v1337, 7
          %1340 = vset.pattern.permute.xlu0 %v1338
          %1341 = vperm.xlu0 %1340, %v1336
          %v1342 = vpop.permute.xlu0 %1341
          %v1343 = vlaneseq
          %v1344 = vshrl.u32 %v1343, 7
          %v1345 = vadd.s32 %v1344, 8
          %1346 = vset.pattern.permute.xlu0 %v1345
          %1347 = vperm.xlu0 %1346, %v1336
          %v1348 = vpop.permute.xlu0 %1347
          %v1349 = vperm.slane %v1308, 3
          %v1350 = vlaneseq
          %v1351 = vshrl.u32 %v1350, 7
          %1353 = vset.pattern.permute.xlu0 %v1351
          %1354 = vperm.xlu0 %1353, %v1349
          %v1355 = vpop.permute.xlu0 %1354
          %v1356 = vlaneseq
          %v1357 = vshrl.u32 %v1356, 7
          %v1358 = vadd.s32 %v1357, 8
          %1359 = vset.pattern.permute.xlu0 %v1358
          %1360 = vperm.xlu0 %1359, %v1349
          %v1361 = vpop.permute.xlu0 %1360
          %v1362 = vperm.slane %v1308, 4
          %v1363 = vlaneseq
          %v1364 = vshrl.u32 %v1363, 7
          %1366 = vset.pattern.permute.xlu0 %v1364
          %1367 = vperm.xlu0 %1366, %v1362
          %v1368 = vpop.permute.xlu0 %1367
          %v1369 = vlaneseq
          %v1370 = vshrl.u32 %v1369, 7
          %v1371 = vadd.s32 %v1370, 8
          %1372 = vset.pattern.permute.xlu0 %v1371
          %1373 = vperm.xlu0 %1372, %v1362
          %v1374 = vpop.permute.xlu0 %1373
          %v1375 = vperm.slane %v1308, 5
          %v1376 = vlaneseq
          %v1377 = vshrl.u32 %v1376, 7
          %1379 = vset.pattern.permute.xlu0 %v1377
          %1380 = vperm.xlu0 %1379, %v1375
          %v1381 = vpop.permute.xlu0 %1380
          %v1382 = vlaneseq
          %v1383 = vshrl.u32 %v1382, 7
          %v1384 = vadd.s32 %v1383, 8
          %1385 = vset.pattern.permute.xlu0 %v1384
          %1386 = vperm.xlu0 %1385, %v1375
          %v1387 = vpop.permute.xlu0 %1386
          %v1388 = vperm.slane %v1308, 6
          %v1389 = vlaneseq
          %v1390 = vshrl.u32 %v1389, 7
          %1392 = vset.pattern.permute.xlu0 %v1390
          %1393 = vperm.xlu0 %1392, %v1388
          %v1394 = vpop.permute.xlu0 %1393
          %v1395 = vlaneseq
          %v1396 = vshrl.u32 %v1395, 7
          %v1397 = vadd.s32 %v1396, 8
          %1398 = vset.pattern.permute.xlu0 %v1397
          %1399 = vperm.xlu0 %1398, %v1388
          %v1400 = vpop.permute.xlu0 %1399
          %v1401 = vperm.slane %v1308, 7
          %v1402 = vlaneseq
          %v1403 = vshrl.u32 %v1402, 7
          %1405 = vset.pattern.permute.xlu0 %v1403
          %1406 = vperm.xlu0 %1405, %v1401
          %v1407 = vpop.permute.xlu0 %1406
          %v1408 = vlaneseq
          %v1409 = vshrl.u32 %v1408, 7
          %v1410 = vadd.s32 %v1409, 8
          %1411 = vset.pattern.permute.xlu0 %v1410
          %1412 = vperm.xlu0 %1411, %v1401
          %v1413 = vpop.permute.xlu0 %1412
          %v1414 = vld [vmem:[%s802] sm:$0xf]
          %v1415 = vld [vmem:[%s802 + $0x4] sm:$0xf]
          %v1416 = vld [vmem:[%s802 + $0x8] sm:$0xf]
          %v1417 = vld [vmem:[%s802 + $0xc] sm:$0xf]
          %v1418 = vld [vmem:[%s802 + $0x10] sm:$0xf]
          %v1419 = vld [vmem:[%s802 + $0x14] sm:$0xf]
          %v1420 = vld [vmem:[%s802 + $0x18] sm:$0xf]
          %v1421 = vld [vmem:[%s802 + $0x1c] sm:$0xf]
          %v1422 = vld [vmem:[%s802 + $0x20] sm:$0xf]
          %v1423 = vld [vmem:[%s802 + $0x24] sm:$0xf]
          %v1424 = vld [vmem:[%s802 + $0x28] sm:$0xf]
          %v1425 = vld [vmem:[%s802 + $0x2c] sm:$0xf]
          %v1426 = vld [vmem:[%s802 + $0x30] sm:$0xf]
          %v1427 = vld [vmem:[%s802 + $0x34] sm:$0xf]
          %v1428 = vld [vmem:[%s802 + $0x38] sm:$0xf]
          %v1429 = vld [vmem:[%s802 + $0x3c] sm:$0xf]
          %v1430 = vunpack.c.l.bf16 %v1414
          %v1431 = vunpack.c.l.bf16 %v1415
          %v1432 = vunpack.c.l.bf16 %v1416
          %v1433 = vunpack.c.l.bf16 %v1417
          %v1434 = vunpack.c.l.bf16 %v1418
          %v1435 = vunpack.c.l.bf16 %v1419
          %v1436 = vunpack.c.l.bf16 %v1420
          %v1437 = vunpack.c.l.bf16 %v1421
          %v1438 = vunpack.c.l.bf16 %v1422
          %v1439 = vunpack.c.l.bf16 %v1423
          %v1440 = vunpack.c.l.bf16 %v1424
          %v1441 = vunpack.c.l.bf16 %v1425
          %v1442 = vunpack.c.l.bf16 %v1426
          %v1443 = vunpack.c.l.bf16 %v1427
          %v1444 = vunpack.c.l.bf16 %v1428
          %v1445 = vunpack.c.l.bf16 %v1429
          %v1446 = vmul.f32 %v1316, %v1430
          %v1447 = vmul.f32 %v1322, %v1431
          %v1448 = vmul.f32 %v1329, %v1432
          %v1449 = vmul.f32 %v1335, %v1433
          %v1450 = vmul.f32 %v1342, %v1434
          %v1451 = vmul.f32 %v1348, %v1435
          %v1452 = vmul.f32 %v1355, %v1436
          %v1453 = vmul.f32 %v1361, %v1437
          %v1454 = vmul.f32 %v1368, %v1438
          %v1455 = vmul.f32 %v1374, %v1439
          %v1456 = vmul.f32 %v1381, %v1440
          %v1457 = vmul.f32 %v1387, %v1441
          %v1458 = vmul.f32 %v1394, %v1442
          %v1459 = vmul.f32 %v1400, %v1443
          %v1460 = vmul.f32 %v1407, %v1444
          %v1461 = vmul.f32 %v1413, %v1445
          %v1462 = vadd.f32 %v1446, %v1447
          %v1463 = vrot.slane %v1462, 4
          %v1464 = vadd.f32 %v1462, %v1463
          %v1465 = vrot.slane %v1464, 2
          %v1466 = vadd.f32 %v1464, %v1465
          %v1467 = vrot.slane %v1466, 1
          %v1468 = vadd.f32 %v1466, %v1467
          %v1469 = vadd.f32 %v1448, %v1449
          %v1470 = vrot.slane %v1469, 4
          %v1471 = vadd.f32 %v1469, %v1470
          %v1472 = vrot.slane %v1471, 2
          %v1473 = vadd.f32 %v1471, %v1472
          %v1474 = vrot.slane %v1473, 1
          %v1475 = vadd.f32 %v1473, %v1474
          %v1476 = vadd.f32 %v1450, %v1451
          %v1477 = vrot.slane %v1476, 4
          %v1478 = vadd.f32 %v1476, %v1477
          %v1479 = vrot.slane %v1478, 2
          %v1480 = vadd.f32 %v1478, %v1479
          %v1481 = vrot.slane %v1480, 1
          %v1482 = vadd.f32 %v1480, %v1481
          %v1483 = vadd.f32 %v1452, %v1453
          %v1484 = vrot.slane %v1483, 4
          %v1485 = vadd.f32 %v1483, %v1484
          %v1486 = vrot.slane %v1485, 2
          %v1487 = vadd.f32 %v1485, %v1486
          %v1488 = vrot.slane %v1487, 1
          %v1489 = vadd.f32 %v1487, %v1488
          %v1490 = vadd.f32 %v1454, %v1455
          %v1491 = vrot.slane %v1490, 4
          %v1492 = vadd.f32 %v1490, %v1491
          %v1493 = vrot.slane %v1492, 2
          %v1494 = vadd.f32 %v1492, %v1493
          %v1495 = vrot.slane %v1494, 1
          %v1496 = vadd.f32 %v1494, %v1495
          %v1497 = vadd.f32 %v1456, %v1457
          %v1498 = vrot.slane %v1497, 4
          %v1499 = vadd.f32 %v1497, %v1498
          %v1500 = vrot.slane %v1499, 2
          %v1501 = vadd.f32 %v1499, %v1500
          %v1502 = vrot.slane %v1501, 1
          %v1503 = vadd.f32 %v1501, %v1502
          %v1504 = vadd.f32 %v1458, %v1459
          %v1505 = vrot.slane %v1504, 4
          %v1506 = vadd.f32 %v1504, %v1505
          %v1507 = vrot.slane %v1506, 2
          %v1508 = vadd.f32 %v1506, %v1507
          %v1509 = vrot.slane %v1508, 1
          %v1510 = vadd.f32 %v1508, %v1509
          %v1511 = vadd.f32 %v1460, %v1461
          %v1512 = vrot.slane %v1511, 4
          %v1513 = vadd.f32 %v1511, %v1512
          %v1514 = vrot.slane %v1513, 2
          %v1515 = vadd.f32 %v1513, %v1514
          %v1516 = vrot.slane %v1515, 1
          %v1517 = vadd.f32 %v1515, %v1516
          %v1518 = vld [vmem:[%s822] sm:$0xff]
          %v1519 = vpack.c.bf16 %v1518, %v1518
          %v1520 = vld [vmem:[#allocation14] sm:$0xf]
          %v1521 = vld [vmem:[#allocation14 + $0x4] sm:$0xf]
          %v1522 = vld [vmem:[#allocation14 + $0x8] sm:$0xf]
          %v1523 = vld [vmem:[#allocation14 + $0xc] sm:$0xf]
          %v1524 = vld [vmem:[#allocation14 + $0x10] sm:$0xf]
          %v1525 = vld [vmem:[#allocation14 + $0x14] sm:$0xf]
          %v1526 = vld [vmem:[#allocation14 + $0x18] sm:$0xf]
          %v1527 = vld [vmem:[#allocation14 + $0x1c] sm:$0xf]
          %v1528 = vld [vmem:[#allocation14 + $0x20] sm:$0xf]
          %v1529 = vld [vmem:[#allocation14 + $0x24] sm:$0xf]
          %v1530 = vld [vmem:[#allocation14 + $0x28] sm:$0xf]
          %v1531 = vld [vmem:[#allocation14 + $0x2c] sm:$0xf]
          %v1532 = vld [vmem:[#allocation14 + $0x30] sm:$0xf]
          %v1533 = vld [vmem:[#allocation14 + $0x34] sm:$0xf]
          %v1534 = vld [vmem:[#allocation14 + $0x38] sm:$0xf]
          %v1535 = vld [vmem:[#allocation14 + $0x3c] sm:$0xf]
          %v1552 = vunpack.c.l.b16 %v1520
          %v1553 = vunpack.c.l.b16 %v1521
          %v1554 = vunpack.c.l.b16 %v1522
          %v1555 = vunpack.c.l.b16 %v1523
          %v1556 = vunpack.c.l.b16 %v1524
          %v1557 = vunpack.c.l.b16 %v1525
          %v1558 = vunpack.c.l.b16 %v1526
          %v1559 = vunpack.c.l.b16 %v1527
          %v1560 = vunpack.c.l.b16 %v1528
          %v1561 = vunpack.c.l.b16 %v1529
          %v1562 = vunpack.c.l.b16 %v1530
          %v1563 = vunpack.c.l.b16 %v1531
          %v1564 = vunpack.c.l.b16 %v1532
          %v1565 = vunpack.c.l.b16 %v1533
          %v1566 = vunpack.c.l.b16 %v1534
          %v1567 = vunpack.c.l.b16 %v1535
          %v1568 = vpack.c.b16 %v1553, %v1552
          %v1569 = vpack.c.b16 %v1555, %v1554
          %v1570 = vpack.c.b16 %v1557, %v1556
          %v1571 = vpack.c.b16 %v1559, %v1558
          %v1572 = vpack.c.b16 %v1561, %v1560
          %v1573 = vpack.c.b16 %v1563, %v1562
          %v1574 = vpack.c.b16 %v1565, %v1564
          %v1575 = vpack.c.b16 %v1567, %v1566
          %1584 = vmatpush.bf16.msra.mxu0 %v1575
          %1585 = vmatpush.bf16.msra.mxu0 %v1574
          %1586 = vmatpush.bf16.msra.mxu0 %v1573
          %1587 = vmatpush.bf16.msra.mxu0 %v1572
          %1588 = vmatpush.bf16.msra.mxu0 %v1571
          %1589 = vmatpush.bf16.msra.mxu0 %v1570
          %1590 = vmatpush.bf16.msra.mxu0 %v1569
          %1591 = vmatpush.bf16.msra.mxu0 %v1568
          %1592 = vmatmul.bf16.gmra.mxu0 %v1519
          %v1593 = vpop.f32.mrf.mxu0
          %v1594 = vadd.f32 0.0, %v1593
          %v1595 = vpop.f32.mrf.mxu0
          %1596 = vdwg.mxu0
          %v1597 = vpack.c.bf16 %v1468, %v1468
          %v1598 = vpack.c.bf16 %v1475, %v1475
          %v1599 = vpack.c.bf16 %v1482, %v1482
          %v1600 = vpack.c.bf16 %v1489, %v1489
          %v1601 = vpack.c.bf16 %v1496, %v1496
          %v1602 = vpack.c.bf16 %v1503, %v1503
          %v1603 = vpack.c.bf16 %v1510, %v1510
          %v1604 = vpack.c.bf16 %v1517, %v1517
          %v1605 = vld [vmem:[#allocation15] sm:$0xf]
          %v1606 = vld [vmem:[#allocation15 + $0x4] sm:$0xf]
          %v1607 = vld [vmem:[#allocation15 + $0x8] sm:$0xf]
          %v1608 = vld [vmem:[#allocation15 + $0xc] sm:$0xf]
          %v1609 = vld [vmem:[#allocation15 + $0x10] sm:$0xf]
          %v1610 = vld [vmem:[#allocation15 + $0x14] sm:$0xf]
          %v1611 = vld [vmem:[#allocation15 + $0x18] sm:$0xf]
          %v1612 = vld [vmem:[#allocation15 + $0x1c] sm:$0xf]
          %v1613 = vld [vmem:[#allocation15 + $0x20] sm:$0xf]
          %v1614 = vld [vmem:[#allocation15 + $0x24] sm:$0xf]
          %v1615 = vld [vmem:[#allocation15 + $0x28] sm:$0xf]
          %v1616 = vld [vmem:[#allocation15 + $0x2c] sm:$0xf]
          %v1617 = vld [vmem:[#allocation15 + $0x30] sm:$0xf]
          %v1618 = vld [vmem:[#allocation15 + $0x34] sm:$0xf]
          %v1619 = vld [vmem:[#allocation15 + $0x38] sm:$0xf]
          %v1620 = vld [vmem:[#allocation15 + $0x3c] sm:$0xf]
          %v1629 = vunpack.c.l.b16 %v1597
          %v1630 = vunpack.c.l.b16 %v1598
          %v1631 = vunpack.c.l.b16 %v1599
          %v1632 = vunpack.c.l.b16 %v1600
          %v1633 = vunpack.c.l.b16 %v1601
          %v1634 = vunpack.c.l.b16 %v1602
          %v1635 = vunpack.c.l.b16 %v1603
          %v1636 = vunpack.c.l.b16 %v1604
          %v1637 = vsel %vm1281, %v1630, %v1629
          %v1638 = vsel %vm1283, %v1631, %v1637
          %v1639 = vsel %vm1285, %v1632, %v1638
          %v1640 = vsel %vm1287, %v1633, %v1639
          %v1641 = vsel %vm1289, %v1634, %v1640
          %v1642 = vsel %vm1291, %v1635, %v1641
          %v1643 = vsel %vm1293, %v1636, %v1642
          %v1644 = vpack.c.b16 %v1643, %v1643
          %v1662 = vunpack.c.l.b16 %v1605
          %v1663 = vunpack.c.l.b16 %v1606
          %v1664 = vunpack.c.l.b16 %v1607
          %v1665 = vunpack.c.l.b16 %v1608
          %v1666 = vunpack.c.l.b16 %v1609
          %v1667 = vunpack.c.l.b16 %v1610
          %v1668 = vunpack.c.l.b16 %v1611
          %v1669 = vunpack.c.l.b16 %v1612
          %v1670 = vunpack.c.l.b16 %v1613
          %v1671 = vunpack.c.l.b16 %v1614
          %v1672 = vunpack.c.l.b16 %v1615
          %v1673 = vunpack.c.l.b16 %v1616
          %v1674 = vunpack.c.l.b16 %v1617
          %v1675 = vunpack.c.l.b16 %v1618
          %v1676 = vunpack.c.l.b16 %v1619
          %v1677 = vunpack.c.l.b16 %v1620
          %v1678 = vpack.c.b16 %v1663, %v1662
          %v1679 = vpack.c.b16 %v1665, %v1664
          %v1680 = vpack.c.b16 %v1667, %v1666
          %v1681 = vpack.c.b16 %v1669, %v1668
          %v1682 = vpack.c.b16 %v1671, %v1670
          %v1683 = vpack.c.b16 %v1673, %v1672
          %v1684 = vpack.c.b16 %v1675, %v1674
          %v1685 = vpack.c.b16 %v1677, %v1676
          %1694 = vmatpush.bf16.msra.mxu0 %v1685
          %1695 = vmatpush.bf16.msra.mxu0 %v1684
          %1696 = vmatpush.bf16.msra.mxu0 %v1683
          %1697 = vmatpush.bf16.msra.mxu0 %v1682
          %1698 = vmatpush.bf16.msra.mxu0 %v1681
          %1699 = vmatpush.bf16.msra.mxu0 %v1680
          %1700 = vmatpush.bf16.msra.mxu0 %v1679
          %1701 = vmatpush.bf16.msra.mxu0 %v1678
          %1702 = vmatmul.bf16.gmra.mxu0 %v1644
          %v1703 = vpop.f32.mrf.mxu0
          %v1704 = vadd.f32 0.0, %v1703
          %v1705 = vpop.f32.mrf.mxu0
          %1706 = vdwg.mxu0
          %v1707 = vpack.c.bf16 %v997, %v997
          %v1708 = vld [vmem:[#allocation17] sm:$0xff]
          %v1709 = vld [vmem:[#allocation17 + $0x8] sm:$0xf]
          %v1710 = vld [vmem:[#allocation17 + $0xc] sm:$0xff]
          %v1711 = vld [vmem:[#allocation17 + $0x14] sm:$0xf]
          %v1712 = vld [vmem:[#allocation17 + $0x18] sm:$0xff]
          %v1713 = vld [vmem:[#allocation17 + $0x20] sm:$0xf]
          %v1714 = vld [vmem:[#allocation17 + $0x24] sm:$0xff]
          %v1715 = vld [vmem:[#allocation17 + $0x2c] sm:$0xf]
          %v1716 = vld [vmem:[#allocation17 + $0x30] sm:$0xff]
          %v1717 = vld [vmem:[#allocation17 + $0x38] sm:$0xf]
          %v1718 = vld [vmem:[#allocation17 + $0x3c] sm:$0xff]
          %v1719 = vld [vmem:[#allocation17 + $0x44] sm:$0xf]
          %v1720 = vld [vmem:[#allocation17 + $0x48] sm:$0xff]
          %v1721 = vld [vmem:[#allocation17 + $0x50] sm:$0xf]
          %v1722 = vld [vmem:[#allocation17 + $0x54] sm:$0xff]
          %v1723 = vld [vmem:[#allocation17 + $0x5c] sm:$0xf]
          %v1724 = vld [vmem:[#allocation17 + $0x60] sm:$0xff]
          %v1725 = vld [vmem:[#allocation17 + $0x68] sm:$0xf]
          %v1726 = vld [vmem:[#allocation17 + $0x6c] sm:$0xff]
          %v1727 = vld [vmem:[#allocation17 + $0x74] sm:$0xf]
          %v1728 = vld [vmem:[#allocation17 + $0x78] sm:$0xff]
          %v1729 = vld [vmem:[#allocation17 + $0x80] sm:$0xf]
          %v1730 = vld [vmem:[#allocation17 + $0x84] sm:$0xff]
          %v1731 = vld [vmem:[#allocation17 + $0x8c] sm:$0xf]
          %v1732 = vld [vmem:[#allocation17 + $0x90] sm:$0xff]
          %v1733 = vld [vmem:[#allocation17 + $0x98] sm:$0xf]
          %v1734 = vld [vmem:[#allocation17 + $0x9c] sm:$0xff]
          %v1735 = vld [vmem:[#allocation17 + $0xa4] sm:$0xf]
          %v1736 = vld [vmem:[#allocation17 + $0xa8] sm:$0xff]
          %v1737 = vld [vmem:[#allocation17 + $0xb0] sm:$0xf]
          %v1738 = vld [vmem:[#allocation17 + $0xb4] sm:$0xff]
          %v1739 = vld [vmem:[#allocation17 + $0xbc] sm:$0xf]
          %v1740 = vpack.c.bf16 %v1704, %v1704
          %v1741 = vld [vmem:[#allocation18] sm:$0xff]
          %v1742 = vld [vmem:[#allocation18 + $0x8] sm:$0xf]
          %v1743 = vld [vmem:[#allocation18 + $0xc] sm:$0xff]
          %v1744 = vld [vmem:[#allocation18 + $0x14] sm:$0xf]
          %v1745 = vld [vmem:[#allocation18 + $0x18] sm:$0xff]
          %v1746 = vld [vmem:[#allocation18 + $0x20] sm:$0xf]
          %v1747 = vld [vmem:[#allocation18 + $0x24] sm:$0xff]
          %v1748 = vld [vmem:[#allocation18 + $0x2c] sm:$0xf]
          %v1749 = vld [vmem:[#allocation18 + $0x30] sm:$0xff]
          %v1750 = vld [vmem:[#allocation18 + $0x38] sm:$0xf]
          %v1751 = vld [vmem:[#allocation18 + $0x3c] sm:$0xff]
          %v1752 = vld [vmem:[#allocation18 + $0x44] sm:$0xf]
          %v1753 = vld [vmem:[#allocation18 + $0x48] sm:$0xff]
          %v1754 = vld [vmem:[#allocation18 + $0x50] sm:$0xf]
          %v1755 = vld [vmem:[#allocation18 + $0x54] sm:$0xff]
          %v1756 = vld [vmem:[#allocation18 + $0x5c] sm:$0xf]
          %v1757 = vld [vmem:[#allocation18 + $0x60] sm:$0xff]
          %v1758 = vld [vmem:[#allocation18 + $0x68] sm:$0xf]
          %v1759 = vld [vmem:[#allocation18 + $0x6c] sm:$0xff]
          %v1760 = vld [vmem:[#allocation18 + $0x74] sm:$0xf]
          %v1761 = vld [vmem:[#allocation18 + $0x78] sm:$0xff]
          %v1762 = vld [vmem:[#allocation18 + $0x80] sm:$0xf]
          %v1763 = vld [vmem:[#allocation18 + $0x84] sm:$0xff]
          %v1764 = vld [vmem:[#allocation18 + $0x8c] sm:$0xf]
          %v1765 = vld [vmem:[#allocation18 + $0x90] sm:$0xff]
          %v1766 = vld [vmem:[#allocation18 + $0x98] sm:$0xf]
          %v1767 = vld [vmem:[#allocation18 + $0x9c] sm:$0xff]
          %v1768 = vld [vmem:[#allocation18 + $0xa4] sm:$0xf]
          %v1769 = vld [vmem:[#allocation18 + $0xa8] sm:$0xff]
          %v1770 = vld [vmem:[#allocation18 + $0xb0] sm:$0xf]
          %v1771 = vld [vmem:[#allocation18 + $0xb4] sm:$0xff]
          %v1772 = vld [vmem:[#allocation18 + $0xbc] sm:$0xf]
          %v1805 = vunpack.c.l.b16 %v1741
          %v1806 = vunpack.c.h.b16 %v1741
          %v1807 = vunpack.c.l.b16 %v1742
          %v1808 = vunpack.c.l.b16 %v1743
          %v1809 = vunpack.c.h.b16 %v1743
          %v1810 = vunpack.c.l.b16 %v1744
          %v1811 = vunpack.c.l.b16 %v1745
          %v1812 = vunpack.c.h.b16 %v1745
          %v1813 = vunpack.c.l.b16 %v1746
          %v1814 = vunpack.c.l.b16 %v1747
          %v1815 = vunpack.c.h.b16 %v1747
          %v1816 = vunpack.c.l.b16 %v1748
          %v1817 = vunpack.c.l.b16 %v1749
          %v1818 = vunpack.c.h.b16 %v1749
          %v1819 = vunpack.c.l.b16 %v1750
          %v1820 = vunpack.c.l.b16 %v1751
          %v1821 = vunpack.c.h.b16 %v1751
          %v1822 = vunpack.c.l.b16 %v1752
          %v1823 = vunpack.c.l.b16 %v1753
          %v1824 = vunpack.c.h.b16 %v1753
          %v1825 = vunpack.c.l.b16 %v1754
          %v1826 = vunpack.c.l.b16 %v1755
          %v1827 = vunpack.c.h.b16 %v1755
          %v1828 = vunpack.c.l.b16 %v1756
          %v1829 = vunpack.c.l.b16 %v1757
          %v1830 = vunpack.c.h.b16 %v1757
          %v1831 = vunpack.c.l.b16 %v1758
          %v1832 = vunpack.c.l.b16 %v1759
          %v1833 = vunpack.c.h.b16 %v1759
          %v1834 = vunpack.c.l.b16 %v1760
          %v1835 = vunpack.c.l.b16 %v1761
          %v1836 = vunpack.c.h.b16 %v1761
          %v1837 = vunpack.c.l.b16 %v1762
          %v1838 = vunpack.c.l.b16 %v1763
          %v1839 = vunpack.c.h.b16 %v1763
          %v1840 = vunpack.c.l.b16 %v1764
          %v1841 = vunpack.c.l.b16 %v1765
          %v1842 = vunpack.c.h.b16 %v1765
          %v1843 = vunpack.c.l.b16 %v1766
          %v1844 = vunpack.c.l.b16 %v1767
          %v1845 = vunpack.c.h.b16 %v1767
          %v1846 = vunpack.c.l.b16 %v1768
          %v1847 = vunpack.c.l.b16 %v1769
          %v1848 = vunpack.c.h.b16 %v1769
          %v1849 = vunpack.c.l.b16 %v1770
          %v1850 = vunpack.c.l.b16 %v1771
          %v1851 = vunpack.c.h.b16 %v1771
          %v1852 = vunpack.c.l.b16 %v1772
          %v1853 = vpack.c.b16 %v1808, %v1805
          %v1854 = vpack.c.b16 %v1809, %v1806
          %v1855 = vpack.c.b16 %v1810, %v1807
          %v1856 = vpack.c.b16 %v1814, %v1811
          %v1857 = vpack.c.b16 %v1815, %v1812
          %v1858 = vpack.c.b16 %v1816, %v1813
          %v1859 = vpack.c.b16 %v1820, %v1817
          %v1860 = vpack.c.b16 %v1821, %v1818
          %v1861 = vpack.c.b16 %v1822, %v1819
          %v1862 = vpack.c.b16 %v1826, %v1823
          %v1863 = vpack.c.b16 %v1827, %v1824
          %v1864 = vpack.c.b16 %v1828, %v1825
          %v1865 = vpack.c.b16 %v1832, %v1829
          %v1866 = vpack.c.b16 %v1833, %v1830
          %v1867 = vpack.c.b16 %v1834, %v1831
          %v1868 = vpack.c.b16 %v1838, %v1835
          %v1869 = vpack.c.b16 %v1839, %v1836
          %v1870 = vpack.c.b16 %v1840, %v1837
          %v1871 = vpack.c.b16 %v1844, %v1841
          %v1872 = vpack.c.b16 %v1845, %v1842
          %v1873 = vpack.c.b16 %v1846, %v1843
          %v1874 = vpack.c.b16 %v1850, %v1847
          %v1875 = vpack.c.b16 %v1851, %v1848
          %v1876 = vpack.c.b16 %v1852, %v1849
          %1901 = vmatpush.bf16.msra.mxu0 %v1874
          %1902 = vmatpush.bf16.msra.mxu0 %v1871
          %1903 = vmatpush.bf16.msra.mxu0 %v1868
          %1904 = vmatpush.bf16.msra.mxu0 %v1865
          %1905 = vmatpush.bf16.msra.mxu0 %v1862
          %1906 = vmatpush.bf16.msra.mxu0 %v1859
          %1907 = vmatpush.bf16.msra.mxu0 %v1856
          %1908 = vmatpush.bf16.msra.mxu0 %v1853
          %1909 = vmatmul.bf16.gmra.mxu0 %v1740
          %v1910 = vpop.f32.mrf.mxu0
          %v1911 = vadd.f32 0.0, %v1910
          %v1912 = vpop.f32.mrf.mxu0
          %1913 = vdwg.mxu0
          %1914 = vmatpush.bf16.msra.mxu0 %v1875
          %1915 = vmatpush.bf16.msra.mxu0 %v1872
          %1916 = vmatpush.bf16.msra.mxu0 %v1869
          %1917 = vmatpush.bf16.msra.mxu0 %v1866
          %1918 = vmatpush.bf16.msra.mxu0 %v1863
          %1919 = vmatpush.bf16.msra.mxu0 %v1860
          %1920 = vmatpush.bf16.msra.mxu0 %v1857
          %1921 = vmatpush.bf16.msra.mxu0 %v1854
          %1922 = vmatmul.bf16.gmra.mxu0 %v1740
          %v1923 = vpop.f32.mrf.mxu0
          %v1924 = vadd.f32 0.0, %v1923
          %v1925 = vpop.f32.mrf.mxu0
          %1926 = vdwg.mxu0
          %1927 = vmatpush.bf16.msra.mxu0 %v1876
          %1928 = vmatpush.bf16.msra.mxu0 %v1873
          %1929 = vmatpush.bf16.msra.mxu0 %v1870
          %1930 = vmatpush.bf16.msra.mxu0 %v1867
          %1931 = vmatpush.bf16.msra.mxu0 %v1864
          %1932 = vmatpush.bf16.msra.mxu0 %v1861
          %1933 = vmatpush.bf16.msra.mxu0 %v1858
          %1934 = vmatpush.bf16.msra.mxu0 %v1855
          %1935 = vmatmul.bf16.gmra.mxu0 %v1740
          %v1936 = vpop.f32.mrf.mxu0
          %v1937 = vadd.f32 0.0, %v1936
          %v1938 = vpop.f32.mrf.mxu0
          %1939 = vdwg.mxu0
          %v1972 = vunpack.c.l.b16 %v1708
          %v1973 = vunpack.c.h.b16 %v1708
          %v1974 = vunpack.c.l.b16 %v1709
          %v1975 = vunpack.c.l.b16 %v1710
          %v1976 = vunpack.c.h.b16 %v1710
          %v1977 = vunpack.c.l.b16 %v1711
          %v1978 = vunpack.c.l.b16 %v1712
          %v1979 = vunpack.c.h.b16 %v1712
          %v1980 = vunpack.c.l.b16 %v1713
          %v1981 = vunpack.c.l.b16 %v1714
          %v1982 = vunpack.c.h.b16 %v1714
          %v1983 = vunpack.c.l.b16 %v1715
          %v1984 = vunpack.c.l.b16 %v1716
          %v1985 = vunpack.c.h.b16 %v1716
          %v1986 = vunpack.c.l.b16 %v1717
          %v1987 = vunpack.c.l.b16 %v1718
          %v1988 = vunpack.c.h.b16 %v1718
          %v1989 = vunpack.c.l.b16 %v1719
          %v1990 = vunpack.c.l.b16 %v1720
          %v1991 = vunpack.c.h.b16 %v1720
          %v1992 = vunpack.c.l.b16 %v1721
          %v1993 = vunpack.c.l.b16 %v1722
          %v1994 = vunpack.c.h.b16 %v1722
          %v1995 = vunpack.c.l.b16 %v1723
          %v1996 = vunpack.c.l.b16 %v1724
          %v1997 = vunpack.c.h.b16 %v1724
          %v1998 = vunpack.c.l.b16 %v1725
          %v1999 = vunpack.c.l.b16 %v1726
          %v2000 = vunpack.c.h.b16 %v1726
          %v2001 = vunpack.c.l.b16 %v1727
          %v2002 = vunpack.c.l.b16 %v1728
          %v2003 = vunpack.c.h.b16 %v1728
          %v2004 = vunpack.c.l.b16 %v1729
          %v2005 = vunpack.c.l.b16 %v1730
          %v2006 = vunpack.c.h.b16 %v1730
          %v2007 = vunpack.c.l.b16 %v1731
          %v2008 = vunpack.c.l.b16 %v1732
          %v2009 = vunpack.c.h.b16 %v1732
          %v2010 = vunpack.c.l.b16 %v1733
          %v2011 = vunpack.c.l.b16 %v1734
          %v2012 = vunpack.c.h.b16 %v1734
          %v2013 = vunpack.c.l.b16 %v1735
          %v2014 = vunpack.c.l.b16 %v1736
          %v2015 = vunpack.c.h.b16 %v1736
          %v2016 = vunpack.c.l.b16 %v1737
          %v2017 = vunpack.c.l.b16 %v1738
          %v2018 = vunpack.c.h.b16 %v1738
          %v2019 = vunpack.c.l.b16 %v1739
          %v2020 = vpack.c.b16 %v1975, %v1972
          %v2021 = vpack.c.b16 %v1976, %v1973
          %v2022 = vpack.c.b16 %v1977, %v1974
          %v2023 = vpack.c.b16 %v1981, %v1978
          %v2024 = vpack.c.b16 %v1982, %v1979
          %v2025 = vpack.c.b16 %v1983, %v1980
          %v2026 = vpack.c.b16 %v1987, %v1984
          %v2027 = vpack.c.b16 %v1988, %v1985
          %v2028 = vpack.c.b16 %v1989, %v1986
          %v2029 = vpack.c.b16 %v1993, %v1990
          %v2030 = vpack.c.b16 %v1994, %v1991
          %v2031 = vpack.c.b16 %v1995, %v1992
          %v2032 = vpack.c.b16 %v1999, %v1996
          %v2033 = vpack.c.b16 %v2000, %v1997
          %v2034 = vpack.c.b16 %v2001, %v1998
          %v2035 = vpack.c.b16 %v2005, %v2002
          %v2036 = vpack.c.b16 %v2006, %v2003
          %v2037 = vpack.c.b16 %v2007, %v2004
          %v2038 = vpack.c.b16 %v2011, %v2008
          %v2039 = vpack.c.b16 %v2012, %v2009
          %v2040 = vpack.c.b16 %v2013, %v2010
          %v2041 = vpack.c.b16 %v2017, %v2014
          %v2042 = vpack.c.b16 %v2018, %v2015
          %v2043 = vpack.c.b16 %v2019, %v2016
          %2068 = vmatpush.bf16.msra.mxu0 %v2041
          %2069 = vmatpush.bf16.msra.mxu0 %v2038
          %2070 = vmatpush.bf16.msra.mxu0 %v2035
          %2071 = vmatpush.bf16.msra.mxu0 %v2032
          %2072 = vmatpush.bf16.msra.mxu0 %v2029
          %2073 = vmatpush.bf16.msra.mxu0 %v2026
          %2074 = vmatpush.bf16.msra.mxu0 %v2023
          %2075 = vmatpush.bf16.msra.mxu0 %v2020
          %2076 = vmatmul.bf16.gmra.mxu0 %v1707
          %v2077 = vpop.f32.mrf.mxu0
          %v2078 = vadd.f32 %v1911, %v2077
          %v2079 = vpop.f32.mrf.mxu0
          %2080 = vdwg.mxu0
          %2081 = vmatpush.bf16.msra.mxu0 %v2042
          %2082 = vmatpush.bf16.msra.mxu0 %v2039
          %2083 = vmatpush.bf16.msra.mxu0 %v2036
          %2084 = vmatpush.bf16.msra.mxu0 %v2033
          %2085 = vmatpush.bf16.msra.mxu0 %v2030
          %2086 = vmatpush.bf16.msra.mxu0 %v2027
          %2087 = vmatpush.bf16.msra.mxu0 %v2024
          %2088 = vmatpush.bf16.msra.mxu0 %v2021
          %2089 = vmatmul.bf16.gmra.mxu0 %v1707
          %v2090 = vpop.f32.mrf.mxu0
          %v2091 = vadd.f32 %v1924, %v2090
          %v2092 = vpop.f32.mrf.mxu0
          %2093 = vdwg.mxu0
          %2094 = vmatpush.bf16.msra.mxu0 %v2043
          %2095 = vmatpush.bf16.msra.mxu0 %v2040
          %2096 = vmatpush.bf16.msra.mxu0 %v2037
          %2097 = vmatpush.bf16.msra.mxu0 %v2034
          %2098 = vmatpush.bf16.msra.mxu0 %v2031
          %2099 = vmatpush.bf16.msra.mxu0 %v2028
          %2100 = vmatpush.bf16.msra.mxu0 %v2025
          %2101 = vmatpush.bf16.msra.mxu0 %v2022
          %2102 = vmatmul.bf16.gmra.mxu0 %v1707
          %v2103 = vpop.f32.mrf.mxu0
          %v2104 = vadd.f32 %v1937, %v2103
          %v2105 = vpop.f32.mrf.mxu0
          %2106 = vdwg.mxu0
          %v2107 = vpack.c.bf16 %v1594, %v1594
          %v2108 = vld [vmem:[#allocation20] sm:$0xff]
          %v2109 = vld [vmem:[#allocation20 + $0x8] sm:$0xf]
          %v2110 = vld [vmem:[#allocation20 + $0xc] sm:$0xff]
          %v2111 = vld [vmem:[#allocation20 + $0x14] sm:$0xf]
          %v2112 = vld [vmem:[#allocation20 + $0x18] sm:$0xff]
          %v2113 = vld [vmem:[#allocation20 + $0x20] sm:$0xf]
          %v2114 = vld [vmem:[#allocation20 + $0x24] sm:$0xff]
          %v2115 = vld [vmem:[#allocation20 + $0x2c] sm:$0xf]
          %v2116 = vld [vmem:[#allocation20 + $0x30] sm:$0xff]
          %v2117 = vld [vmem:[#allocation20 + $0x38] sm:$0xf]
          %v2118 = vld [vmem:[#allocation20 + $0x3c] sm:$0xff]
          %v2119 = vld [vmem:[#allocation20 + $0x44] sm:$0xf]
          %v2120 = vld [vmem:[#allocation20 + $0x48] sm:$0xff]
          %v2121 = vld [vmem:[#allocation20 + $0x50] sm:$0xf]
          %v2122 = vld [vmem:[#allocation20 + $0x54] sm:$0xff]
          %v2123 = vld [vmem:[#allocation20 + $0x5c] sm:$0xf]
          %v2124 = vld [vmem:[#allocation20 + $0x60] sm:$0xff]
          %v2125 = vld [vmem:[#allocation20 + $0x68] sm:$0xf]
          %v2126 = vld [vmem:[#allocation20 + $0x6c] sm:$0xff]
          %v2127 = vld [vmem:[#allocation20 + $0x74] sm:$0xf]
          %v2128 = vld [vmem:[#allocation20 + $0x78] sm:$0xff]
          %v2129 = vld [vmem:[#allocation20 + $0x80] sm:$0xf]
          %v2130 = vld [vmem:[#allocation20 + $0x84] sm:$0xff]
          %v2131 = vld [vmem:[#allocation20 + $0x8c] sm:$0xf]
          %v2132 = vld [vmem:[#allocation20 + $0x90] sm:$0xff]
          %v2133 = vld [vmem:[#allocation20 + $0x98] sm:$0xf]
          %v2134 = vld [vmem:[#allocation20 + $0x9c] sm:$0xff]
          %v2135 = vld [vmem:[#allocation20 + $0xa4] sm:$0xf]
          %v2136 = vld [vmem:[#allocation20 + $0xa8] sm:$0xff]
          %v2137 = vld [vmem:[#allocation20 + $0xb0] sm:$0xf]
          %v2138 = vld [vmem:[#allocation20 + $0xb4] sm:$0xff]
          %v2139 = vld [vmem:[#allocation20 + $0xbc] sm:$0xf]
          %v2172 = vunpack.c.l.b16 %v2108
          %v2173 = vunpack.c.h.b16 %v2108
          %v2174 = vunpack.c.l.b16 %v2109
          %v2175 = vunpack.c.l.b16 %v2110
          %v2176 = vunpack.c.h.b16 %v2110
          %v2177 = vunpack.c.l.b16 %v2111
          %v2178 = vunpack.c.l.b16 %v2112
          %v2179 = vunpack.c.h.b16 %v2112
          %v2180 = vunpack.c.l.b16 %v2113
          %v2181 = vunpack.c.l.b16 %v2114
          %v2182 = vunpack.c.h.b16 %v2114
          %v2183 = vunpack.c.l.b16 %v2115
          %v2184 = vunpack.c.l.b16 %v2116
          %v2185 = vunpack.c.h.b16 %v2116
          %v2186 = vunpack.c.l.b16 %v2117
          %v2187 = vunpack.c.l.b16 %v2118
          %v2188 = vunpack.c.h.b16 %v2118
          %v2189 = vunpack.c.l.b16 %v2119
          %v2190 = vunpack.c.l.b16 %v2120
          %v2191 = vunpack.c.h.b16 %v2120
          %v2192 = vunpack.c.l.b16 %v2121
          %v2193 = vunpack.c.l.b16 %v2122
          %v2194 = vunpack.c.h.b16 %v2122
          %v2195 = vunpack.c.l.b16 %v2123
          %v2196 = vunpack.c.l.b16 %v2124
          %v2197 = vunpack.c.h.b16 %v2124
          %v2198 = vunpack.c.l.b16 %v2125
          %v2199 = vunpack.c.l.b16 %v2126
          %v2200 = vunpack.c.h.b16 %v2126
          %v2201 = vunpack.c.l.b16 %v2127
          %v2202 = vunpack.c.l.b16 %v2128
          %v2203 = vunpack.c.h.b16 %v2128
          %v2204 = vunpack.c.l.b16 %v2129
          %v2205 = vunpack.c.l.b16 %v2130
          %v2206 = vunpack.c.h.b16 %v2130
          %v2207 = vunpack.c.l.b16 %v2131
          %v2208 = vunpack.c.l.b16 %v2132
          %v2209 = vunpack.c.h.b16 %v2132
          %v2210 = vunpack.c.l.b16 %v2133
          %v2211 = vunpack.c.l.b16 %v2134
          %v2212 = vunpack.c.h.b16 %v2134
          %v2213 = vunpack.c.l.b16 %v2135
          %v2214 = vunpack.c.l.b16 %v2136
          %v2215 = vunpack.c.h.b16 %v2136
          %v2216 = vunpack.c.l.b16 %v2137
          %v2217 = vunpack.c.l.b16 %v2138
          %v2218 = vunpack.c.h.b16 %v2138
          %v2219 = vunpack.c.l.b16 %v2139
          %v2220 = vpack.c.b16 %v2175, %v2172
          %v2221 = vpack.c.b16 %v2176, %v2173
          %v2222 = vpack.c.b16 %v2177, %v2174
          %v2223 = vpack.c.b16 %v2181, %v2178
          %v2224 = vpack.c.b16 %v2182, %v2179
          %v2225 = vpack.c.b16 %v2183, %v2180
          %v2226 = vpack.c.b16 %v2187, %v2184
          %v2227 = vpack.c.b16 %v2188, %v2185
          %v2228 = vpack.c.b16 %v2189, %v2186
          %v2229 = vpack.c.b16 %v2193, %v2190
          %v2230 = vpack.c.b16 %v2194, %v2191
          %v2231 = vpack.c.b16 %v2195, %v2192
          %v2232 = vpack.c.b16 %v2199, %v2196
          %v2233 = vpack.c.b16 %v2200, %v2197
          %v2234 = vpack.c.b16 %v2201, %v2198
          %v2235 = vpack.c.b16 %v2205, %v2202
          %v2236 = vpack.c.b16 %v2206, %v2203
          %v2237 = vpack.c.b16 %v2207, %v2204
          %v2238 = vpack.c.b16 %v2211, %v2208
          %v2239 = vpack.c.b16 %v2212, %v2209
          %v2240 = vpack.c.b16 %v2213, %v2210
          %v2241 = vpack.c.b16 %v2217, %v2214
          %v2242 = vpack.c.b16 %v2218, %v2215
          %v2243 = vpack.c.b16 %v2219, %v2216
          %2268 = vmatpush.bf16.msra.mxu0 %v2241
          %2269 = vmatpush.bf16.msra.mxu0 %v2238
          %2270 = vmatpush.bf16.msra.mxu0 %v2235
          %2271 = vmatpush.bf16.msra.mxu0 %v2232
          %2272 = vmatpush.bf16.msra.mxu0 %v2229
          %2273 = vmatpush.bf16.msra.mxu0 %v2226
          %2274 = vmatpush.bf16.msra.mxu0 %v2223
          %2275 = vmatpush.bf16.msra.mxu0 %v2220
          %2276 = vmatmul.bf16.gmra.mxu0 %v2107
          %v2277 = vpop.f32.mrf.mxu0
          %v2278 = vadd.f32 0.0, %v2277
          %v2279 = vpop.f32.mrf.mxu0
          %2280 = vdwg.mxu0
          %2281 = vmatpush.bf16.msra.mxu0 %v2242
          %2282 = vmatpush.bf16.msra.mxu0 %v2239
          %2283 = vmatpush.bf16.msra.mxu0 %v2236
          %2284 = vmatpush.bf16.msra.mxu0 %v2233
          %2285 = vmatpush.bf16.msra.mxu0 %v2230
          %2286 = vmatpush.bf16.msra.mxu0 %v2227
          %2287 = vmatpush.bf16.msra.mxu0 %v2224
          %2288 = vmatpush.bf16.msra.mxu0 %v2221
          %2289 = vmatmul.bf16.gmra.mxu0 %v2107
          %v2290 = vpop.f32.mrf.mxu0
          %v2291 = vadd.f32 0.0, %v2290
          %v2292 = vpop.f32.mrf.mxu0
          %2293 = vdwg.mxu0
          %2294 = vmatpush.bf16.msra.mxu0 %v2243
          %2295 = vmatpush.bf16.msra.mxu0 %v2240
          %2296 = vmatpush.bf16.msra.mxu0 %v2237
          %2297 = vmatpush.bf16.msra.mxu0 %v2234
          %2298 = vmatpush.bf16.msra.mxu0 %v2231
          %2299 = vmatpush.bf16.msra.mxu0 %v2228
          %2300 = vmatpush.bf16.msra.mxu0 %v2225
          %2301 = vmatpush.bf16.msra.mxu0 %v2222
          %2302 = vmatmul.bf16.gmra.mxu0 %v2107
          %v2303 = vpop.f32.mrf.mxu0
          %v2304 = vadd.f32 0.0, %v2303
          %v2305 = vpop.f32.mrf.mxu0
          %2306 = vdwg.mxu0
          %v2307 = vadd.f32 %v2078, %v2278
          %v2308 = vadd.f32 %v2091, %v2291
          %v2309 = vadd.f32 %v2104, %v2304
          %v2310 = vld [vmem:[%s14] ss:$2 sm:$0x7]
          %v2312 = vperm.slane %v2310, 0
          %v2313 = vperm.slane %v2310, 1
          %v2314 = vperm.slane %v2310, 2
          %v2318 = vadd.f32 %v2307, %v2312
          %v2319 = vadd.f32 %v2308, %v2313
          %v2320 = vadd.f32 %v2309, %v2314
          %v2321 = vld [vmem:[#allocation21] sm:$0xff]
          %v2322 = vld [vmem:[#allocation21 + $0x8] sm:$0xf]
          %v2323 = vld [vmem:[#allocation21 + $0xc] sm:$0xff]
          %v2324 = vld [vmem:[#allocation21 + $0x14] sm:$0xf]
          %v2325 = vld [vmem:[#allocation21 + $0x18] sm:$0xff]
          %v2326 = vld [vmem:[#allocation21 + $0x20] sm:$0xf]
          %v2327 = vld [vmem:[#allocation21 + $0x24] sm:$0xff]
          %v2328 = vld [vmem:[#allocation21 + $0x2c] sm:$0xf]
          %v2329 = vld [vmem:[#allocation21 + $0x30] sm:$0xff]
          %v2330 = vld [vmem:[#allocation21 + $0x38] sm:$0xf]
          %v2331 = vld [vmem:[#allocation21 + $0x3c] sm:$0xff]
          %v2332 = vld [vmem:[#allocation21 + $0x44] sm:$0xf]
          %v2333 = vld [vmem:[#allocation21 + $0x48] sm:$0xff]
          %v2334 = vld [vmem:[#allocation21 + $0x50] sm:$0xf]
          %v2335 = vld [vmem:[#allocation21 + $0x54] sm:$0xff]
          %v2336 = vld [vmem:[#allocation21 + $0x5c] sm:$0xf]
          %v2337 = vld [vmem:[#allocation21 + $0x60] sm:$0xff]
          %v2338 = vld [vmem:[#allocation21 + $0x68] sm:$0xf]
          %v2339 = vld [vmem:[#allocation21 + $0x6c] sm:$0xff]
          %v2340 = vld [vmem:[#allocation21 + $0x74] sm:$0xf]
          %v2341 = vld [vmem:[#allocation21 + $0x78] sm:$0xff]
          %v2342 = vld [vmem:[#allocation21 + $0x80] sm:$0xf]
          %v2343 = vld [vmem:[#allocation21 + $0x84] sm:$0xff]
          %v2344 = vld [vmem:[#allocation21 + $0x8c] sm:$0xf]
          %v2345 = vld [vmem:[#allocation21 + $0x90] sm:$0xff]
          %v2346 = vld [vmem:[#allocation21 + $0x98] sm:$0xf]
          %v2347 = vld [vmem:[#allocation21 + $0x9c] sm:$0xff]
          %v2348 = vld [vmem:[#allocation21 + $0xa4] sm:$0xf]
          %v2349 = vld [vmem:[#allocation21 + $0xa8] sm:$0xff]
          %v2350 = vld [vmem:[#allocation21 + $0xb0] sm:$0xf]
          %v2351 = vld [vmem:[#allocation21 + $0xb4] sm:$0xff]
          %v2352 = vld [vmem:[#allocation21 + $0xbc] sm:$0xf]
          %s2353 = scalar_lea.vmem %s14, 1
          %v2354 = vld [vmem:[%s2353] ss:$2 sm:$0x7]
          %v2356 = vperm.slane %v2354, 0
          %v2357 = vperm.slane %v2354, 1
          %v2358 = vperm.slane %v2354, 2
          %v2394 = vunpack.c.l.b16 %v2321
          %v2395 = vunpack.c.h.b16 %v2321
          %v2396 = vunpack.c.l.b16 %v2322
          %v2397 = vunpack.c.l.b16 %v2323
          %v2398 = vunpack.c.h.b16 %v2323
          %v2399 = vunpack.c.l.b16 %v2324
          %v2400 = vunpack.c.l.b16 %v2325
          %v2401 = vunpack.c.h.b16 %v2325
          %v2402 = vunpack.c.l.b16 %v2326
          %v2403 = vunpack.c.l.b16 %v2327
          %v2404 = vunpack.c.h.b16 %v2327
          %v2405 = vunpack.c.l.b16 %v2328
          %v2406 = vunpack.c.l.b16 %v2329
          %v2407 = vunpack.c.h.b16 %v2329
          %v2408 = vunpack.c.l.b16 %v2330
          %v2409 = vunpack.c.l.b16 %v2331
          %v2410 = vunpack.c.h.b16 %v2331
          %v2411 = vunpack.c.l.b16 %v2332
          %v2412 = vunpack.c.l.b16 %v2333
          %v2413 = vunpack.c.h.b16 %v2333
          %v2414 = vunpack.c.l.b16 %v2334
          %v2415 = vunpack.c.l.b16 %v2335
          %v2416 = vunpack.c.h.b16 %v2335
          %v2417 = vunpack.c.l.b16 %v2336
          %v2418 = vunpack.c.l.b16 %v2337
          %v2419 = vunpack.c.h.b16 %v2337
          %v2420 = vunpack.c.l.b16 %v2338
          %v2421 = vunpack.c.l.b16 %v2339
          %v2422 = vunpack.c.h.b16 %v2339
          %v2423 = vunpack.c.l.b16 %v2340
          %v2424 = vunpack.c.l.b16 %v2341
          %v2425 = vunpack.c.h.b16 %v2341
          %v2426 = vunpack.c.l.b16 %v2342
          %v2427 = vunpack.c.l.b16 %v2343
          %v2428 = vunpack.c.h.b16 %v2343
          %v2429 = vunpack.c.l.b16 %v2344
          %v2430 = vunpack.c.l.b16 %v2345
          %v2431 = vunpack.c.h.b16 %v2345
          %v2432 = vunpack.c.l.b16 %v2346
          %v2433 = vunpack.c.l.b16 %v2347
          %v2434 = vunpack.c.h.b16 %v2347
          %v2435 = vunpack.c.l.b16 %v2348
          %v2436 = vunpack.c.l.b16 %v2349
          %v2437 = vunpack.c.h.b16 %v2349
          %v2438 = vunpack.c.l.b16 %v2350
          %v2439 = vunpack.c.l.b16 %v2351
          %v2440 = vunpack.c.h.b16 %v2351
          %v2441 = vunpack.c.l.b16 %v2352
          %v2442 = vpack.c.b16 %v2397, %v2394
          %v2443 = vpack.c.b16 %v2398, %v2395
          %v2444 = vpack.c.b16 %v2399, %v2396
          %v2445 = vpack.c.b16 %v2403, %v2400
          %v2446 = vpack.c.b16 %v2404, %v2401
          %v2447 = vpack.c.b16 %v2405, %v2402
          %v2448 = vpack.c.b16 %v2409, %v2406
          %v2449 = vpack.c.b16 %v2410, %v2407
          %v2450 = vpack.c.b16 %v2411, %v2408
          %v2451 = vpack.c.b16 %v2415, %v2412
          %v2452 = vpack.c.b16 %v2416, %v2413
          %v2453 = vpack.c.b16 %v2417, %v2414
          %v2454 = vpack.c.b16 %v2421, %v2418
          %v2455 = vpack.c.b16 %v2422, %v2419
          %v2456 = vpack.c.b16 %v2423, %v2420
          %v2457 = vpack.c.b16 %v2427, %v2424
          %v2458 = vpack.c.b16 %v2428, %v2425
          %v2459 = vpack.c.b16 %v2429, %v2426
          %v2460 = vpack.c.b16 %v2433, %v2430
          %v2461 = vpack.c.b16 %v2434, %v2431
          %v2462 = vpack.c.b16 %v2435, %v2432
          %v2463 = vpack.c.b16 %v2439, %v2436
          %v2464 = vpack.c.b16 %v2440, %v2437
          %v2465 = vpack.c.b16 %v2441, %v2438
          %2490 = vmatpush.bf16.msra.mxu0 %v2463
          %2491 = vmatpush.bf16.msra.mxu0 %v2460
          %2492 = vmatpush.bf16.msra.mxu0 %v2457
          %2493 = vmatpush.bf16.msra.mxu0 %v2454
          %2494 = vmatpush.bf16.msra.mxu0 %v2451
          %2495 = vmatpush.bf16.msra.mxu0 %v2448
          %2496 = vmatpush.bf16.msra.mxu0 %v2445
          %2497 = vmatpush.bf16.msra.mxu0 %v2442
          %2498 = vmatmul.bf16.gmra.mxu0 %v998
          %v2499 = vpop.f32.mrf.mxu0
          %v2500 = vadd.f32 %v2356, %v2499
          %v2501 = vpop.f32.mrf.mxu0
          %2502 = vdwg.mxu0
          %2503 = vmatpush.bf16.msra.mxu0 %v2464
          %2504 = vmatpush.bf16.msra.mxu0 %v2461
          %2505 = vmatpush.bf16.msra.mxu0 %v2458
          %2506 = vmatpush.bf16.msra.mxu0 %v2455
          %2507 = vmatpush.bf16.msra.mxu0 %v2452
          %2508 = vmatpush.bf16.msra.mxu0 %v2449
          %2509 = vmatpush.bf16.msra.mxu0 %v2446
          %2510 = vmatpush.bf16.msra.mxu0 %v2443
          %2511 = vmatmul.bf16.gmra.mxu0 %v998
          %v2512 = vpop.f32.mrf.mxu0
          %v2513 = vadd.f32 %v2357, %v2512
          %v2514 = vpop.f32.mrf.mxu0
          %2515 = vdwg.mxu0
          %2516 = vmatpush.bf16.msra.mxu0 %v2465
          %2517 = vmatpush.bf16.msra.mxu0 %v2462
          %2518 = vmatpush.bf16.msra.mxu0 %v2459
          %2519 = vmatpush.bf16.msra.mxu0 %v2456
          %2520 = vmatpush.bf16.msra.mxu0 %v2453
          %2521 = vmatpush.bf16.msra.mxu0 %v2450
          %2522 = vmatpush.bf16.msra.mxu0 %v2447
          %2523 = vmatpush.bf16.msra.mxu0 %v2444
          %2524 = vmatmul.bf16.gmra.mxu0 %v998
          %v2525 = vpop.f32.mrf.mxu0
          %v2526 = vadd.f32 %v2358, %v2525
          %v2527 = vpop.f32.mrf.mxu0
          %2528 = vdwg.mxu0
          %v2529 = vadd.f32 %v2318, %v2500
          %v2530 = vxor.u32 %v2529, 2147483648
          %v2531 = vmul.f32 %v2530, 1.442695
          %v2532 = vpow.pop %v2531
          %v2533 = vadd.f32 %v2532, 1.0
          %v2534 = vrcp.pop %v2533
          %v2535 = vmul.f32 %v2533, %v2534
          %v2536 = vsub.f32 1.0, %v2535
          %v2537 = vmul.f32 %v2534, %v2536
          %v2538 = vadd.f32 %v2534, %v2537
          %vm2539 = vweird.f32 %v2533
          %vm2540 = vweird.f32 %v2534
          %vm2541 = vmor %vm2539, %vm2540
          %v2542 = vsel %vm2541, %v2534, %v2538
          %v2543 = vand.u32 2147483647, %v2533
          %vm2544 = vcmp.eq.f32.partialorder %v2543, 8.507059e+37
          %v2545 = vand.u32 %v2533, 2147483648
          %v2546 = vor.u32 1.1754944e-38, %v2545
          %v2547 = vsel %vm2544, %v2546, %v2542
          %v2548 = vmul.f32 1.0, %v2547
          %v2549 = vadd.f32 %v2319, %v2513
          %v2550 = vxor.u32 %v2549, 2147483648
          %v2551 = vmul.f32 %v2550, 1.442695
          %v2552 = vpow.pop %v2551
          %v2553 = vadd.f32 %v2552, 1.0
          %v2554 = vrcp.pop %v2553
          %v2555 = vmul.f32 %v2553, %v2554
          %v2556 = vsub.f32 1.0, %v2555
          %v2557 = vmul.f32 %v2554, %v2556
          %v2558 = vadd.f32 %v2554, %v2557
          %vm2559 = vweird.f32 %v2553
          %vm2560 = vweird.f32 %v2554
          %vm2561 = vmor %vm2559, %vm2560
          %v2562 = vsel %vm2561, %v2554, %v2558
          %v2563 = vand.u32 2147483647, %v2553
          %vm2564 = vcmp.eq.f32.partialorder %v2563, 8.507059e+37
          %v2565 = vand.u32 %v2553, 2147483648
          %v2566 = vor.u32 1.1754944e-38, %v2565
          %v2567 = vsel %vm2564, %v2566, %v2562
          %v2568 = vmul.f32 1.0, %v2567
          %v2569 = vmul.f32 %v2548, %v2526
          %v2570 = vadd.f32 %v2320, %v2569
          %v2571 = vtanh.pop %v2570
          %v2572 = vsub.f32 1.0, %v2568
          %v2573 = vmul.f32 %v2572, %v2571
          %v2574 = vmul.f32 %v2568, %v996
          %v2575 = vadd.f32 %v2573, %v2574
          %2576 = vst [vmem:[#allocation2] sm:$0xff] %v2575
          %2577 = vst [vmem:[%s964] sm:$0xff] %v2575
        $region144: #{tpu_custom_call.1} parent=87 // pred_fallthru
          _
        %v2578 = vld [vmem:[#allocation2] sm:$0xff]
        %v2579 = vpack.c.bf16 %v2578, %v2578
        %v2580 = vld [vmem:[%s882] sm:$0xf]
        %v2581 = vld [vmem:[%s882 + $0x4] sm:$0xf]
        %v2582 = vld [vmem:[%s882 + $0x8] sm:$0xf]
        %v2583 = vld [vmem:[%s882 + $0xc] sm:$0xf]
        %v2584 = vld [vmem:[%s882 + $0x10] sm:$0xf]
        %v2585 = vld [vmem:[%s882 + $0x14] sm:$0xf]
        %v2586 = vld [vmem:[%s882 + $0x18] sm:$0xf]
        %v2587 = vld [vmem:[%s882 + $0x1c] sm:$0xf]
        %v2588 = vld [vmem:[%s882 + $0x20] sm:$0xf]
        %v2589 = vld [vmem:[%s882 + $0x24] sm:$0xf]
        %v2590 = vld [vmem:[%s882 + $0x28] sm:$0xf]
        %v2591 = vld [vmem:[%s882 + $0x2c] sm:$0xf]
        %v2592 = vld [vmem:[%s882 + $0x30] sm:$0xf]
        %v2593 = vld [vmem:[%s882 + $0x34] sm:$0xf]
        %v2594 = vld [vmem:[%s882 + $0x38] sm:$0xf]
        %v2595 = vld [vmem:[%s882 + $0x3c] sm:$0xf]
        %v2596 = vld [vmem:[%s991] sm:$0x1]
        %v2598 = vperm.slane %v2596, 0
        %v2616 = vunpack.c.l.b16 %v2580
        %v2617 = vunpack.c.l.b16 %v2581
        %v2618 = vunpack.c.l.b16 %v2582
        %v2619 = vunpack.c.l.b16 %v2583
        %v2620 = vunpack.c.l.b16 %v2584
        %v2621 = vunpack.c.l.b16 %v2585
        %v2622 = vunpack.c.l.b16 %v2586
        %v2623 = vunpack.c.l.b16 %v2587
        %v2624 = vunpack.c.l.b16 %v2588
        %v2625 = vunpack.c.l.b16 %v2589
        %v2626 = vunpack.c.l.b16 %v2590
        %v2627 = vunpack.c.l.b16 %v2591
        %v2628 = vunpack.c.l.b16 %v2592
        %v2629 = vunpack.c.l.b16 %v2593
        %v2630 = vunpack.c.l.b16 %v2594
        %v2631 = vunpack.c.l.b16 %v2595
        %v2632 = vpack.c.b16 %v2617, %v2616
        %v2633 = vpack.c.b16 %v2619, %v2618
        %v2634 = vpack.c.b16 %v2621, %v2620
        %v2635 = vpack.c.b16 %v2623, %v2622
        %v2636 = vpack.c.b16 %v2625, %v2624
        %v2637 = vpack.c.b16 %v2627, %v2626
        %v2638 = vpack.c.b16 %v2629, %v2628
        %v2639 = vpack.c.b16 %v2631, %v2630
        %2648 = vmatpush.bf16.msra.mxu0 %v2639
        %2649 = vmatpush.bf16.msra.mxu0 %v2638
        %2650 = vmatpush.bf16.msra.mxu0 %v2637
        %2651 = vmatpush.bf16.msra.mxu0 %v2636
        %2652 = vmatpush.bf16.msra.mxu0 %v2635
        %2653 = vmatpush.bf16.msra.mxu0 %v2634
        %2654 = vmatpush.bf16.msra.mxu0 %v2633
        %2655 = vmatpush.bf16.msra.mxu0 %v2632
        %2656 = vmatmul.bf16.gmra.mxu0 %v2579
        %v2657 = vpop.f32.mrf.mxu0
        %v2658 = vadd.f32 %v2598, %v2657
        %v2659 = vpop.f32.mrf.mxu0
        %2660 = vdwg.mxu0
        %2661 = vst [vmem:[%s978] sm:$0xff] %v2658
        %s2662 = sand.u32 %s467, 1
        %s2663 = scalar_lea.sflag [#allocation5], %s2662
        %s2664 = sand.u32 %s467, 1
        %s2665 = smul.addr %s2664, 8
        %s2666 = scalar_lea.vmem [#allocation24], %s2665
        %s2667 = sand.u32 %s50, 1
        %s2668 = scalar_lea.sflag [#allocation26], %s2667
        %s2669 = sand.u32 %s493, 1
        %s2670 = smul.addr %s2669, 8
        %s2671 = scalar_lea.vmem [#allocation25], %s2670
        %s2672 = sand.u32 %s50, 1
        %s2673 = scalar_lea.sflag [#allocation26], %s2672
        %s2674 = sand.u32 %s521, 1
        %s2675 = smul.addr %s2674, 8
        %s2676 = scalar_lea.vmem [#allocation27], %s2675
        // Predicated region
        $region145: #{tpu_custom_call.1} parent=87 // pred_check
          %p2677 = pneg %p477
        $region146: #{tpu_custom_call.1} parent=87 // pred_check_branch
          %2679 = sbr.rel (%p2677) target = $region148
        $region147: #{tpu_custom_call.1} parent=87 // pred_region
          %2681 = vsyncadd %s2663, 0
          %s2682 = smul.addr %s54, 8
          %s2683 = scalar_lea.hbm %s17, %s2682
          %s2685 = sshll.u32 %s2666, 4
          %s2686 = int_to_ptr.vmem [resolvable:$true] %s2685
          %s2687 = sshll.u32 %s2683, 4
          %s2688 = int_to_ptr.hbm [resolvable:$true] %s2687
          %2690 = dma.vmem_to_hbm [thread:$0]  %s2686, 128, %s2688, %s2663
        $region148: #{tpu_custom_call.1} parent=87 // pred_fallthru
          _
        // Predicated region
        $region149: #{tpu_custom_call.1} parent=87 // pred_check
          %p2691 = pneg %p503
        $region150: #{tpu_custom_call.1} parent=87 // pred_check_branch
          %2693 = sbr.rel (%p2691) target = $region152
        $region151: #{tpu_custom_call.1} parent=87 // pred_region
          %2695 = vsyncadd %s2668, 0
          %s2696 = smul.addr %s54, 8
          %s2697 = scalar_lea.hbm %s18, %s2696
          %s2699 = sshll.u32 %s2671, 4
          %s2700 = int_to_ptr.vmem [resolvable:$true] %s2699
          %s2701 = sshll.u32 %s2697, 4
          %s2702 = int_to_ptr.hbm [resolvable:$true] %s2701
          %2704 = dma.vmem_to_hbm [thread:$0]  %s2700, 128, %s2702, %s2668
        $region152: #{tpu_custom_call.1} parent=87 // pred_fallthru
          _
        // Predicated region
        $region153: #{tpu_custom_call.1} parent=87 // pred_check
          %p2705 = pneg %p531
        $region154: #{tpu_custom_call.1} parent=87 // pred_check_branch
          %2707 = sbr.rel (%p2705) target = $region156
        $region155: #{tpu_custom_call.1} parent=87 // pred_region
          %2709 = vsyncadd %s2673, 0
          %s2710 = smul.addr %s54, 2
          %s2711 = sadd.s32 %s55, %s2710
          %s2712 = smul.addr %s2711, 8
          %s2713 = scalar_lea.hbm %s19, %s2712
          %s2715 = sshll.u32 %s2676, 4
          %s2716 = int_to_ptr.vmem [resolvable:$true] %s2715
          %s2717 = sshll.u32 %s2713, 4
          %s2718 = int_to_ptr.hbm [resolvable:$true] %s2717
          %2720 = dma.vmem_to_hbm [thread:$0]  %s2716, 128, %s2718, %s2673
        $region156: #{tpu_custom_call.1} parent=87 // pred_fallthru
          _
      $region88: #{tpu_custom_call.1} parent=5 // pred_fallthru
        _
      %p2721 = scmp.le.s32.totalorder 2, %s45
      // Predicated region
      $region157: #{tpu_custom_call.1} parent=5 // pred_check
        %p2722 = pneg %p2721
      $region158: #{tpu_custom_call.1} parent=5 // pred_check_branch
        %2724 = sbr.rel (%p2722) target = $region160
      $region159: #{tpu_custom_call.1} parent=5 // pred_region
        %s2725 = ssub.s32 %s45, 2
        // Predicated region
        $region161: #{tpu_custom_call.1} parent=159 // pred_check
          %p2726 = pneg %p483
        $region162: #{tpu_custom_call.1} parent=159 // pred_check_branch
          %2728 = sbr.rel (%p2726) target = $region164
        $region163: #{tpu_custom_call.1} parent=159 // pred_region
          %s2729 = sand.u32 %s468, 1
          %s2730 = scalar_lea.sflag [#allocation5], %s2729
          %s2731 = sand.u32 %s468, 1
          %s2732 = smul.addr %s2731, 8
          %s2733 = scalar_lea.vmem [#allocation24], %s2732
          %2735 = dma.done %s2730, 128
        $region164: #{tpu_custom_call.1} parent=159 // pred_fallthru
          _
        // Predicated region
        $region165: #{tpu_custom_call.1} parent=159 // pred_check
          %p2736 = pneg %p509
        $region166: #{tpu_custom_call.1} parent=159 // pred_check_branch
          %2738 = sbr.rel (%p2736) target = $region168
        $region167: #{tpu_custom_call.1} parent=159 // pred_region
          %s2739 = sand.u32 %s51, 1
          %s2740 = scalar_lea.sflag [#allocation26], %s2739
          %s2741 = sand.u32 %s494, 1
          %s2742 = smul.addr %s2741, 8
          %s2743 = scalar_lea.vmem [#allocation25], %s2742
          %2745 = dma.done %s2740, 128
        $region168: #{tpu_custom_call.1} parent=159 // pred_fallthru
          _
        // Predicated region
        $region169: #{tpu_custom_call.1} parent=159 // pred_check
          %p2746 = pneg %p537
        $region170: #{tpu_custom_call.1} parent=159 // pred_check_branch
          %2748 = sbr.rel (%p2746) target = $region172
        $region171: #{tpu_custom_call.1} parent=159 // pred_region
          %s2749 = sand.u32 %s51, 1
          %s2750 = scalar_lea.sflag [#allocation26], %s2749
          %s2751 = sand.u32 %s522, 1
          %s2752 = smul.addr %s2751, 8
          %s2753 = scalar_lea.vmem [#allocation27], %s2752
          %2755 = dma.done %s2750, 128
        $region172: #{tpu_custom_call.1} parent=159 // pred_fallthru
          _
      $region160: #{tpu_custom_call.1} parent=5 // pred_fallthru
        _
    $region6: #{tpu_custom_call.1} parent=1 // loop_footer
      %s49 = sadd.s32 1, %s45
    $region7: #{tpu_custom_call.1} parent=1 // loop_footer_branch
      %44 = sbr.rel target = $region3
    $region8: #{tpu_custom_call.1} parent=1 // loop_exit
      _
    %2756 = vsyncpa [#allocation4], 1
    %s2757 = scalar_lea.sflag [#allocation4], 1
    %2758 = vsyncpa %s2757, 1
    %2759 = vsyncpa [#allocation7], 1
    %s2760 = scalar_lea.sflag [#allocation7], 1
    %2761 = vsyncpa %s2760, 1
    %2762 = vsyncpa [#allocation10], 1
    %s2763 = scalar_lea.sflag [#allocation10], 1
    %2764 = vsyncpa %s2763, 1
    %2765 = vsyncpa [#allocation13], 1
    %2766 = vsyncpa [#allocation16], 1
    %2767 = vsyncpa [#allocation19], 1
    %2768 = vsyncpa [#allocation22], 1
    %2769 = vsyncpa [#allocation5], 1
    %s2770 = scalar_lea.sflag [#allocation5], 1
    %2771 = vsyncpa %s2770, 1
    %2772 = vsyncpa [#allocation26], 1
    %s2773 = scalar_lea.sflag [#allocation26], 1
    %2774 = vsyncpa %s2773, 1

// kernel: tpu_custom_call.1
$region0: #{tpu_custom_call.1}
  #allocation0 [shape = 'u32[]', space=smem, size = 0x4, offset = 0x4, fixed_abs, tag = 'smem constant byte address 0x4 - core index']
  #allocation1 [shape = 'u32[72,128]{1,0:T(1,128)}', space=vmem, size = 0x9000, scoped, tag = 'internal scratch']
  #allocation2 [shape = 'f32[8,128]{1,0:T(8,128)}', space=vmem, size = 0x1000, scoped, tag = 'scratch operand']
  %s0 = inlined_call_operand.vmem [shape: f32[16,128], index: 0, kind: input, shape index: {}]
  %s1 = inlined_call_operand.vmem [shape: s32[16,1], index: 1, kind: input, shape index: {}]
  %s2 = inlined_call_operand.hbm [shape: bf16[16,16,128], index: 2, kind: input, shape index: {}]
  %s3 = inlined_call_operand.hbm [shape: bf16[16,16,128], index: 3, kind: input, shape index: {}]
  %s4 = inlined_call_operand.hbm [shape: f32[16,128], index: 4, kind: input, shape index: {}]
  %s5 = inlined_call_operand.hbm [shape: f32[16,128], index: 5, kind: input, shape index: {}]
  %s6 = inlined_call_operand.hbm [shape: bf16[128,128], index: 6, kind: input, shape index: {}]
  %s7 = inlined_call_operand.hbm [shape: f32[2,128], index: 7, kind: input, shape index: {}]
  %s8 = inlined_call_operand.hbm [shape: bf16[128,128], index: 8, kind: input, shape index: {}]
  %s9 = inlined_call_operand.hbm [shape: bf16[128,128], index: 9, kind: input, shape index: {}]
  %s10 = inlined_call_operand.hbm [shape: bf16[128,384], index: 10, kind: input, shape index: {}]
  %s11 = inlined_call_operand.hbm [shape: bf16[128,384], index: 11, kind: input, shape index: {}]
  %s12 = inlined_call_operand.hbm [shape: bf16[128,384], index: 12, kind: input, shape index: {}]
  %s13 = inlined_call_operand.hbm [shape: bf16[128,384], index: 13, kind: input, shape index: {}]
  %s14 = inlined_call_operand.vmem [shape: f32[2,384], index: 14, kind: input, shape index: {}]
  %s15 = inlined_call_operand.hbm [shape: bf16[128,256], index: 15, kind: input, shape index: {}]
  %s16 = inlined_call_operand.vmem [shape: f32[1,256], index: 16, kind: input, shape index: {}]
  %s17 = inlined_call_operand.hbm [shape: f32[16,128], index: 17, kind: output, shape index: {0}]
  %s18 = inlined_call_operand.hbm [shape: f32[16,16], index: 18, kind: output, shape index: {1}]
  %s19 = inlined_call_operand.hbm [shape: f32[16,256], index: 19, kind: output, shape index: {2}]
  %20 = xla_tuple %s17, %s18, %s19
  %s21 = sld [smem:[#allocation0]]
  $region173: #{tpu_custom_call.1} parent=0
    _
  %s23 = ssub.s32 1, %s21
  %s24 = scalar_select 0, %s23, %s21
  $region1: #{tpu_custom_call.1} parent=0
    #allocation3 [shape = 'u8[65536]{0}', space=vmem, size = 0x10000, scoped, tag = 'input window, operand 2']
    #allocation4 [shape = 's32[2]{0}', space=sflag, size = 0x8, scoped, tag = 'scoped memory for tpu_custom_call.1']
    #allocation5 [shape = 's32[2]{0}', space=sflag, size = 0x8, scoped, tag = 'scoped memory for tpu_custom_call.1']
    #allocation6 [shape = 'u8[65536]{0}', space=vmem, size = 0x10000, scoped, tag = 'input window, operand 3']
    #allocation7 [shape = 's32[2]{0}', space=sflag, size = 0x8, scoped, tag = 'scoped memory for tpu_custom_call.1']
    #allocation8 [shape = 'u8[8192]{0}', space=vmem, size = 0x2000, scoped, tag = 'input window, operand 4']
    #allocation9 [shape = 'u8[8192]{0}', space=vmem, size = 0x2000, scoped, tag = 'input window, operand 5']
    #allocation10 [shape = 's32[2]{0}', space=sflag, size = 0x8, scoped, tag = 'scoped memory for tpu_custom_call.1']
    #allocation11 [shape = 'u8[32768]{0}', space=vmem, size = 0x8000, scoped, tag = 'input window, operand 6, single buffered']
    #allocation12 [shape = 'u8[1024]{0}', space=vmem, size = 0x400, scoped, tag = 'input window, operand 7, single buffered']
    #allocation13 [shape = 's32[1]{0}', space=sflag, size = 0x4, scoped, tag = 'scoped memory for tpu_custom_call.1']
    #allocation14 [shape = 'u8[32768]{0}', space=vmem, size = 0x8000, scoped, tag = 'input window, operand 8, single buffered']
    #allocation15 [shape = 'u8[32768]{0}', space=vmem, size = 0x8000, scoped, tag = 'input window, operand 9, single buffered']
    #allocation16 [shape = 's32[1]{0}', space=sflag, size = 0x4, scoped, tag = 'scoped memory for tpu_custom_call.1']
    #allocation17 [shape = 'u8[98304]{0}', space=vmem, size = 0x18000, scoped, tag = 'input window, operand 10, single buffered']
    #allocation18 [shape = 'u8[98304]{0}', space=vmem, size = 0x18000, scoped, tag = 'input window, operand 11, single buffered']
    #allocation19 [shape = 's32[1]{0}', space=sflag, size = 0x4, scoped, tag = 'scoped memory for tpu_custom_call.1']
    #allocation20 [shape = 'u8[98304]{0}', space=vmem, size = 0x18000, scoped, tag = 'input window, operand 12, single buffered']
    #allocation21 [shape = 'u8[98304]{0}', space=vmem, size = 0x18000, scoped, tag = 'input window, operand 13, single buffered']
    #allocation22 [shape = 's32[1]{0}', space=sflag, size = 0x4, scoped, tag = 'scoped memory for tpu_custom_call.1']
    #allocation23 [shape = 'u8[65536]{0}', space=vmem, size = 0x10000, scoped, tag = 'input window, operand 15']
    #allocation24 [shape = 'u8[8192]{0}', space=vmem, size = 0x2000, scoped, tag = 'output window, operand 0']
    #allocation25 [shape = 'u8[8192]{0}', space=vmem, size = 0x2000, scoped, tag = 'output window, operand 1']
    #allocation26 [shape = 's32[2]{0}', space=sflag, size = 0x8, scoped, tag = 'scoped memory for tpu_custom_call.1']
    #allocation27 [shape = 'u8[8192]{0}', space=vmem, size = 0x2000, scoped, tag = 'output window, operand 2']
    %25 = vsyncpa [#allocation4], 0
    %s26 = scalar_lea.sflag [#allocation4], 1
    %27 = vsyncpa %s26, 0
    %28 = vsyncpa [#allocation7], 0
    %s29 = scalar_lea.sflag [#allocation7], 1
    %30 = vsyncpa %s29, 0
    %31 = vsyncpa [#allocation10], 0
    %s32 = scalar_lea.sflag [#allocation10], 1
    %33 = vsyncpa %s32, 0
    %34 = vsyncpa [#allocation13], 0
    %35 = vsyncpa [#allocation16], 0
    %36 = vsyncpa [#allocation19], 0
    %37 = vsyncpa [#allocation22], 0
    %38 = vsyncpa [#allocation5], 0
    %s39 = scalar_lea.sflag [#allocation5], 1
    %40 = vsyncpa %s39, 0
    %41 = vsyncpa [#allocation26], 0
    %s42 = scalar_lea.sflag [#allocation26], 1
    %43 = vsyncpa %s42, 0
    loop: start=0, step=1, limit=6
    $region2: #{tpu_custom_call.1} parent=1 // loop_pre_header
      _
    $region3: #{tpu_custom_call.1} parent=1 // loop_header
      %s45 = sphi 0, %s49
      %p46 = scmp.ge.s32.totalorder %s45, 6
      %s52 = sphi 0, %s64
      %s53 = sphi 0, %s60
      %s54 = sphi 0, %s52
      %s55 = sphi 0, %s53
      %s56 = sphi 0, %s54
      %s57 = sphi 0, %s55
      %s67 = sphi 0, %s69
      %s70 = sphi 0, %s67
      %s71 = sphi 0, %s70
      %s87 = sphi 0, %s71
      %s93 = sphi 0, %s95
      %s96 = sphi 0, %s93
      %s97 = sphi 0, %s96
      %s113 = sphi 0, %s97
      %s119 = sphi 0, %s121
      %s122 = sphi 0, %s119
      %s123 = sphi 0, %s122
      %s139 = sphi 0, %s123
      %s145 = sphi 0, %s147
      %s148 = sphi 0, %s145
      %s149 = sphi 0, %s148
      %s165 = sphi 0, %s149
      %s171 = sphi 0, %s173
      %s174 = sphi 0, %s171
      %s175 = sphi 0, %s174
      %s191 = sphi 0, %s175
      %s197 = sphi 0, %s199
      %s200 = sphi 0, %s197
      %s201 = sphi 0, %s200
      %s217 = sphi 0, %s201
      %s221 = sphi 0, %s221
      %s223 = sphi 0, %s221
      %s224 = sphi 0, %s223
      %s238 = sphi 0, %s224
      %s242 = sphi 0, %s242
      %s244 = sphi 0, %s242
      %s245 = sphi 0, %s244
      %s259 = sphi 0, %s245
      %s263 = sphi 0, %s263
      %s265 = sphi 0, %s263
      %s266 = sphi 0, %s265
      %s280 = sphi 0, %s266
      %s284 = sphi 0, %s284
      %s286 = sphi 0, %s284
      %s287 = sphi 0, %s286
      %s301 = sphi 0, %s287
      %s305 = sphi 0, %s305
      %s307 = sphi 0, %s305
      %s308 = sphi 0, %s307
      %s322 = sphi 0, %s308
      %s326 = sphi 0, %s326
      %s328 = sphi 0, %s326
      %s329 = sphi 0, %s328
      %s343 = sphi 0, %s329
      %s347 = sphi 0, %s347
      %s349 = sphi 0, %s347
      %s350 = sphi 0, %s349
      %s364 = sphi 0, %s350
      %s368 = sphi 0, %s368
      %s370 = sphi 0, %s368
      %s371 = sphi 0, %s370
      %s385 = sphi 0, %s371
      %s389 = sphi 0, %s389
      %s391 = sphi 0, %s389
      %s392 = sphi 0, %s391
      %s406 = sphi 0, %s392
      %s412 = sphi 0, %s414
      %s415 = sphi 0, %s412
      %s416 = sphi 0, %s415
      %s432 = sphi 0, %s416
      %s438 = sphi 0, %s440
      %s441 = sphi 0, %s438
      %s442 = sphi 0, %s441
      %s458 = sphi 0, %s442
      %s464 = sphi 0, %s466
      %s467 = sphi 0, %s464
      %s468 = sphi 0, %s467
      %s484 = sphi 0, %s468
      %s490 = sphi 0, %s492
      %s493 = sphi 0, %s490
      %s494 = sphi 0, %s493
      %s510 = sphi 0, %s494
      %s518 = sphi 0, %s520
      %s521 = sphi 0, %s518
      %s522 = sphi 0, %s521
      %s538 = sphi 0, %s522
    $region4: #{tpu_custom_call.1} parent=1 // loop_header_branch
      %48 = sbr.rel (%p46) target = $region8
    $region5: #{tpu_custom_call.1} parent=1 // loop_body
      %s50 = ssub.s32 %s45, 1
      %s51 = ssub.s32 %s45, 2
      %s58 = sadd.s32 1, %s53
      %p59 = scmp.ge.s32.totalorder %s58, 2
      %s60 = scalar_select %p59, 0, %s58
      %s61 = sadd.s32 1, %s52
      %s62 = scalar_select %p59, %s61, %s52
      %p63 = scmp.ge.s32.totalorder %s62, 2
      %s64 = scalar_select %p63, 0, %s62
      %s65 = ssub.s32 %s52, %s64
      %p66 = scmp.eq.s32.totalorder %s65, 0
      %s68 = sadd.s32 %s67, 1
      %s69 = scalar_select %p66, %s67, %s68
      %p72 = pneg %p66
      %p73 = scmp.eq.s32.totalorder %s45, 3
      %p74 = por %p72, %p73
      %p75 = scmp.ne.s32.totalorder %s67, %s70
      %p76 = scmp.eq.s32.totalorder %s45, 0
      %p77 = por %p75, %p76
      %p78 = scmp.ne.s32.totalorder %s67, %s70
      %p79 = scmp.eq.s32.totalorder %s50, 3
      %p80 = por %p78, %p79
      %p81 = scmp.ne.s32.totalorder %s70, %s71
      %p82 = scmp.eq.s32.totalorder %s50, 0
      %p83 = por %p81, %p82
      %p84 = scmp.ne.s32.totalorder %s70, %s71
      %p85 = scmp.eq.s32.totalorder %s51, 3
      %p86 = por %p84, %p85
      %p88 = scmp.ne.s32.totalorder %s71, %s87
      %p89 = scmp.eq.s32.totalorder %s51, 0
      %p90 = por %p88, %p89
      %s91 = ssub.s32 %s52, %s64
      %p92 = scmp.eq.s32.totalorder %s91, 0
      %s94 = sadd.s32 %s93, 1
      %s95 = scalar_select %p92, %s93, %s94
      %p98 = pneg %p92
      %p99 = scmp.eq.s32.totalorder %s45, 3
      %p100 = por %p98, %p99
      %p101 = scmp.ne.s32.totalorder %s93, %s96
      %p102 = scmp.eq.s32.totalorder %s45, 0
      %p103 = por %p101, %p102
      %p104 = scmp.ne.s32.totalorder %s93, %s96
      %p105 = scmp.eq.s32.totalorder %s50, 3
      %p106 = por %p104, %p105
      %p107 = scmp.ne.s32.totalorder %s96, %s97
      %p108 = scmp.eq.s32.totalorder %s50, 0
      %p109 = por %p107, %p108
      %p110 = scmp.ne.s32.totalorder %s96, %s97
      %p111 = scmp.eq.s32.totalorder %s51, 3
      %p112 = por %p110, %p111
      %p114 = scmp.ne.s32.totalorder %s97, %s113
      %p115 = scmp.eq.s32.totalorder %s51, 0
      %p116 = por %p114, %p115
      %s117 = ssub.s32 %s52, %s64
      %p118 = scmp.eq.s32.totalorder %s117, 0
      %s120 = sadd.s32 %s119, 1
      %s121 = scalar_select %p118, %s119, %s120
      %p124 = pneg %p118
      %p125 = scmp.eq.s32.totalorder %s45, 3
      %p126 = por %p124, %p125
      %p127 = scmp.ne.s32.totalorder %s119, %s122
      %p128 = scmp.eq.s32.totalorder %s45, 0
      %p129 = por %p127, %p128
      %p130 = scmp.ne.s32.totalorder %s119, %s122
      %p131 = scmp.eq.s32.totalorder %s50, 3
      %p132 = por %p130, %p131
      %p133 = scmp.ne.s32.totalorder %s122, %s123
      %p134 = scmp.eq.s32.totalorder %s50, 0
      %p135 = por %p133, %p134
      %p136 = scmp.ne.s32.totalorder %s122, %s123
      %p137 = scmp.eq.s32.totalorder %s51, 3
      %p138 = por %p136, %p137
      %p140 = scmp.ne.s32.totalorder %s123, %s139
      %p141 = scmp.eq.s32.totalorder %s51, 0
      %p142 = por %p140, %p141
      %s143 = ssub.s32 %s52, %s64
      %p144 = scmp.eq.s32.totalorder %s143, 0
      %s146 = sadd.s32 %s145, 1
      %s147 = scalar_select %p144, %s145, %s146
      %p150 = pneg %p144
      %p151 = scmp.eq.s32.totalorder %s45, 3
      %p152 = por %p150, %p151
      %p153 = scmp.ne.s32.totalorder %s145, %s148
      %p154 = scmp.eq.s32.totalorder %s45, 0
      %p155 = por %p153, %p154
      %p156 = scmp.ne.s32.totalorder %s145, %s148
      %p157 = scmp.eq.s32.totalorder %s50, 3
      %p158 = por %p156, %p157
      %p159 = scmp.ne.s32.totalorder %s148, %s149
      %p160 = scmp.eq.s32.totalorder %s50, 0
      %p161 = por %p159, %p160
      %p162 = scmp.ne.s32.totalorder %s148, %s149
      %p163 = scmp.eq.s32.totalorder %s51, 3
      %p164 = por %p162, %p163
      %p166 = scmp.ne.s32.totalorder %s149, %s165
      %p167 = scmp.eq.s32.totalorder %s51, 0
      %p168 = por %p166, %p167
      %s169 = ssub.s32 %s52, %s64
      %p170 = scmp.eq.s32.totalorder %s169, 0
      %s172 = sadd.s32 %s171, 1
      %s173 = scalar_select %p170, %s171, %s172
      %p176 = pneg %p170
      %p177 = scmp.eq.s32.totalorder %s45, 3
      %p178 = por %p176, %p177
      %p179 = scmp.ne.s32.totalorder %s171, %s174
      %p180 = scmp.eq.s32.totalorder %s45, 0
      %p181 = por %p179, %p180
      %p182 = scmp.ne.s32.totalorder %s171, %s174
      %p183 = scmp.eq.s32.totalorder %s50, 3
      %p184 = por %p182, %p183
      %p185 = scmp.ne.s32.totalorder %s174, %s175
      %p186 = scmp.eq.s32.totalorder %s50, 0
      %p187 = por %p185, %p186
      %p188 = scmp.ne.s32.totalorder %s174, %s175
      %p189 = scmp.eq.s32.totalorder %s51, 3
      %p190 = por %p188, %p189
      %p192 = scmp.ne.s32.totalorder %s175, %s191
      %p193 = scmp.eq.s32.totalorder %s51, 0
      %p194 = por %p192, %p193
      %s195 = ssub.s32 %s52, %s64
      %p196 = scmp.eq.s32.totalorder %s195, 0
      %s198 = sadd.s32 %s197, 1
      %s199 = scalar_select %p196, %s197, %s198
      %p202 = pneg %p196
      %p203 = scmp.eq.s32.totalorder %s45, 3
      %p204 = por %p202, %p203
      %p205 = scmp.ne.s32.totalorder %s197, %s200
      %p206 = scmp.eq.s32.totalorder %s45, 0
      %p207 = por %p205, %p206
      %p208 = scmp.ne.s32.totalorder %s197, %s200
      %p209 = scmp.eq.s32.totalorder %s50, 3
      %p210 = por %p208, %p209
      %p211 = scmp.ne.s32.totalorder %s200, %s201
      %p212 = scmp.eq.s32.totalorder %s50, 0
      %p213 = por %p211, %p212
      %p214 = scmp.ne.s32.totalorder %s200, %s201
      %p215 = scmp.eq.s32.totalorder %s51, 3
      %p216 = por %p214, %p215
      %p218 = scmp.ne.s32.totalorder %s201, %s217
      %p219 = scmp.eq.s32.totalorder %s51, 0
      %p220 = por %p218, %p219
      %s222 = sadd.s32 %s221, 1
      %p225 = scmp.eq.s32.totalorder %s45, 3
      %p226 = scmp.ne.s32.totalorder %s221, %s223
      %p227 = scmp.eq.s32.totalorder %s45, 0
      %p228 = por %p226, %p227
      %p229 = scmp.ne.s32.totalorder %s221, %s223
      %p230 = scmp.eq.s32.totalorder %s50, 3
      %p231 = por %p229, %p230
      %p232 = scmp.ne.s32.totalorder %s223, %s224
      %p233 = scmp.eq.s32.totalorder %s50, 0
      %p234 = por %p232, %p233
      %p235 = scmp.ne.s32.totalorder %s223, %s224
      %p236 = scmp.eq.s32.totalorder %s51, 3
      %p237 = por %p235, %p236
      %p239 = scmp.ne.s32.totalorder %s224, %s238
      %p240 = scmp.eq.s32.totalorder %s51, 0
      %p241 = por %p239, %p240
      %s243 = sadd.s32 %s242, 1
      %p246 = scmp.eq.s32.totalorder %s45, 3
      %p247 = scmp.ne.s32.totalorder %s242, %s244
      %p248 = scmp.eq.s32.totalorder %s45, 0
      %p249 = por %p247, %p248
      %p250 = scmp.ne.s32.totalorder %s242, %s244
      %p251 = scmp.eq.s32.totalorder %s50, 3
      %p252 = por %p250, %p251
      %p253 = scmp.ne.s32.totalorder %s244, %s245
      %p254 = scmp.eq.s32.totalorder %s50, 0
      %p255 = por %p253, %p254
      %p256 = scmp.ne.s32.totalorder %s244, %s245
      %p257 = scmp.eq.s32.totalorder %s51, 3
      %p258 = por %p256, %p257
      %p260 = scmp.ne.s32.totalorder %s245, %s259
      %p261 = scmp.eq.s32.totalorder %s51, 0
      %p262 = por %p260, %p261
      %s264 = sadd.s32 %s263, 1
      %p267 = scmp.eq.s32.totalorder %s45, 3
      %p268 = scmp.ne.s32.totalorder %s263, %s265
      %p269 = scmp.eq.s32.totalorder %s45, 0
      %p270 = por %p268, %p269
      %p271 = scmp.ne.s32.totalorder %s263, %s265
      %p272 = scmp.eq.s32.totalorder %s50, 3
      %p273 = por %p271, %p272
      %p274 = scmp.ne.s32.totalorder %s265, %s266
      %p275 = scmp.eq.s32.totalorder %s50, 0
      %p276 = por %p274, %p275
      %p277 = scmp.ne.s32.totalorder %s265, %s266
      %p278 = scmp.eq.s32.totalorder %s51, 3
      %p279 = por %p277, %p278
      %p281 = scmp.ne.s32.totalorder %s266, %s280
      %p282 = scmp.eq.s32.totalorder %s51, 0
      %p283 = por %p281, %p282
      %s285 = sadd.s32 %s284, 1
      %p288 = scmp.eq.s32.totalorder %s45, 3
      %p289 = scmp.ne.s32.totalorder %s284, %s286
      %p290 = scmp.eq.s32.totalorder %s45, 0
      %p291 = por %p289, %p290
      %p292 = scmp.ne.s32.totalorder %s284, %s286
      %p293 = scmp.eq.s32.totalorder %s50, 3
      %p294 = por %p292, %p293
      %p295 = scmp.ne.s32.totalorder %s286, %s287
      %p296 = scmp.eq.s32.totalorder %s50, 0
      %p297 = por %p295, %p296
      %p298 = scmp.ne.s32.totalorder %s286, %s287
      %p299 = scmp.eq.s32.totalorder %s51, 3
      %p300 = por %p298, %p299
      %p302 = scmp.ne.s32.totalorder %s287, %s301
      %p303 = scmp.eq.s32.totalorder %s51, 0
      %p304 = por %p302, %p303
      %s306 = sadd.s32 %s305, 1
      %p309 = scmp.eq.s32.totalorder %s45, 3
      %p310 = scmp.ne.s32.totalorder %s305, %s307
      %p311 = scmp.eq.s32.totalorder %s45, 0
      %p312 = por %p310, %p311
      %p313 = scmp.ne.s32.totalorder %s305, %s307
      %p314 = scmp.eq.s32.totalorder %s50, 3
      %p315 = por %p313, %p314
      %p316 = scmp.ne.s32.totalorder %s307, %s308
      %p317 = scmp.eq.s32.totalorder %s50, 0
      %p318 = por %p316, %p317
      %p319 = scmp.ne.s32.totalorder %s307, %s308
      %p320 = scmp.eq.s32.totalorder %s51, 3
      %p321 = por %p319, %p320
      %p323 = scmp.ne.s32.totalorder %s308, %s322
      %p324 = scmp.eq.s32.totalorder %s51, 0
      %p325 = por %p323, %p324
      %s327 = sadd.s32 %s326, 1
      %p330 = scmp.eq.s32.totalorder %s45, 3
      %p331 = scmp.ne.s32.totalorder %s326, %s328
      %p332 = scmp.eq.s32.totalorder %s45, 0
      %p333 = por %p331, %p332
      %p334 = scmp.ne.s32.totalorder %s326, %s328
      %p335 = scmp.eq.s32.totalorder %s50, 3
      %p336 = por %p334, %p335
      %p337 = scmp.ne.s32.totalorder %s328, %s329
      %p338 = scmp.eq.s32.totalorder %s50, 0
      %p339 = por %p337, %p338
      %p340 = scmp.ne.s32.totalorder %s328, %s329
      %p341 = scmp.eq.s32.totalorder %s51, 3
      %p342 = por %p340, %p341
      %p344 = scmp.ne.s32.totalorder %s329, %s343
      %p345 = scmp.eq.s32.totalorder %s51, 0
      %p346 = por %p344, %p345
      %s348 = sadd.s32 %s347, 1
      %p351 = scmp.eq.s32.totalorder %s45, 3
      %p352 = scmp.ne.s32.totalorder %s347, %s349
      %p353 = scmp.eq.s32.totalorder %s45, 0
      %p354 = por %p352, %p353
      %p355 = scmp.ne.s32.totalorder %s347, %s349
      %p356 = scmp.eq.s32.totalorder %s50, 3
      %p357 = por %p355, %p356
      %p358 = scmp.ne.s32.totalorder %s349, %s350
      %p359 = scmp.eq.s32.totalorder %s50, 0
      %p360 = por %p358, %p359
      %p361 = scmp.ne.s32.totalorder %s349, %s350
      %p362 = scmp.eq.s32.totalorder %s51, 3
      %p363 = por %p361, %p362
      %p365 = scmp.ne.s32.totalorder %s350, %s364
      %p366 = scmp.eq.s32.totalorder %s51, 0
      %p367 = por %p365, %p366
      %s369 = sadd.s32 %s368, 1
      %p372 = scmp.eq.s32.totalorder %s45, 3
      %p373 = scmp.ne.s32.totalorder %s368, %s370
      %p374 = scmp.eq.s32.totalorder %s45, 0
      %p375 = por %p373, %p374
      %p376 = scmp.ne.s32.totalorder %s368, %s370
      %p377 = scmp.eq.s32.totalorder %s50, 3
      %p378 = por %p376, %p377
      %p379 = scmp.ne.s32.totalorder %s370, %s371
      %p380 = scmp.eq.s32.totalorder %s50, 0
      %p381 = por %p379, %p380
      %p382 = scmp.ne.s32.totalorder %s370, %s371
      %p383 = scmp.eq.s32.totalorder %s51, 3
      %p384 = por %p382, %p383
      %p386 = scmp.ne.s32.totalorder %s371, %s385
      %p387 = scmp.eq.s32.totalorder %s51, 0
      %p388 = por %p386, %p387
      %s390 = sadd.s32 %s389, 1
      %p393 = scmp.eq.s32.totalorder %s45, 3
      %p394 = scmp.ne.s32.totalorder %s389, %s391
      %p395 = scmp.eq.s32.totalorder %s45, 0
      %p396 = por %p394, %p395
      %p397 = scmp.ne.s32.totalorder %s389, %s391
      %p398 = scmp.eq.s32.totalorder %s50, 3
      %p399 = por %p397, %p398
      %p400 = scmp.ne.s32.totalorder %s391, %s392
      %p401 = scmp.eq.s32.totalorder %s50, 0
      %p402 = por %p400, %p401
      %p403 = scmp.ne.s32.totalorder %s391, %s392
      %p404 = scmp.eq.s32.totalorder %s51, 3
      %p405 = por %p403, %p404
      %p407 = scmp.ne.s32.totalorder %s392, %s406
      %p408 = scmp.eq.s32.totalorder %s51, 0
      %p409 = por %p407, %p408
      %s410 = ssub.s32 %s53, %s60
      %p411 = scmp.eq.s32.totalorder %s410, 0
      %s413 = sadd.s32 %s412, 1
      %s414 = scalar_select %p411, %s412, %s413
      %p417 = pneg %p411
      %p418 = scmp.eq.s32.totalorder %s45, 3
      %p419 = por %p417, %p418
      %p420 = scmp.ne.s32.totalorder %s412, %s415
      %p421 = scmp.eq.s32.totalorder %s45, 0
      %p422 = por %p420, %p421
      %p423 = scmp.ne.s32.totalorder %s412, %s415
      %p424 = scmp.eq.s32.totalorder %s50, 3
      %p425 = por %p423, %p424
      %p426 = scmp.ne.s32.totalorder %s415, %s416
      %p427 = scmp.eq.s32.totalorder %s50, 0
      %p428 = por %p426, %p427
      %p429 = scmp.ne.s32.totalorder %s415, %s416
      %p430 = scmp.eq.s32.totalorder %s51, 3
      %p431 = por %p429, %p430
      %p433 = scmp.ne.s32.totalorder %s416, %s432
      %p434 = scmp.eq.s32.totalorder %s51, 0
      %p435 = por %p433, %p434
      %s436 = ssub.s32 %s53, %s60
      %p437 = scmp.eq.s32.totalorder %s436, 0
      %s439 = sadd.s32 %s438, 1
      %s440 = scalar_select %p437, %s438, %s439
      %p443 = pneg %p437
      %p444 = scmp.eq.s32.totalorder %s45, 3
      %p445 = por %p443, %p444
      %p446 = scmp.ne.s32.totalorder %s438, %s441
      %p447 = scmp.eq.s32.totalorder %s45, 0
      %p448 = por %p446, %p447
      %p449 = scmp.ne.s32.totalorder %s438, %s441
      %p450 = scmp.eq.s32.totalorder %s50, 3
      %p451 = por %p449, %p450
      %p452 = scmp.ne.s32.totalorder %s441, %s442
      %p453 = scmp.eq.s32.totalorder %s50, 0
      %p454 = por %p452, %p453
      %p455 = scmp.ne.s32.totalorder %s441, %s442
      %p456 = scmp.eq.s32.totalorder %s51, 3
      %p457 = por %p455, %p456
      %p459 = scmp.ne.s32.totalorder %s442, %s458
      %p460 = scmp.eq.s32.totalorder %s51, 0
      %p461 = por %p459, %p460
      %s462 = ssub.s32 %s52, %s64
      %p463 = scmp.eq.s32.totalorder %s462, 0
      %s465 = sadd.s32 %s464, 1
      %s466 = scalar_select %p463, %s464, %s465
      %p469 = pneg %p463
      %p470 = scmp.eq.s32.totalorder %s45, 3
      %p471 = por %p469, %p470
      %p472 = scmp.ne.s32.totalorder %s464, %s467
      %p473 = scmp.eq.s32.totalorder %s45, 0
      %p474 = por %p472, %p473
      %p475 = scmp.ne.s32.totalorder %s464, %s467
      %p476 = scmp.eq.s32.totalorder %s50, 3
      %p477 = por %p475, %p476
      %p478 = scmp.ne.s32.totalorder %s467, %s468
      %p479 = scmp.eq.s32.totalorder %s50, 0
      %p480 = por %p478, %p479
      %p481 = scmp.ne.s32.totalorder %s467, %s468
      %p482 = scmp.eq.s32.totalorder %s51, 3
      %p483 = por %p481, %p482
      %p485 = scmp.ne.s32.totalorder %s468, %s484
      %p486 = scmp.eq.s32.totalorder %s51, 0
      %p487 = por %p485, %p486
      %s488 = ssub.s32 %s52, %s64
      %p489 = scmp.eq.s32.totalorder %s488, 0
      %s491 = sadd.s32 %s490, 1
      %s492 = scalar_select %p489, %s490, %s491
      %p495 = pneg %p489
      %p496 = scmp.eq.s32.totalorder %s45, 3
      %p497 = por %p495, %p496
      %p498 = scmp.ne.s32.totalorder %s490, %s493
      %p499 = scmp.eq.s32.totalorder %s45, 0
      %p500 = por %p498, %p499
      %p501 = scmp.ne.s32.totalorder %s490, %s493
      %p502 = scmp.eq.s32.totalorder %s50, 3
      %p503 = por %p501, %p502
      %p504 = scmp.ne.s32.totalorder %s493, %s494
      %p505 = scmp.eq.s32.totalorder %s50, 0
      %p506 = por %p504, %p505
      %p507 = scmp.ne.s32.totalorder %s493, %s494
      %p508 = scmp.eq.s32.totalorder %s51, 3
      %p509 = por %p507, %p508
      %p511 = scmp.ne.s32.totalorder %s494, %s510
      %p512 = scmp.eq.s32.totalorder %s51, 0
      %p513 = por %p511, %p512
      %s514 = ssub.s32 %s52, %s64
      %s515 = ssub.s32 %s53, %s60
      %s516 = sor.u32 %s514, %s515
      %p517 = scmp.eq.s32.totalorder %s516, 0
      %s519 = sadd.s32 %s518, 1
      %s520 = scalar_select %p517, %s518, %s519
      %p523 = pneg %p517
      %p524 = scmp.eq.s32.totalorder %s45, 3
      %p525 = por %p523, %p524
      %p526 = scmp.ne.s32.totalorder %s518, %s521
      %p527 = scmp.eq.s32.totalorder %s45, 0
      %p528 = por %p526, %p527
      %p529 = scmp.ne.s32.totalorder %s518, %s521
      %p530 = scmp.eq.s32.totalorder %s50, 3
      %p531 = por %p529, %p530
      %p532 = scmp.ne.s32.totalorder %s521, %s522
      %p533 = scmp.eq.s32.totalorder %s50, 0
      %p534 = por %p532, %p533
      %p535 = scmp.ne.s32.totalorder %s521, %s522
      %p536 = scmp.eq.s32.totalorder %s51, 3
      %p537 = por %p535, %p536
      %p539 = scmp.ne.s32.totalorder %s522, %s538
      %p540 = scmp.eq.s32.totalorder %s51, 0
      %p541 = por %p539, %p540
      %p542 = scmp.le.s32.totalorder 1, %s45
      %p543 = scmp.lt.s32.totalorder %s45, 5
      %p544 = pnand %p542, %p543
      %p545 = pneg %p544
      // Predicated region
      $region9: #{tpu_custom_call.1} parent=5 // pred_check
        _
      $region10: #{tpu_custom_call.1} parent=5 // pred_check_branch
        %547 = sbr.rel (%p544) target = $region12
      $region11: #{tpu_custom_call.1} parent=5 // pred_region
        %s548 = ssub.s32 %s45, 1
        // Predicated region
        $region13: #{tpu_custom_call.1} parent=11 // pred_check
          %p549 = pneg %p234
        $region14: #{tpu_custom_call.1} parent=11 // pred_check_branch
          %551 = sbr.rel (%p549) target = $region16
        $region15: #{tpu_custom_call.1} parent=11 // pred_region
          %553 = vsyncadd [#allocation10], 0
          %s554 = sshll.u32 %s6, 4
          %s555 = int_to_ptr.hbm [resolvable:$true] %s554
          %s556 = sshll.u32 [#allocation11], 4
          %s557 = int_to_ptr.vmem [resolvable:$true] %s556
          %562 = dma.hbm_to_vmem [thread:$0]  %s555, 1024, %s557, [#allocation10], 64, 64, 4
        $region16: #{tpu_custom_call.1} parent=11 // pred_fallthru
          _
        // Predicated region
        $region17: #{tpu_custom_call.1} parent=11 // pred_check
          %p563 = pneg %p255
        $region18: #{tpu_custom_call.1} parent=11 // pred_check_branch
          %565 = sbr.rel (%p563) target = $region20
        $region19: #{tpu_custom_call.1} parent=11 // pred_region
          %567 = vsyncadd [#allocation13], 0
          %s569 = sshll.u32 %s7, 4
          %s570 = int_to_ptr.hbm [resolvable:$true] %s569
          %s571 = sshll.u32 [#allocation12], 4
          %s572 = int_to_ptr.vmem [resolvable:$true] %s571
          %574 = dma.hbm_to_vmem [thread:$0]  %s570, 32, %s572, [#allocation13]
        $region20: #{tpu_custom_call.1} parent=11 // pred_fallthru
          _
        // Predicated region
        $region21: #{tpu_custom_call.1} parent=11 // pred_check
          %p575 = pneg %p276
        $region22: #{tpu_custom_call.1} parent=11 // pred_check_branch
          %577 = sbr.rel (%p575) target = $region24
        $region23: #{tpu_custom_call.1} parent=11 // pred_region
          %579 = vsyncadd [#allocation13], 0
          %s580 = sshll.u32 %s8, 4
          %s581 = int_to_ptr.hbm [resolvable:$true] %s580
          %s582 = sshll.u32 [#allocation14], 4
          %s583 = int_to_ptr.vmem [resolvable:$true] %s582
          %588 = dma.hbm_to_vmem [thread:$0]  %s581, 1024, %s583, [#allocation13], 64, 64, 4
        $region24: #{tpu_custom_call.1} parent=11 // pred_fallthru
          _
        // Predicated region
        $region25: #{tpu_custom_call.1} parent=11 // pred_check
          %p589 = pneg %p297
        $region26: #{tpu_custom_call.1} parent=11 // pred_check_branch
          %591 = sbr.rel (%p589) target = $region28
        $region27: #{tpu_custom_call.1} parent=11 // pred_region
          %593 = vsyncadd [#allocation16], 0
          %s594 = sshll.u32 %s9, 4
          %s595 = int_to_ptr.hbm [resolvable:$true] %s594
          %s596 = sshll.u32 [#allocation15], 4
          %s597 = int_to_ptr.vmem [resolvable:$true] %s596
          %602 = dma.hbm_to_vmem [thread:$0]  %s595, 1024, %s597, [#allocation16], 64, 64, 4
        $region28: #{tpu_custom_call.1} parent=11 // pred_fallthru
          _
        // Predicated region
        $region29: #{tpu_custom_call.1} parent=11 // pred_check
          %p603 = pneg %p318
        $region30: #{tpu_custom_call.1} parent=11 // pred_check_branch
          %605 = sbr.rel (%p603) target = $region32
        $region31: #{tpu_custom_call.1} parent=11 // pred_region
          %607 = vsyncadd [#allocation16], 0
          %s608 = sshll.u32 %s10, 4
          %s609 = int_to_ptr.hbm [resolvable:$true] %s608
          %s610 = sshll.u32 [#allocation17], 4
          %s611 = int_to_ptr.vmem [resolvable:$true] %s610
          %616 = dma.hbm_to_vmem [thread:$0]  %s609, 3072, %s611, [#allocation16], 192, 192, 12
        $region32: #{tpu_custom_call.1} parent=11 // pred_fallthru
          _
        // Predicated region
        $region33: #{tpu_custom_call.1} parent=11 // pred_check
          %p617 = pneg %p339
        $region34: #{tpu_custom_call.1} parent=11 // pred_check_branch
          %619 = sbr.rel (%p617) target = $region36
        $region35: #{tpu_custom_call.1} parent=11 // pred_region
          %621 = vsyncadd [#allocation19], 0
          %s622 = sshll.u32 %s11, 4
          %s623 = int_to_ptr.hbm [resolvable:$true] %s622
          %s624 = sshll.u32 [#allocation18], 4
          %s625 = int_to_ptr.vmem [resolvable:$true] %s624
          %630 = dma.hbm_to_vmem [thread:$0]  %s623, 3072, %s625, [#allocation19], 192, 192, 12
        $region36: #{tpu_custom_call.1} parent=11 // pred_fallthru
          _
        // Predicated region
        $region37: #{tpu_custom_call.1} parent=11 // pred_check
          %p631 = pneg %p360
        $region38: #{tpu_custom_call.1} parent=11 // pred_check_branch
          %633 = sbr.rel (%p631) target = $region40
        $region39: #{tpu_custom_call.1} parent=11 // pred_region
          %635 = vsyncadd [#allocation19], 0
          %s636 = sshll.u32 %s12, 4
          %s637 = int_to_ptr.hbm [resolvable:$true] %s636
          %s638 = sshll.u32 [#allocation20], 4
          %s639 = int_to_ptr.vmem [resolvable:$true] %s638
          %644 = dma.hbm_to_vmem [thread:$0]  %s637, 3072, %s639, [#allocation19], 192, 192, 12
        $region40: #{tpu_custom_call.1} parent=11 // pred_fallthru
          _
        // Predicated region
        $region41: #{tpu_custom_call.1} parent=11 // pred_check
          %p645 = pneg %p381
        $region42: #{tpu_custom_call.1} parent=11 // pred_check_branch
          %647 = sbr.rel (%p645) target = $region44
        $region43: #{tpu_custom_call.1} parent=11 // pred_region
          %649 = vsyncadd [#allocation22], 0
          %s650 = sshll.u32 %s13, 4
          %s651 = int_to_ptr.hbm [resolvable:$true] %s650
          %s652 = sshll.u32 [#allocation21], 4
          %s653 = int_to_ptr.vmem [resolvable:$true] %s652
          %658 = dma.hbm_to_vmem [thread:$0]  %s651, 3072, %s653, [#allocation22], 192, 192, 12
        $region44: #{tpu_custom_call.1} parent=11 // pred_fallthru
          _
        // Predicated region
        $region45: #{tpu_custom_call.1} parent=11 // pred_check
          %p659 = pneg %p402
        $region46: #{tpu_custom_call.1} parent=11 // pred_check_branch
          %661 = sbr.rel (%p659) target = $region48
        $region47: #{tpu_custom_call.1} parent=11 // pred_region
          _
        $region48: #{tpu_custom_call.1} parent=11 // pred_fallthru
          _
      $region12: #{tpu_custom_call.1} parent=5 // pred_fallthru
        _
      %p662 = scmp.lt.s32.totalorder %s45, 4
      // Predicated region
      $region49: #{tpu_custom_call.1} parent=5 // pred_check
        %p663 = pneg %p662
      $region50: #{tpu_custom_call.1} parent=5 // pred_check_branch
        %665 = sbr.rel (%p663) target = $region52
      $region51: #{tpu_custom_call.1} parent=5 // pred_region
        // Predicated region
        $region53: #{tpu_custom_call.1} parent=51 // pred_check
          %p666 = pneg %p77
        $region54: #{tpu_custom_call.1} parent=51 // pred_check_branch
          %668 = sbr.rel (%p666) target = $region56
        $region55: #{tpu_custom_call.1} parent=51 // pred_region
          %p669 = scmp.lt.s32.totalorder %s52, 1
          %s670 = scalar_select %p669, %s52, 1
          %s671 = smul.addr %s670, 8
          %s672 = scalar_lea.vmem %s0, %s671
        $region56: #{tpu_custom_call.1} parent=51 // pred_fallthru
          _
        // Predicated region
        $region57: #{tpu_custom_call.1} parent=51 // pred_check
          %p673 = pneg %p103
        $region58: #{tpu_custom_call.1} parent=51 // pred_check_branch
          %675 = sbr.rel (%p673) target = $region60
        $region59: #{tpu_custom_call.1} parent=51 // pred_region
          %p676 = scmp.lt.s32.totalorder %s52, 1
          %s677 = scalar_select %p676, %s52, 1
          %s678 = smul.addr %s677, 8
          %s679 = scalar_lea.vmem %s1, %s678
        $region60: #{tpu_custom_call.1} parent=51 // pred_fallthru
          _
        // Predicated region
        $region61: #{tpu_custom_call.1} parent=51 // pred_check
          %p680 = pneg %p129
        $region62: #{tpu_custom_call.1} parent=51 // pred_check_branch
          %682 = sbr.rel (%p680) target = $region64
        $region63: #{tpu_custom_call.1} parent=51 // pred_region
          %s683 = sand.u32 %s45, 1
          %s684 = scalar_lea.sflag [#allocation4], %s683
          %s685 = sand.u32 %s119, 1
          %s686 = smul.addr %s685, 64
          %s687 = scalar_lea.vmem [#allocation3], %s686
          %s688 = smul.u32 8, %s52
          %690 = vsyncadd %s684, 0
          %s691 = smul.addr %s688, 2
          %s692 = smul.addr %s691, 4
          %s693 = scalar_lea.hbm %s2, %s692
          %s694 = sshll.u32 %s693, 4
          %s695 = int_to_ptr.hbm [resolvable:$true] %s694
          %s696 = sshll.u32 %s687, 4
          %s697 = int_to_ptr.vmem [resolvable:$true] %s696
          %702 = dma.hbm_to_vmem [thread:$0]  %s695, 1024, %s697, %s684, 64, 64, 4
        $region64: #{tpu_custom_call.1} parent=51 // pred_fallthru
          _
        // Predicated region
        $region65: #{tpu_custom_call.1} parent=51 // pred_check
          %p703 = pneg %p155
        $region66: #{tpu_custom_call.1} parent=51 // pred_check_branch
          %705 = sbr.rel (%p703) target = $region68
        $region67: #{tpu_custom_call.1} parent=51 // pred_region
          %s706 = sand.u32 %s45, 1
          %s707 = scalar_lea.sflag [#allocation7], %s706
          %s708 = sand.u32 %s145, 1
          %s709 = smul.addr %s708, 64
          %s710 = scalar_lea.vmem [#allocation6], %s709
          %s711 = smul.u32 8, %s52
          %713 = vsyncadd %s707, 0
          %s714 = smul.addr %s711, 2
          %s715 = smul.addr %s714, 4
          %s716 = scalar_lea.hbm %s3, %s715
          %s717 = sshll.u32 %s716, 4
          %s718 = int_to_ptr.hbm [resolvable:$true] %s717
          %s719 = sshll.u32 %s710, 4
          %s720 = int_to_ptr.vmem [resolvable:$true] %s719
          %725 = dma.hbm_to_vmem [thread:$0]  %s718, 1024, %s720, %s707, 64, 64, 4
        $region68: #{tpu_custom_call.1} parent=51 // pred_fallthru
          _
        // Predicated region
        $region69: #{tpu_custom_call.1} parent=51 // pred_check
          %p726 = pneg %p181
        $region70: #{tpu_custom_call.1} parent=51 // pred_check_branch
          %728 = sbr.rel (%p726) target = $region72
        $region71: #{tpu_custom_call.1} parent=51 // pred_region
          %s729 = sand.u32 %s45, 1
          %s730 = scalar_lea.sflag [#allocation7], %s729
          %s731 = sand.u32 %s171, 1
          %s732 = smul.addr %s731, 8
          %s733 = scalar_lea.vmem [#allocation8], %s732
          %735 = vsyncadd %s730, 0
          %s736 = smul.addr %s52, 8
          %s737 = scalar_lea.hbm %s4, %s736
          %s739 = sshll.u32 %s737, 4
          %s740 = int_to_ptr.hbm [resolvable:$true] %s739
          %s741 = sshll.u32 %s733, 4
          %s742 = int_to_ptr.vmem [resolvable:$true] %s741
          %744 = dma.hbm_to_vmem [thread:$0]  %s740, 128, %s742, %s730
        $region72: #{tpu_custom_call.1} parent=51 // pred_fallthru
          _
        // Predicated region
        $region73: #{tpu_custom_call.1} parent=51 // pred_check
          %p745 = pneg %p207
        $region74: #{tpu_custom_call.1} parent=51 // pred_check_branch
          %747 = sbr.rel (%p745) target = $region76
        $region75: #{tpu_custom_call.1} parent=51 // pred_region
          %s748 = sand.u32 %s45, 1
          %s749 = scalar_lea.sflag [#allocation10], %s748
          %s750 = sand.u32 %s197, 1
          %s751 = smul.addr %s750, 8
          %s752 = scalar_lea.vmem [#allocation9], %s751
          %754 = vsyncadd %s749, 0
          %s755 = smul.addr %s52, 8
          %s756 = scalar_lea.hbm %s5, %s755
          %s758 = sshll.u32 %s756, 4
          %s759 = int_to_ptr.hbm [resolvable:$true] %s758
          %s760 = sshll.u32 %s752, 4
          %s761 = int_to_ptr.vmem [resolvable:$true] %s760
          %763 = dma.hbm_to_vmem [thread:$0]  %s759, 128, %s761, %s749
        $region76: #{tpu_custom_call.1} parent=51 // pred_fallthru
          _
        // Predicated region
        $region77: #{tpu_custom_call.1} parent=51 // pred_check
          %p764 = pneg %p422
        $region78: #{tpu_custom_call.1} parent=51 // pred_check_branch
          %766 = sbr.rel (%p764) target = $region80
        $region79: #{tpu_custom_call.1} parent=51 // pred_region
          %s767 = sand.u32 %s45, 1
          %s768 = scalar_lea.sflag [#allocation4], %s767
          %s769 = sand.u32 %s412, 1
          %s770 = smul.addr %s769, 64
          %s771 = scalar_lea.vmem [#allocation23], %s770
          %773 = vsyncadd %s768, 0
          %s774 = smul.addr %s53, 4
          %s775 = scalar_lea.hbm %s15, %s774
          %s776 = sshll.u32 %s775, 4
          %s777 = int_to_ptr.hbm [resolvable:$true] %s776
          %s778 = sshll.u32 %s771, 4
          %s779 = int_to_ptr.vmem [resolvable:$true] %s778
          %784 = dma.hbm_to_vmem [thread:$0]  %s777, 1024, %s779, %s768, 128, 64, 4
        $region80: #{tpu_custom_call.1} parent=51 // pred_fallthru
          _
        // Predicated region
        $region81: #{tpu_custom_call.1} parent=51 // pred_check
          %p785 = pneg %p448
        $region82: #{tpu_custom_call.1} parent=51 // pred_check_branch
          %787 = sbr.rel (%p785) target = $region84
        $region83: #{tpu_custom_call.1} parent=51 // pred_region
          %p788 = scmp.lt.s32.totalorder %s53, 1
          %s789 = scalar_select %p788, %s53, 1
          %s790 = scalar_lea.vmem %s16, %s789
        $region84: #{tpu_custom_call.1} parent=51 // pred_fallthru
          _
      $region52: #{tpu_custom_call.1} parent=5 // pred_fallthru
        _
      %p791 = scmp.le.s32.totalorder 1, %s45
      %p792 = scmp.lt.s32.totalorder %s45, 5
      %p793 = pnand %p791, %p792
      %p794 = pneg %p793
      // Predicated region
      $region85: #{tpu_custom_call.1} parent=5 // pred_check
        _
      $region86: #{tpu_custom_call.1} parent=5 // pred_check_branch
        %796 = sbr.rel (%p793) target = $region88
      $region87: #{tpu_custom_call.1} parent=5 // pred_region
        %s797 = ssub.s32 %s45, 1
        %s798 = sand.u32 %s50, 1
        %s799 = scalar_lea.sflag [#allocation4], %s798
        %s800 = sand.u32 %s122, 1
        %s801 = smul.addr %s800, 64
        %s802 = scalar_lea.vmem [#allocation3], %s801
        // Predicated region
        $region89: #{tpu_custom_call.1} parent=87 // pred_check
          %p803 = pneg %p135
        $region90: #{tpu_custom_call.1} parent=87 // pred_check_branch
          %805 = sbr.rel (%p803) target = $region92
        $region91: #{tpu_custom_call.1} parent=87 // pred_region
          %807 = dma.done %s799, 1024
        $region92: #{tpu_custom_call.1} parent=87 // pred_fallthru
          _
        %s808 = sand.u32 %s50, 1
        %s809 = scalar_lea.sflag [#allocation7], %s808
        %s810 = sand.u32 %s148, 1
        %s811 = smul.addr %s810, 64
        %s812 = scalar_lea.vmem [#allocation6], %s811
        // Predicated region
        $region93: #{tpu_custom_call.1} parent=87 // pred_check
          %p813 = pneg %p161
        $region94: #{tpu_custom_call.1} parent=87 // pred_check_branch
          %815 = sbr.rel (%p813) target = $region96
        $region95: #{tpu_custom_call.1} parent=87 // pred_region
          %817 = dma.done %s809, 1024
        $region96: #{tpu_custom_call.1} parent=87 // pred_fallthru
          _
        %s818 = sand.u32 %s50, 1
        %s819 = scalar_lea.sflag [#allocation7], %s818
        %s820 = sand.u32 %s174, 1
        %s821 = smul.addr %s820, 8
        %s822 = scalar_lea.vmem [#allocation8], %s821
        // Predicated region
        $region97: #{tpu_custom_call.1} parent=87 // pred_check
          %p823 = pneg %p187
        $region98: #{tpu_custom_call.1} parent=87 // pred_check_branch
          %825 = sbr.rel (%p823) target = $region100
        $region99: #{tpu_custom_call.1} parent=87 // pred_region
          %827 = dma.done %s819, 128
        $region100: #{tpu_custom_call.1} parent=87 // pred_fallthru
          _
        %s828 = sand.u32 %s50, 1
        %s829 = scalar_lea.sflag [#allocation10], %s828
        %s830 = sand.u32 %s200, 1
        %s831 = smul.addr %s830, 8
        %s832 = scalar_lea.vmem [#allocation9], %s831
        // Predicated region
        $region101: #{tpu_custom_call.1} parent=87 // pred_check
          %p833 = pneg %p213
        $region102: #{tpu_custom_call.1} parent=87 // pred_check_branch
          %835 = sbr.rel (%p833) target = $region104
        $region103: #{tpu_custom_call.1} parent=87 // pred_region
          %837 = dma.done %s829, 128
        $region104: #{tpu_custom_call.1} parent=87 // pred_fallthru
          _
        // Predicated region
        $region105: #{tpu_custom_call.1} parent=87 // pred_check
          %p838 = pneg %p234
        $region106: #{tpu_custom_call.1} parent=87 // pred_check_branch
          %840 = sbr.rel (%p838) target = $region108
        $region107: #{tpu_custom_call.1} parent=87 // pred_region
          %842 = dma.done [#allocation10], 1024
        $region108: #{tpu_custom_call.1} parent=87 // pred_fallthru
          _
        // Predicated region
        $region109: #{tpu_custom_call.1} parent=87 // pred_check
          %p843 = pneg %p255
        $region110: #{tpu_custom_call.1} parent=87 // pred_check_branch
          %845 = sbr.rel (%p843) target = $region112
        $region111: #{tpu_custom_call.1} parent=87 // pred_region
          %847 = dma.done [#allocation13], 32
        $region112: #{tpu_custom_call.1} parent=87 // pred_fallthru
          _
        // Predicated region
        $region113: #{tpu_custom_call.1} parent=87 // pred_check
          %p848 = pneg %p276
        $region114: #{tpu_custom_call.1} parent=87 // pred_check_branch
          %850 = sbr.rel (%p848) target = $region116
        $region115: #{tpu_custom_call.1} parent=87 // pred_region
          %852 = dma.done [#allocation13], 1024
        $region116: #{tpu_custom_call.1} parent=87 // pred_fallthru
          _
        // Predicated region
        $region117: #{tpu_custom_call.1} parent=87 // pred_check
          %p853 = pneg %p297
        $region118: #{tpu_custom_call.1} parent=87 // pred_check_branch
          %855 = sbr.rel (%p853) target = $region120
        $region119: #{tpu_custom_call.1} parent=87 // pred_region
          %857 = dma.done [#allocation16], 1024
        $region120: #{tpu_custom_call.1} parent=87 // pred_fallthru
          _
        // Predicated region
        $region121: #{tpu_custom_call.1} parent=87 // pred_check
          %p858 = pneg %p318
        $region122: #{tpu_custom_call.1} parent=87 // pred_check_branch
          %860 = sbr.rel (%p858) target = $region124
        $region123: #{tpu_custom_call.1} parent=87 // pred_region
          %862 = dma.done [#allocation16], 3072
        $region124: #{tpu_custom_call.1} parent=87 // pred_fallthru
          _
        // Predicated region
        $region125: #{tpu_custom_call.1} parent=87 // pred_check
          %p863 = pneg %p339
        $region126: #{tpu_custom_call.1} parent=87 // pred_check_branch
          %865 = sbr.rel (%p863) target = $region128
        $region127: #{tpu_custom_call.1} parent=87 // pred_region
          %867 = dma.done [#allocation19], 3072
        $region128: #{tpu_custom_call.1} parent=87 // pred_fallthru
          _
        // Predicated region
        $region129: #{tpu_custom_call.1} parent=87 // pred_check
          %p868 = pneg %p360
        $region130: #{tpu_custom_call.1} parent=87 // pred_check_branch
          %870 = sbr.rel (%p868) target = $region132
        $region131: #{tpu_custom_call.1} parent=87 // pred_region
          %872 = dma.done [#allocation19], 3072
        $region132: #{tpu_custom_call.1} parent=87 // pred_fallthru
          _
        // Predicated region
        $region133: #{tpu_custom_call.1} parent=87 // pred_check
          %p873 = pneg %p381
        $region134: #{tpu_custom_call.1} parent=87 // pred_check_branch
          %875 = sbr.rel (%p873) target = $region136
        $region135: #{tpu_custom_call.1} parent=87 // pred_region
          %877 = dma.done [#allocation22], 3072
        $region136: #{tpu_custom_call.1} parent=87 // pred_fallthru
          _
        %s878 = sand.u32 %s50, 1
        %s879 = scalar_lea.sflag [#allocation4], %s878
        %s880 = sand.u32 %s415, 1
        %s881 = smul.addr %s880, 64
        %s882 = scalar_lea.vmem [#allocation23], %s881
        // Predicated region
        $region137: #{tpu_custom_call.1} parent=87 // pred_check
          %p883 = pneg %p428
        $region138: #{tpu_custom_call.1} parent=87 // pred_check_branch
          %885 = sbr.rel (%p883) target = $region140
        $region139: #{tpu_custom_call.1} parent=87 // pred_region
          %887 = dma.done %s879, 1024
        $region140: #{tpu_custom_call.1} parent=87 // pred_fallthru
          _
        %p888 = scmp.lt.s32.totalorder %s54, 1
        %s889 = scalar_select %p888, %s54, 1
        %s890 = smul.addr %s889, 8
        %s891 = scalar_lea.vmem %s0, %s890
        %p892 = pneg %p83
        %p893 = pneg %p80
        %p894 = scmp.lt.s32.totalorder %s54, 1
        %s895 = scalar_select %p894, %s54, 1
        %s896 = smul.addr %s895, 8
        %s897 = scalar_lea.vmem %s1, %s896
        %p898 = pneg %p109
        %p899 = pneg %p106
        %s900 = sand.u32 %s50, 1
        %s901 = scalar_lea.sflag [#allocation4], %s900
        %s902 = sand.u32 %s122, 1
        %s903 = smul.addr %s902, 64
        %s904 = scalar_lea.vmem [#allocation3], %s903
        %p905 = pneg %p135
        %p906 = pneg %p132
        %s907 = sand.u32 %s50, 1
        %s908 = scalar_lea.sflag [#allocation7], %s907
        %s909 = sand.u32 %s148, 1
        %s910 = smul.addr %s909, 64
        %s911 = scalar_lea.vmem [#allocation6], %s910
        %p912 = pneg %p161
        %p913 = pneg %p158
        %s914 = sand.u32 %s50, 1
        %s915 = scalar_lea.sflag [#allocation7], %s914
        %s916 = sand.u32 %s174, 1
        %s917 = smul.addr %s916, 8
        %s918 = scalar_lea.vmem [#allocation8], %s917
        %p919 = pneg %p187
        %p920 = pneg %p184
        %s921 = sand.u32 %s50, 1
        %s922 = scalar_lea.sflag [#allocation10], %s921
        %s923 = sand.u32 %s200, 1
        %s924 = smul.addr %s923, 8
        %s925 = scalar_lea.vmem [#allocation9], %s924
        %p926 = pneg %p213
        %p927 = pneg %p210
        %p928 = pneg %p234
        %p929 = pneg %p231
        %p930 = pneg %p255
        %p931 = pneg %p252
        %p932 = pneg %p276
        %p933 = pneg %p273
        %p934 = pneg %p297
        %p935 = pneg %p294
        %p936 = pneg %p318
        %p937 = pneg %p315
        %p938 = pneg %p339
        %p939 = pneg %p336
        %p940 = pneg %p360
        %p941 = pneg %p357
        %p942 = pneg %p381
        %p943 = pneg %p378
        %p944 = pneg %p402
        %p945 = pneg %p399
        %s946 = sand.u32 %s50, 1
        %s947 = scalar_lea.sflag [#allocation4], %s946
        %s948 = sand.u32 %s415, 1
        %s949 = smul.addr %s948, 64
        %s950 = scalar_lea.vmem [#allocation23], %s949
        %p951 = pneg %p428
        %p952 = pneg %p425
        %p953 = scmp.lt.s32.totalorder %s55, 1
        %s954 = scalar_select %p953, %s55, 1
        %s955 = scalar_lea.vmem %s16, %s954
        %p956 = pneg %p454
        %p957 = pneg %p451
        %p958 = pneg %p480
        %p959 = pneg %p477
        %s960 = sand.u32 %s467, 1
        %s961 = scalar_lea.sflag [#allocation5], %s960
        %s962 = sand.u32 %s467, 1
        %s963 = smul.addr %s962, 8
        %s964 = scalar_lea.vmem [#allocation24], %s963
        %p965 = pneg %p506
        %p966 = pneg %p503
        %s967 = sand.u32 %s50, 1
        %s968 = scalar_lea.sflag [#allocation26], %s967
        %s969 = sand.u32 %s493, 1
        %s970 = smul.addr %s969, 8
        %s971 = scalar_lea.vmem [#allocation25], %s970
        %p972 = pneg %p534
        %p973 = pneg %p531
        %s974 = sand.u32 %s50, 1
        %s975 = scalar_lea.sflag [#allocation26], %s974
        %s976 = sand.u32 %s521, 1
        %s977 = smul.addr %s976, 8
        %s978 = scalar_lea.vmem [#allocation27], %s977
        %p979 = scmp.lt.s32.totalorder %s54, 1
        %s980 = scalar_select %p979, %s54, 1
        %s981 = smul.addr %s980, 8
        %s982 = scalar_lea.vmem %s0, %s981
        %p983 = scmp.lt.s32.totalorder %s54, 1
        %s984 = scalar_select %p983, %s54, 1
        %s985 = smul.addr %s984, 8
        %s986 = scalar_lea.vmem %s1, %s985
        %s987 = smul.u32 8, %s54
        %s988 = smul.u32 8, %s54
        %p989 = scmp.lt.s32.totalorder %s55, 1
        %s990 = scalar_select %p989, %s55, 1
        %s991 = scalar_lea.vmem %s16, %s990
        %p992 = scmp.eq.s32.totalorder %s55, 0
        // Predicated region
        $region141: #{tpu_custom_call.1} parent=87 // pred_check
          %p993 = pneg %p992
        $region142: #{tpu_custom_call.1} parent=87 // pred_check_branch
          %995 = sbr.rel (%p993) target = $region144
        $region143: #{tpu_custom_call.1} parent=87 // pred_region
          %v996 = vld [vmem:[%s832] sm:$0xff]
          %v997 = vld [vmem:[%s982] sm:$0xff]
          %v998 = vpack.c.bf16 %v996, %v996
          %v999 = vld [vmem:[#allocation11] sm:$0xf]
          %v1000 = vld [vmem:[#allocation11 + $0x4] sm:$0xf]
          %v1001 = vld [vmem:[#allocation11 + $0x8] sm:$0xf]
          %v1002 = vld [vmem:[#allocation11 + $0xc] sm:$0xf]
          %v1003 = vld [vmem:[#allocation11 + $0x10] sm:$0xf]
          %v1004 = vld [vmem:[#allocation11 + $0x14] sm:$0xf]
          %v1005 = vld [vmem:[#allocation11 + $0x18] sm:$0xf]
          %v1006 = vld [vmem:[#allocation11 + $0x1c] sm:$0xf]
          %v1007 = vld [vmem:[#allocation11 + $0x20] sm:$0xf]
          %v1008 = vld [vmem:[#allocation11 + $0x24] sm:$0xf]
          %v1009 = vld [vmem:[#allocation11 + $0x28] sm:$0xf]
          %v1010 = vld [vmem:[#allocation11 + $0x2c] sm:$0xf]
          %v1011 = vld [vmem:[#allocation11 + $0x30] sm:$0xf]
          %v1012 = vld [vmem:[#allocation11 + $0x34] sm:$0xf]
          %v1013 = vld [vmem:[#allocation11 + $0x38] sm:$0xf]
          %v1014 = vld [vmem:[#allocation11 + $0x3c] sm:$0xf]
          %v1031 = vunpack.c.l.b16 %v999
          %v1032 = vunpack.c.l.b16 %v1000
          %v1033 = vunpack.c.l.b16 %v1001
          %v1034 = vunpack.c.l.b16 %v1002
          %v1035 = vunpack.c.l.b16 %v1003
          %v1036 = vunpack.c.l.b16 %v1004
          %v1037 = vunpack.c.l.b16 %v1005
          %v1038 = vunpack.c.l.b16 %v1006
          %v1039 = vunpack.c.l.b16 %v1007
          %v1040 = vunpack.c.l.b16 %v1008
          %v1041 = vunpack.c.l.b16 %v1009
          %v1042 = vunpack.c.l.b16 %v1010
          %v1043 = vunpack.c.l.b16 %v1011
          %v1044 = vunpack.c.l.b16 %v1012
          %v1045 = vunpack.c.l.b16 %v1013
          %v1046 = vunpack.c.l.b16 %v1014
          %v1047 = vpack.c.b16 %v1032, %v1031
          %v1048 = vpack.c.b16 %v1034, %v1033
          %v1049 = vpack.c.b16 %v1036, %v1035
          %v1050 = vpack.c.b16 %v1038, %v1037
          %v1051 = vpack.c.b16 %v1040, %v1039
          %v1052 = vpack.c.b16 %v1042, %v1041
          %v1053 = vpack.c.b16 %v1044, %v1043
          %v1054 = vpack.c.b16 %v1046, %v1045
          %1063 = vmatpush.bf16.msra.mxu0 %v1054
          %1064 = vmatpush.bf16.msra.mxu0 %v1053
          %1065 = vmatpush.bf16.msra.mxu0 %v1052
          %1066 = vmatpush.bf16.msra.mxu0 %v1051
          %1067 = vmatpush.bf16.msra.mxu0 %v1050
          %1068 = vmatpush.bf16.msra.mxu0 %v1049
          %1069 = vmatpush.bf16.msra.mxu0 %v1048
          %1070 = vmatpush.bf16.msra.mxu0 %v1047
          %1071 = vmatmul.bf16.gmra.mxu0 %v998
          %v1072 = vpop.f32.mrf.mxu0
          %v1073 = vadd.f32 0.0, %v1072
          %v1074 = vpop.f32.mrf.mxu0
          %1075 = vdwg.mxu0
          %v1076 = vld [vmem:[#allocation12] sm:$0x1]
          %v1077 = vld [vmem:[#allocation12 + $0x1] sm:$0x1]
          %v1078 = vld [vmem:[%s812] sm:$0xf]
          %v1079 = vld [vmem:[%s812 + $0x4] sm:$0xf]
          %v1080 = vld [vmem:[%s812 + $0x8] sm:$0xf]
          %v1081 = vld [vmem:[%s812 + $0xc] sm:$0xf]
          %v1082 = vld [vmem:[%s812 + $0x10] sm:$0xf]
          %v1083 = vld [vmem:[%s812 + $0x14] sm:$0xf]
          %v1084 = vld [vmem:[%s812 + $0x18] sm:$0xf]
          %v1085 = vld [vmem:[%s812 + $0x1c] sm:$0xf]
          %v1086 = vld [vmem:[%s812 + $0x20] sm:$0xf]
          %v1087 = vld [vmem:[%s812 + $0x24] sm:$0xf]
          %v1088 = vld [vmem:[%s812 + $0x28] sm:$0xf]
          %v1089 = vld [vmem:[%s812 + $0x2c] sm:$0xf]
          %v1090 = vld [vmem:[%s812 + $0x30] sm:$0xf]
          %v1091 = vld [vmem:[%s812 + $0x34] sm:$0xf]
          %v1092 = vld [vmem:[%s812 + $0x38] sm:$0xf]
          %v1093 = vld [vmem:[%s812 + $0x3c] sm:$0xf]
          %v1094 = vunpack.c.l.bf16 %v1078
          %v1095 = vunpack.c.l.bf16 %v1079
          %v1096 = vunpack.c.l.bf16 %v1080
          %v1097 = vunpack.c.l.bf16 %v1081
          %v1098 = vunpack.c.l.bf16 %v1082
          %v1099 = vunpack.c.l.bf16 %v1083
          %v1100 = vunpack.c.l.bf16 %v1084
          %v1101 = vunpack.c.l.bf16 %v1085
          %v1102 = vunpack.c.l.bf16 %v1086
          %v1103 = vunpack.c.l.bf16 %v1087
          %v1104 = vunpack.c.l.bf16 %v1088
          %v1105 = vunpack.c.l.bf16 %v1089
          %v1106 = vunpack.c.l.bf16 %v1090
          %v1107 = vunpack.c.l.bf16 %v1091
          %v1108 = vunpack.c.l.bf16 %v1092
          %v1109 = vunpack.c.l.bf16 %v1093
          %v1111 = vrot.slane %v1073, 1
          %v1112 = vrot.slane %v1073, 2
          %v1113 = vrot.slane %v1073, 3
          %v1114 = vrot.slane %v1073, 4
          %v1115 = vrot.slane %v1073, 5
          %v1116 = vrot.slane %v1073, 6
          %v1117 = vrot.slane %v1073, 7
          %v1118 = vperm.slane %v1073, 0
          %v1119 = vperm.slane %v1111, 0
          %v1120 = vperm.slane %v1112, 0
          %v1121 = vperm.slane %v1113, 0
          %v1122 = vperm.slane %v1114, 0
          %v1123 = vperm.slane %v1115, 0
          %v1124 = vperm.slane %v1116, 0
          %v1125 = vperm.slane %v1117, 0
          %v1134 = vadd.f32 %v1094, %v1118
          %v1135 = vadd.f32 %v1095, %v1118
          %v1136 = vadd.f32 %v1096, %v1119
          %v1137 = vadd.f32 %v1097, %v1119
          %v1138 = vadd.f32 %v1098, %v1120
          %v1139 = vadd.f32 %v1099, %v1120
          %v1140 = vadd.f32 %v1100, %v1121
          %v1141 = vadd.f32 %v1101, %v1121
          %v1142 = vadd.f32 %v1102, %v1122
          %v1143 = vadd.f32 %v1103, %v1122
          %v1144 = vadd.f32 %v1104, %v1123
          %v1145 = vadd.f32 %v1105, %v1123
          %v1146 = vadd.f32 %v1106, %v1124
          %v1147 = vadd.f32 %v1107, %v1124
          %v1148 = vadd.f32 %v1108, %v1125
          %v1149 = vadd.f32 %v1109, %v1125
          %v1150 = vperm.slane %v1076, 0
          %v1151 = vadd.f32 %v1134, %v1150
          %v1152 = vadd.f32 %v1135, %v1150
          %v1153 = vadd.f32 %v1136, %v1150
          %v1154 = vadd.f32 %v1137, %v1150
          %v1155 = vadd.f32 %v1138, %v1150
          %v1156 = vadd.f32 %v1139, %v1150
          %v1157 = vadd.f32 %v1140, %v1150
          %v1158 = vadd.f32 %v1141, %v1150
          %v1159 = vadd.f32 %v1142, %v1150
          %v1160 = vadd.f32 %v1143, %v1150
          %v1161 = vadd.f32 %v1144, %v1150
          %v1162 = vadd.f32 %v1145, %v1150
          %v1163 = vadd.f32 %v1146, %v1150
          %v1164 = vadd.f32 %v1147, %v1150
          %v1165 = vadd.f32 %v1148, %v1150
          %v1166 = vadd.f32 %v1149, %v1150
          %v1167 = vtanh.pop %v1151
          %v1168 = vtanh.pop %v1152
          %v1169 = vtanh.pop %v1153
          %v1170 = vtanh.pop %v1154
          %v1171 = vtanh.pop %v1155
          %v1172 = vtanh.pop %v1156
          %v1173 = vtanh.pop %v1157
          %v1174 = vtanh.pop %v1158
          %v1175 = vtanh.pop %v1159
          %v1176 = vtanh.pop %v1160
          %v1177 = vtanh.pop %v1161
          %v1178 = vtanh.pop %v1162
          %v1179 = vtanh.pop %v1163
          %v1180 = vtanh.pop %v1164
          %v1181 = vtanh.pop %v1165
          %v1182 = vtanh.pop %v1166
          %v1183 = vperm.slane %v1077, 0
          %v1184 = vmul.f32 %v1167, %v1183
          %v1185 = vmul.f32 %v1168, %v1183
          %v1186 = vmul.f32 %v1169, %v1183
          %v1187 = vmul.f32 %v1170, %v1183
          %v1188 = vmul.f32 %v1171, %v1183
          %v1189 = vmul.f32 %v1172, %v1183
          %v1190 = vmul.f32 %v1173, %v1183
          %v1191 = vmul.f32 %v1174, %v1183
          %v1192 = vmul.f32 %v1175, %v1183
          %v1193 = vmul.f32 %v1176, %v1183
          %v1194 = vmul.f32 %v1177, %v1183
          %v1195 = vmul.f32 %v1178, %v1183
          %v1196 = vmul.f32 %v1179, %v1183
          %v1197 = vmul.f32 %v1180, %v1183
          %v1198 = vmul.f32 %v1181, %v1183
          %v1199 = vmul.f32 %v1182, %v1183
          %1200 = vadd.xlane.f32.xlu0 %v1184
          %v1201 = vpop.xlane.xlu0 %1200
          %1202 = vadd.xlane.f32.xlu0 %v1185
          %v1203 = vpop.xlane.xlu0 %1202
          %1204 = vadd.xlane.f32.xlu0 %v1186
          %v1205 = vpop.xlane.xlu0 %1204
          %1206 = vadd.xlane.f32.xlu0 %v1187
          %v1207 = vpop.xlane.xlu0 %1206
          %1208 = vadd.xlane.f32.xlu0 %v1188
          %v1209 = vpop.xlane.xlu0 %1208
          %1210 = vadd.xlane.f32.xlu0 %v1189
          %v1211 = vpop.xlane.xlu0 %1210
          %1212 = vadd.xlane.f32.xlu0 %v1190
          %v1213 = vpop.xlane.xlu0 %1212
          %1214 = vadd.xlane.f32.xlu0 %v1191
          %v1215 = vpop.xlane.xlu0 %1214
          %1216 = vadd.xlane.f32.xlu0 %v1192
          %v1217 = vpop.xlane.xlu0 %1216
          %1218 = vadd.xlane.f32.xlu0 %v1193
          %v1219 = vpop.xlane.xlu0 %1218
          %1220 = vadd.xlane.f32.xlu0 %v1194
          %v1221 = vpop.xlane.xlu0 %1220
          %1222 = vadd.xlane.f32.xlu0 %v1195
          %v1223 = vpop.xlane.xlu0 %1222
          %1224 = vadd.xlane.f32.xlu0 %v1196
          %v1225 = vpop.xlane.xlu0 %1224
          %1226 = vadd.xlane.f32.xlu0 %v1197
          %v1227 = vpop.xlane.xlu0 %1226
          %1228 = vadd.xlane.f32.xlu0 %v1198
          %v1229 = vpop.xlane.xlu0 %1228
          %1230 = vadd.xlane.f32.xlu0 %v1199
          %v1231 = vpop.xlane.xlu0 %1230
          %v1232 = vlaneseq
          %v1233 = vand.u32 %v1232, 127
          %v1234 = vld [vmem:[%s986] sm:$0xff]
          %1235 = vset.pattern.permute.xlu0 0
          %1236 = vperm.xlu0 %1235, %v1234
          %v1237 = vpop.permute.xlu0 %1236
          %vm1238 = vcmp.lt.s32.totalorder %v1233, %v1237
          %v1255 = vperm.slane %v1201, %v1233
          %v1256 = vadd.s32 %v1233, 4294967288
          %v1257 = vperm.slane %v1203, %v1256
          %vm1258 = vcmask 130112
          %v1259 = vsel %vm1258, %v1257, %v1255
          %v1260 = vperm.slane %v1205, %v1233
          %v1261 = vperm.slane %v1207, %v1256
          %v1262 = vsel %vm1258, %v1261, %v1260
          %v1263 = vperm.slane %v1209, %v1233
          %v1264 = vperm.slane %v1211, %v1256
          %v1265 = vsel %vm1258, %v1264, %v1263
          %v1266 = vperm.slane %v1213, %v1233
          %v1267 = vperm.slane %v1215, %v1256
          %v1268 = vsel %vm1258, %v1267, %v1266
          %v1269 = vperm.slane %v1217, %v1233
          %v1270 = vperm.slane %v1219, %v1256
          %v1271 = vsel %vm1258, %v1270, %v1269
          %v1272 = vperm.slane %v1221, %v1233
          %v1273 = vperm.slane %v1223, %v1256
          %v1274 = vsel %vm1258, %v1273, %v1272
          %v1275 = vperm.slane %v1225, %v1233
          %v1276 = vperm.slane %v1227, %v1256
          %v1277 = vsel %vm1258, %v1276, %v1275
          %v1278 = vperm.slane %v1229, %v1233
          %v1279 = vperm.slane %v1231, %v1256
          %v1280 = vsel %vm1258, %v1279, %v1278
          %vm1281 = vcmask 1041409
          %v1282 = vsel %vm1281, %v1262, %v1259
          %vm1283 = vcmask 1042434
          %v1284 = vsel %vm1283, %v1265, %v1282
          %vm1285 = vcmask 1043459
          %v1286 = vsel %vm1285, %v1268, %v1284
          %vm1287 = vcmask 1044484
          %v1288 = vsel %vm1287, %v1271, %v1286
          %vm1289 = vcmask 1045509
          %v1290 = vsel %vm1289, %v1274, %v1288
          %vm1291 = vcmask 1046534
          %v1292 = vsel %vm1291, %v1277, %v1290
          %vm1293 = vcmask 1047559
          %v1294 = vsel %vm1293, %v1280, %v1292
          %v1296 = vsel %vm1238, %v1294, -1e+10
          %vm1297 = vcmask 130048
          %v1298 = vsel %vm1297, %v1296, -inf
          %1299 = vmax.xlane.f32.xlu0 %v1298
          %v1300 = vpop.xlane.xlu0 %1299
          %v1301 = vsub.f32 %v1296, %v1300
          %v1302 = vmul.f32 %v1301, 1.442695
          %v1303 = vpow.pop %v1302
          %v1304 = vsel %vm1297, %v1303, 0.0
          %1305 = vadd.xlane.f32.xlu0 %v1304
          %v1306 = vpop.xlane.xlu0 %1305
          %v1307 = vrcp.pop %v1306
          %v1308 = vmul.f32 %v1303, %v1307
          %1309 = vst.msk [vmem:[%s971] sm:$0xff] %vm1297, %v1308
          %v1310 = vperm.slane %v1308, 0
          %v1311 = vlaneseq
          %v1312 = vshrl.u32 %v1311, 7
          %1314 = vset.pattern.permute.xlu0 %v1312
          %1315 = vperm.xlu0 %1314, %v1310
          %v1316 = vpop.permute.xlu0 %1315
          %v1317 = vlaneseq
          %v1318 = vshrl.u32 %v1317, 7
          %v1319 = vadd.s32 %v1318, 8
          %1320 = vset.pattern.permute.xlu0 %v1319
          %1321 = vperm.xlu0 %1320, %v1310
          %v1322 = vpop.permute.xlu0 %1321
          %v1323 = vperm.slane %v1308, 1
          %v1324 = vlaneseq
          %v1325 = vshrl.u32 %v1324, 7
          %1327 = vset.pattern.permute.xlu0 %v1325
          %1328 = vperm.xlu0 %1327, %v1323
          %v1329 = vpop.permute.xlu0 %1328
          %v1330 = vlaneseq
          %v1331 = vshrl.u32 %v1330, 7
          %v1332 = vadd.s32 %v1331, 8
          %1333 = vset.pattern.permute.xlu0 %v1332
          %1334 = vperm.xlu0 %1333, %v1323
          %v1335 = vpop.permute.xlu0 %1334
          %v1336 = vperm.slane %v1308, 2
          %v1337 = vlaneseq
          %v1338 = vshrl.u32 %v1337, 7
          %1340 = vset.pattern.permute.xlu0 %v1338
          %1341 = vperm.xlu0 %1340, %v1336
          %v1342 = vpop.permute.xlu0 %1341
          %v1343 = vlaneseq
          %v1344 = vshrl.u32 %v1343, 7
          %v1345 = vadd.s32 %v1344, 8
          %1346 = vset.pattern.permute.xlu0 %v1345
          %1347 = vperm.xlu0 %1346, %v1336
          %v1348 = vpop.permute.xlu0 %1347
          %v1349 = vperm.slane %v1308, 3
          %v1350 = vlaneseq
          %v1351 = vshrl.u32 %v1350, 7
          %1353 = vset.pattern.permute.xlu0 %v1351
          %1354 = vperm.xlu0 %1353, %v1349
          %v1355 = vpop.permute.xlu0 %1354
          %v1356 = vlaneseq
          %v1357 = vshrl.u32 %v1356, 7
          %v1358 = vadd.s32 %v1357, 8
          %1359 = vset.pattern.permute.xlu0 %v1358
          %1360 = vperm.xlu0 %1359, %v1349
          %v1361 = vpop.permute.xlu0 %1360
          %v1362 = vperm.slane %v1308, 4
          %v1363 = vlaneseq
          %v1364 = vshrl.u32 %v1363, 7
          %1366 = vset.pattern.permute.xlu0 %v1364
          %1367 = vperm.xlu0 %1366, %v1362
          %v1368 = vpop.permute.xlu0 %1367
          %v1369 = vlaneseq
          %v1370 = vshrl.u32 %v1369, 7
          %v1371 = vadd.s32 %v1370, 8
          %1372 = vset.pattern.permute.xlu0 %v1371
          %1373 = vperm.xlu0 %1372, %v1362
          %v1374 = vpop.permute.xlu0 %1373
          %v1375 = vperm.slane %v1308, 5
          %v1376 = vlaneseq
          %v1377 = vshrl.u32 %v1376, 7
          %1379 = vset.pattern.permute.xlu0 %v1377
          %1380 = vperm.xlu0 %1379, %v1375
          %v1381 = vpop.permute.xlu0 %1380
          %v1382 = vlaneseq
          %v1383 = vshrl.u32 %v1382, 7
          %v1384 = vadd.s32 %v1383, 8
          %1385 = vset.pattern.permute.xlu0 %v1384
          %1386 = vperm.xlu0 %1385, %v1375
          %v1387 = vpop.permute.xlu0 %1386
          %v1388 = vperm.slane %v1308, 6
          %v1389 = vlaneseq
          %v1390 = vshrl.u32 %v1389, 7
          %1392 = vset.pattern.permute.xlu0 %v1390
          %1393 = vperm.xlu0 %1392, %v1388
          %v1394 = vpop.permute.xlu0 %1393
          %v1395 = vlaneseq
          %v1396 = vshrl.u32 %v1395, 7
          %v1397 = vadd.s32 %v1396, 8
          %1398 = vset.pattern.permute.xlu0 %v1397
          %1399 = vperm.xlu0 %1398, %v1388
          %v1400 = vpop.permute.xlu0 %1399
          %v1401 = vperm.slane %v1308, 7
          %v1402 = vlaneseq
          %v1403 = vshrl.u32 %v1402, 7
          %1405 = vset.pattern.permute.xlu0 %v1403
          %1406 = vperm.xlu0 %1405, %v1401
          %v1407 = vpop.permute.xlu0 %1406
          %v1408 = vlaneseq
          %v1409 = vshrl.u32 %v1408, 7
          %v1410 = vadd.s32 %v1409, 8
          %1411 = vset.pattern.permute.xlu0 %v1410
          %1412 = vperm.xlu0 %1411, %v1401
          %v1413 = vpop.permute.xlu0 %1412
          %v1414 = vld [vmem:[%s802] sm:$0xf]
          %v1415 = vld [vmem:[%s802 + $0x4] sm:$0xf]
          %v1416 = vld [vmem:[%s802 + $0x8] sm:$0xf]
          %v1417 = vld [vmem:[%s802 + $0xc] sm:$0xf]
          %v1418 = vld [vmem:[%s802 + $0x10] sm:$0xf]
          %v1419 = vld [vmem:[%s802 + $0x14] sm:$0xf]
          %v1420 = vld [vmem:[%s802 + $0x18] sm:$0xf]
          %v1421 = vld [vmem:[%s802 + $0x1c] sm:$0xf]
          %v1422 = vld [vmem:[%s802 + $0x20] sm:$0xf]
          %v1423 = vld [vmem:[%s802 + $0x24] sm:$0xf]
          %v1424 = vld [vmem:[%s802 + $0x28] sm:$0xf]
          %v1425 = vld [vmem:[%s802 + $0x2c] sm:$0xf]
          %v1426 = vld [vmem:[%s802 + $0x30] sm:$0xf]
          %v1427 = vld [vmem:[%s802 + $0x34] sm:$0xf]
          %v1428 = vld [vmem:[%s802 + $0x38] sm:$0xf]
          %v1429 = vld [vmem:[%s802 + $0x3c] sm:$0xf]
          %v1430 = vunpack.c.l.bf16 %v1414
          %v1431 = vunpack.c.l.bf16 %v1415
          %v1432 = vunpack.c.l.bf16 %v1416
          %v1433 = vunpack.c.l.bf16 %v1417
          %v1434 = vunpack.c.l.bf16 %v1418
          %v1435 = vunpack.c.l.bf16 %v1419
          %v1436 = vunpack.c.l.bf16 %v1420
          %v1437 = vunpack.c.l.bf16 %v1421
          %v1438 = vunpack.c.l.bf16 %v1422
          %v1439 = vunpack.c.l.bf16 %v1423
          %v1440 = vunpack.c.l.bf16 %v1424
          %v1441 = vunpack.c.l.bf16 %v1425
          %v1442 = vunpack.c.l.bf16 %v1426
          %v1443 = vunpack.c.l.bf16 %v1427
          %v1444 = vunpack.c.l.bf16 %v1428
          %v1445 = vunpack.c.l.bf16 %v1429
          %v1446 = vmul.f32 %v1316, %v1430
          %v1447 = vmul.f32 %v1322, %v1431
          %v1448 = vmul.f32 %v1329, %v1432
          %v1449 = vmul.f32 %v1335, %v1433
          %v1450 = vmul.f32 %v1342, %v1434
          %v1451 = vmul.f32 %v1348, %v1435
          %v1452 = vmul.f32 %v1355, %v1436
          %v1453 = vmul.f32 %v1361, %v1437
          %v1454 = vmul.f32 %v1368, %v1438
          %v1455 = vmul.f32 %v1374, %v1439
          %v1456 = vmul.f32 %v1381, %v1440
          %v1457 = vmul.f32 %v1387, %v1441
          %v1458 = vmul.f32 %v1394, %v1442
          %v1459 = vmul.f32 %v1400, %v1443
          %v1460 = vmul.f32 %v1407, %v1444
          %v1461 = vmul.f32 %v1413, %v1445
          %v1462 = vadd.f32 %v1446, %v1447
          %v1463 = vrot.slane %v1462, 4
          %v1464 = vadd.f32 %v1462, %v1463
          %v1465 = vrot.slane %v1464, 2
          %v1466 = vadd.f32 %v1464, %v1465
          %v1467 = vrot.slane %v1466, 1
          %v1468 = vadd.f32 %v1466, %v1467
          %v1469 = vadd.f32 %v1448, %v1449
          %v1470 = vrot.slane %v1469, 4
          %v1471 = vadd.f32 %v1469, %v1470
          %v1472 = vrot.slane %v1471, 2
          %v1473 = vadd.f32 %v1471, %v1472
          %v1474 = vrot.slane %v1473, 1
          %v1475 = vadd.f32 %v1473, %v1474
          %v1476 = vadd.f32 %v1450, %v1451
          %v1477 = vrot.slane %v1476, 4
          %v1478 = vadd.f32 %v1476, %v1477
          %v1479 = vrot.slane %v1478, 2
          %v1480 = vadd.f32 %v1478, %v1479
          %v1481 = vrot.slane %v1480, 1
          %v1482 = vadd.f32 %v1480, %v1481
          %v1483 = vadd.f32 %v1452, %v1453
          %v1484 = vrot.slane %v1483, 4
          %v1485 = vadd.f32 %v1483, %v1484
          %v1486 = vrot.slane %v1485, 2
          %v1487 = vadd.f32 %v1485, %v1486
          %v1488 = vrot.slane %v1487, 1
          %v1489 = vadd.f32 %v1487, %v1488
          %v1490 = vadd.f32 %v1454, %v1455
          %v1491 = vrot.slane %v1490, 4
          %v1492 = vadd.f32 %v1490, %v1491
          %v1493 = vrot.slane %v1492, 2
          %v1494 = vadd.f32 %v1492, %v1493
          %v1495 = vrot.slane %v1494, 1
          %v1496 = vadd.f32 %v1494, %v1495
          %v1497 = vadd.f32 %v1456, %v1457
          %v1498 = vrot.slane %v1497, 4
          %v1499 = vadd.f32 %v1497, %v1498
          %v1500 = vrot.slane %v1499, 2
          %v1501 = vadd.f32 %v1499, %v1500
          %v1502 = vrot.slane %v1501, 1
          %v1503 = vadd.f32 %v1501, %v1502
          %v1504 = vadd.f32 %v1458, %v1459
          %v1505 = vrot.slane %v1504, 4
          %v1506 = vadd.f32 %v1504, %v1505
          %v1507 = vrot.slane %v1506, 2
          %v1508 = vadd.f32 %v1506, %v1507
          %v1509 = vrot.slane %v1508, 1
          %v1510 = vadd.f32 %v1508, %v1509
          %v1511 = vadd.f32 %v1460, %v1461
          %v1512 = vrot.slane %v1511, 4
          %v1513 = vadd.f32 %v1511, %v1512
          %v1514 = vrot.slane %v1513, 2
          %v1515 = vadd.f32 %v1513, %v1514
          %v1516 = vrot.slane %v1515, 1
          %v1517 = vadd.f32 %v1515, %v1516
          %v1518 = vld [vmem:[%s822] sm:$0xff]
          %v1519 = vpack.c.bf16 %v1518, %v1518
          %v1520 = vld [vmem:[#allocation14] sm:$0xf]
          %v1521 = vld [vmem:[#allocation14 + $0x4] sm:$0xf]
          %v1522 = vld [vmem:[#allocation14 + $0x8] sm:$0xf]
          %v1523 = vld [vmem:[#allocation14 + $0xc] sm:$0xf]
          %v1524 = vld [vmem:[#allocation14 + $0x10] sm:$0xf]
          %v1525 = vld [vmem:[#allocation14 + $0x14] sm:$0xf]
          %v1526 = vld [vmem:[#allocation14 + $0x18] sm:$0xf]
          %v1527 = vld [vmem:[#allocation14 + $0x1c] sm:$0xf]
          %v1528 = vld [vmem:[#allocation14 + $0x20] sm:$0xf]
          %v1529 = vld [vmem:[#allocation14 + $0x24] sm:$0xf]
          %v1530 = vld [vmem:[#allocation14 + $0x28] sm:$0xf]
          %v1531 = vld [vmem:[#allocation14 + $0x2c] sm:$0xf]
          %v1532 = vld [vmem:[#allocation14 + $0x30] sm:$0xf]
          %v1533 = vld [vmem:[#allocation14 + $0x34] sm:$0xf]
          %v1534 = vld [vmem:[#allocation14 + $0x38] sm:$0xf]
          %v1535 = vld [vmem:[#allocation14 + $0x3c] sm:$0xf]
          %v1552 = vunpack.c.l.b16 %v1520
          %v1553 = vunpack.c.l.b16 %v1521
          %v1554 = vunpack.c.l.b16 %v1522
          %v1555 = vunpack.c.l.b16 %v1523
          %v1556 = vunpack.c.l.b16 %v1524
          %v1557 = vunpack.c.l.b16 %v1525
          %v1558 = vunpack.c.l.b16 %v1526
          %v1559 = vunpack.c.l.b16 %v1527
          %v1560 = vunpack.c.l.b16 %v1528
          %v1561 = vunpack.c.l.b16 %v1529
          %v1562 = vunpack.c.l.b16 %v1530
          %v1563 = vunpack.c.l.b16 %v1531
          %v1564 = vunpack.c.l.b16 %v1532
          %v1565 = vunpack.c.l.b16 %v1533
          %v1566 = vunpack.c.l.b16 %v1534
          %v1567 = vunpack.c.l.b16 %v1535
          %v1568 = vpack.c.b16 %v1553, %v1552
          %v1569 = vpack.c.b16 %v1555, %v1554
          %v1570 = vpack.c.b16 %v1557, %v1556
          %v1571 = vpack.c.b16 %v1559, %v1558
          %v1572 = vpack.c.b16 %v1561, %v1560
          %v1573 = vpack.c.b16 %v1563, %v1562
          %v1574 = vpack.c.b16 %v1565, %v1564
          %v1575 = vpack.c.b16 %v1567, %v1566
          %1584 = vmatpush.bf16.msra.mxu0 %v1575
          %1585 = vmatpush.bf16.msra.mxu0 %v1574
          %1586 = vmatpush.bf16.msra.mxu0 %v1573
          %1587 = vmatpush.bf16.msra.mxu0 %v1572
          %1588 = vmatpush.bf16.msra.mxu0 %v1571
          %1589 = vmatpush.bf16.msra.mxu0 %v1570
          %1590 = vmatpush.bf16.msra.mxu0 %v1569
          %1591 = vmatpush.bf16.msra.mxu0 %v1568
          %1592 = vmatmul.bf16.gmra.mxu0 %v1519
          %v1593 = vpop.f32.mrf.mxu0
          %v1594 = vadd.f32 0.0, %v1593
          %v1595 = vpop.f32.mrf.mxu0
          %1596 = vdwg.mxu0
          %v1597 = vpack.c.bf16 %v1468, %v1468
          %v1598 = vpack.c.bf16 %v1475, %v1475
          %v1599 = vpack.c.bf16 %v1482, %v1482
          %v1600 = vpack.c.bf16 %v1489, %v1489
          %v1601 = vpack.c.bf16 %v1496, %v1496
          %v1602 = vpack.c.bf16 %v1503, %v1503
          %v1603 = vpack.c.bf16 %v1510, %v1510
          %v1604 = vpack.c.bf16 %v1517, %v1517
          %v1605 = vld [vmem:[#allocation15] sm:$0xf]
          %v1606 = vld [vmem:[#allocation15 + $0x4] sm:$0xf]
          %v1607 = vld [vmem:[#allocation15 + $0x8] sm:$0xf]
          %v1608 = vld [vmem:[#allocation15 + $0xc] sm:$0xf]
          %v1609 = vld [vmem:[#allocation15 + $0x10] sm:$0xf]
          %v1610 = vld [vmem:[#allocation15 + $0x14] sm:$0xf]
          %v1611 = vld [vmem:[#allocation15 + $0x18] sm:$0xf]
          %v1612 = vld [vmem:[#allocation15 + $0x1c] sm:$0xf]
          %v1613 = vld [vmem:[#allocation15 + $0x20] sm:$0xf]
          %v1614 = vld [vmem:[#allocation15 + $0x24] sm:$0xf]
          %v1615 = vld [vmem:[#allocation15 + $0x28] sm:$0xf]
          %v1616 = vld [vmem:[#allocation15 + $0x2c] sm:$0xf]
          %v1617 = vld [vmem:[#allocation15 + $0x30] sm:$0xf]
          %v1618 = vld [vmem:[#allocation15 + $0x34] sm:$0xf]
          %v1619 = vld [vmem:[#allocation15 + $0x38] sm:$0xf]
          %v1620 = vld [vmem:[#allocation15 + $0x3c] sm:$0xf]
          %v1629 = vunpack.c.l.b16 %v1597
          %v1630 = vunpack.c.l.b16 %v1598
          %v1631 = vunpack.c.l.b16 %v1599
          %v1632 = vunpack.c.l.b16 %v1600
          %v1633 = vunpack.c.l.b16 %v1601
          %v1634 = vunpack.c.l.b16 %v1602
          %v1635 = vunpack.c.l.b16 %v1603
          %v1636 = vunpack.c.l.b16 %v1604
          %v1637 = vsel %vm1281, %v1630, %v1629
          %v1638 = vsel %vm1283, %v1631, %v1637
          %v1639 = vsel %vm1285, %v1632, %v1638
          %v1640 = vsel %vm1287, %v1633, %v1639
          %v1641 = vsel %vm1289, %v1634, %v1640
          %v1642 = vsel %vm1291, %v1635, %v1641
          %v1643 = vsel %vm1293, %v1636, %v1642
          %v1644 = vpack.c.b16 %v1643, %v1643
          %v1662 = vunpack.c.l.b16 %v1605
          %v1663 = vunpack.c.l.b16 %v1606
          %v1664 = vunpack.c.l.b16 %v1607
          %v1665 = vunpack.c.l.b16 %v1608
          %v1666 = vunpack.c.l.b16 %v1609
          %v1667 = vunpack.c.l.b16 %v1610
          %v1668 = vunpack.c.l.b16 %v1611
          %v1669 = vunpack.c.l.b16 %v1612
          %v1670 = vunpack.c.l.b16 %v1613
          %v1671 = vunpack.c.l.b16 %v1614
          %v1672 = vunpack.c.l.b16 %v1615
          %v1673 = vunpack.c.l.b16 %v1616
          %v1674 = vunpack.c.l.b16 %v1617
          %v1675 = vunpack.c.l.b16 %v1618
          %v1676 = vunpack.c.l.b16 %v1619
          %v1677 = vunpack.c.l.b16 %v1620
          %v1678 = vpack.c.b16 %v1663, %v1662
          %v1679 = vpack.c.b16 %v1665, %v1664
          %v1680 = vpack.c.b16 %v1667, %v1666
          %v1681 = vpack.c.b16 %v1669, %v1668
          %v1682 = vpack.c.b16 %v1671, %v1670
          %v1683 = vpack.c.b16 %v1673, %v1672
          %v1684 = vpack.c.b16 %v1675, %v1674
          %v1685 = vpack.c.b16 %v1677, %v1676
          %1694 = vmatpush.bf16.msra.mxu0 %v1685
          %1695 = vmatpush.bf16.msra.mxu0 %v1684
          %1696 = vmatpush.bf16.msra.mxu0 %v1683
          %1697 = vmatpush.bf16.msra.mxu0 %v1682
          %1698 = vmatpush.bf16.msra.mxu0 %v1681
          %1699 = vmatpush.bf16.msra.mxu0 %v1680
          %1700 = vmatpush.bf16.msra.mxu0 %v1679
          %1701 = vmatpush.bf16.msra.mxu0 %v1678
          %1702 = vmatmul.bf16.gmra.mxu0 %v1644
          %v1703 = vpop.f32.mrf.mxu0
          %v1704 = vadd.f32 0.0, %v1703
          %v1705 = vpop.f32.mrf.mxu0
          %1706 = vdwg.mxu0
          %v1707 = vpack.c.bf16 %v997, %v997
          %v1708 = vld [vmem:[#allocation17] sm:$0xff]
          %v1709 = vld [vmem:[#allocation17 + $0x8] sm:$0xf]
          %v1710 = vld [vmem:[#allocation17 + $0xc] sm:$0xff]
          %v1711 = vld [vmem:[#allocation17 + $0x14] sm:$0xf]
          %v1712 = vld [vmem:[#allocation17 + $0x18] sm:$0xff]
          %v1713 = vld [vmem:[#allocation17 + $0x20] sm:$0xf]
          %v1714 = vld [vmem:[#allocation17 + $0x24] sm:$0xff]
          %v1715 = vld [vmem:[#allocation17 + $0x2c] sm:$0xf]
          %v1716 = vld [vmem:[#allocation17 + $0x30] sm:$0xff]
          %v1717 = vld [vmem:[#allocation17 + $0x38] sm:$0xf]
          %v1718 = vld [vmem:[#allocation17 + $0x3c] sm:$0xff]
          %v1719 = vld [vmem:[#allocation17 + $0x44] sm:$0xf]
          %v1720 = vld [vmem:[#allocation17 + $0x48] sm:$0xff]
          %v1721 = vld [vmem:[#allocation17 + $0x50] sm:$0xf]
          %v1722 = vld [vmem:[#allocation17 + $0x54] sm:$0xff]
          %v1723 = vld [vmem:[#allocation17 + $0x5c] sm:$0xf]
          %v1724 = vld [vmem:[#allocation17 + $0x60] sm:$0xff]
          %v1725 = vld [vmem:[#allocation17 + $0x68] sm:$0xf]
          %v1726 = vld [vmem:[#allocation17 + $0x6c] sm:$0xff]
          %v1727 = vld [vmem:[#allocation17 + $0x74] sm:$0xf]
          %v1728 = vld [vmem:[#allocation17 + $0x78] sm:$0xff]
          %v1729 = vld [vmem:[#allocation17 + $0x80] sm:$0xf]
          %v1730 = vld [vmem:[#allocation17 + $0x84] sm:$0xff]
          %v1731 = vld [vmem:[#allocation17 + $0x8c] sm:$0xf]
          %v1732 = vld [vmem:[#allocation17 + $0x90] sm:$0xff]
          %v1733 = vld [vmem:[#allocation17 + $0x98] sm:$0xf]
          %v1734 = vld [vmem:[#allocation17 + $0x9c] sm:$0xff]
          %v1735 = vld [vmem:[#allocation17 + $0xa4] sm:$0xf]
          %v1736 = vld [vmem:[#allocation17 + $0xa8] sm:$0xff]
          %v1737 = vld [vmem:[#allocation17 + $0xb0] sm:$0xf]
          %v1738 = vld [vmem:[#allocation17 + $0xb4] sm:$0xff]
          %v1739 = vld [vmem:[#allocation17 + $0xbc] sm:$0xf]
          %v1740 = vpack.c.bf16 %v1704, %v1704
          %v1741 = vld [vmem:[#allocation18] sm:$0xff]
          %v1742 = vld [vmem:[#allocation18 + $0x8] sm:$0xf]
          %v1743 = vld [vmem:[#allocation18 + $0xc] sm:$0xff]
          %v1744 = vld [vmem:[#allocation18 + $0x14] sm:$0xf]
          %v1745 = vld [vmem:[#allocation18 + $0x18] sm:$0xff]
          %v1746 = vld [vmem:[#allocation18 + $0x20] sm:$0xf]
          %v1747 = vld [vmem:[#allocation18 + $0x24] sm:$0xff]
          %v1748 = vld [vmem:[#allocation18 + $0x2c] sm:$0xf]
          %v1749 = vld [vmem:[#allocation18 + $0x30] sm:$0xff]
          %v1750 = vld [vmem:[#allocation18 + $0x38] sm:$0xf]
          %v1751 = vld [vmem:[#allocation18 + $0x3c] sm:$0xff]
          %v1752 = vld [vmem:[#allocation18 + $0x44] sm:$0xf]
          %v1753 = vld [vmem:[#allocation18 + $0x48] sm:$0xff]
          %v1754 = vld [vmem:[#allocation18 + $0x50] sm:$0xf]
          %v1755 = vld [vmem:[#allocation18 + $0x54] sm:$0xff]
          %v1756 = vld [vmem:[#allocation18 + $0x5c] sm:$0xf]
          %v1757 = vld [vmem:[#allocation18 + $0x60] sm:$0xff]
          %v1758 = vld [vmem:[#allocation18 + $0x68] sm:$0xf]
          %v1759 = vld [vmem:[#allocation18 + $0x6c] sm:$0xff]
          %v1760 = vld [vmem:[#allocation18 + $0x74] sm:$0xf]
          %v1761 = vld [vmem:[#allocation18 + $0x78] sm:$0xff]
          %v1762 = vld [vmem:[#allocation18 + $0x80] sm:$0xf]
          %v1763 = vld [vmem:[#allocation18 + $0x84] sm:$0xff]
          %v1764 = vld [vmem:[#allocation18 + $0x8c] sm:$0xf]
          %v1765 = vld [vmem:[#allocation18 + $0x90] sm:$0xff]
          %v1766 = vld [vmem:[#allocation18 + $0x98] sm:$0xf]
          %v1767 = vld [vmem:[#allocation18 + $0x9c] sm:$0xff]
          %v1768 = vld [vmem:[#allocation18 + $0xa4] sm:$0xf]
          %v1769 = vld [vmem:[#allocation18 + $0xa8] sm:$0xff]
          %v1770 = vld [vmem:[#allocation18 + $0xb0] sm:$0xf]
          %v1771 = vld [vmem:[#allocation18 + $0xb4] sm:$0xff]
          %v1772 = vld [vmem:[#allocation18 + $0xbc] sm:$0xf]
          %v1805 = vunpack.c.l.b16 %v1741
          %v1806 = vunpack.c.h.b16 %v1741
          %v1807 = vunpack.c.l.b16 %v1742
          %v1808 = vunpack.c.l.b16 %v1743
          %v1809 = vunpack.c.h.b16 %v1743
          %v1810 = vunpack.c.l.b16 %v1744
          %v1811 = vunpack.c.l.b16 %v1745
          %v1812 = vunpack.c.h.b16 %v1745
          %v1813 = vunpack.c.l.b16 %v1746
          %v1814 = vunpack.c.l.b16 %v1747
          %v1815 = vunpack.c.h.b16 %v1747
          %v1816 = vunpack.c.l.b16 %v1748
          %v1817 = vunpack.c.l.b16 %v1749
          %v1818 = vunpack.c.h.b16 %v1749
          %v1819 = vunpack.c.l.b16 %v1750
          %v1820 = vunpack.c.l.b16 %v1751
          %v1821 = vunpack.c.h.b16 %v1751
          %v1822 = vunpack.c.l.b16 %v1752
          %v1823 = vunpack.c.l.b16 %v1753
          %v1824 = vunpack.c.h.b16 %v1753
          %v1825 = vunpack.c.l.b16 %v1754
          %v1826 = vunpack.c.l.b16 %v1755
          %v1827 = vunpack.c.h.b16 %v1755
          %v1828 = vunpack.c.l.b16 %v1756
          %v1829 = vunpack.c.l.b16 %v1757
          %v1830 = vunpack.c.h.b16 %v1757
          %v1831 = vunpack.c.l.b16 %v1758
          %v1832 = vunpack.c.l.b16 %v1759
          %v1833 = vunpack.c.h.b16 %v1759
          %v1834 = vunpack.c.l.b16 %v1760
          %v1835 = vunpack.c.l.b16 %v1761
          %v1836 = vunpack.c.h.b16 %v1761
          %v1837 = vunpack.c.l.b16 %v1762
          %v1838 = vunpack.c.l.b16 %v1763
          %v1839 = vunpack.c.h.b16 %v1763
          %v1840 = vunpack.c.l.b16 %v1764
          %v1841 = vunpack.c.l.b16 %v1765
          %v1842 = vunpack.c.h.b16 %v1765
          %v1843 = vunpack.c.l.b16 %v1766
          %v1844 = vunpack.c.l.b16 %v1767
          %v1845 = vunpack.c.h.b16 %v1767
          %v1846 = vunpack.c.l.b16 %v1768
          %v1847 = vunpack.c.l.b16 %v1769
          %v1848 = vunpack.c.h.b16 %v1769
          %v1849 = vunpack.c.l.b16 %v1770
          %v1850 = vunpack.c.l.b16 %v1771
          %v1851 = vunpack.c.h.b16 %v1771
          %v1852 = vunpack.c.l.b16 %v1772
          %v1853 = vpack.c.b16 %v1808, %v1805
          %v1854 = vpack.c.b16 %v1809, %v1806
          %v1855 = vpack.c.b16 %v1810, %v1807
          %v1856 = vpack.c.b16 %v1814, %v1811
          %v1857 = vpack.c.b16 %v1815, %v1812
          %v1858 = vpack.c.b16 %v1816, %v1813
          %v1859 = vpack.c.b16 %v1820, %v1817
          %v1860 = vpack.c.b16 %v1821, %v1818
          %v1861 = vpack.c.b16 %v1822, %v1819
          %v1862 = vpack.c.b16 %v1826, %v1823
          %v1863 = vpack.c.b16 %v1827, %v1824
          %v1864 = vpack.c.b16 %v1828, %v1825
          %v1865 = vpack.c.b16 %v1832, %v1829
          %v1866 = vpack.c.b16 %v1833, %v1830
          %v1867 = vpack.c.b16 %v1834, %v1831
          %v1868 = vpack.c.b16 %v1838, %v1835
          %v1869 = vpack.c.b16 %v1839, %v1836
          %v1870 = vpack.c.b16 %v1840, %v1837
          %v1871 = vpack.c.b16 %v1844, %v1841
          %v1872 = vpack.c.b16 %v1845, %v1842
          %v1873 = vpack.c.b16 %v1846, %v1843
          %v1874 = vpack.c.b16 %v1850, %v1847
          %v1875 = vpack.c.b16 %v1851, %v1848
          %v1876 = vpack.c.b16 %v1852, %v1849
          %1901 = vmatpush.bf16.msra.mxu0 %v1874
          %1902 = vmatpush.bf16.msra.mxu0 %v1871
          %1903 = vmatpush.bf16.msra.mxu0 %v1868
          %1904 = vmatpush.bf16.msra.mxu0 %v1865
          %1905 = vmatpush.bf16.msra.mxu0 %v1862
          %1906 = vmatpush.bf16.msra.mxu0 %v1859
          %1907 = vmatpush.bf16.msra.mxu0 %v1856
          %1908 = vmatpush.bf16.msra.mxu0 %v1853
          %1909 = vmatmul.bf16.gmra.mxu0 %v1740
          %v1910 = vpop.f32.mrf.mxu0
          %v1911 = vadd.f32 0.0, %v1910
          %v1912 = vpop.f32.mrf.mxu0
          %1913 = vdwg.mxu0
          %1914 = vmatpush.bf16.msra.mxu0 %v1875
          %1915 = vmatpush.bf16.msra.mxu0 %v1872
          %1916 = vmatpush.bf16.msra.mxu0 %v1869
          %1917 = vmatpush.bf16.msra.mxu0 %v1866
          %1918 = vmatpush.bf16.msra.mxu0 %v1863
          %1919 = vmatpush.bf16.msra.mxu0 %v1860
          %1920 = vmatpush.bf16.msra.mxu0 %v1857
          %1921 = vmatpush.bf16.msra.mxu0 %v1854
          %1922 = vmatmul.bf16.gmra.mxu0 %v1740
          %v1923 = vpop.f32.mrf.mxu0
          %v1924 = vadd.f32 0.0, %v1923
          %v1925 = vpop.f32.mrf.mxu0
          %1926 = vdwg.mxu0
          %1927 = vmatpush.bf16.msra.mxu0 %v1876
          %1928 = vmatpush.bf16.msra.mxu0 %v1873
          %1929 = vmatpush.bf16.msra.mxu0 %v1870
          %1930 = vmatpush.bf16.msra.mxu0 %v1867
          %1931 = vmatpush.bf16.msra.mxu0 %v1864
          %1932 = vmatpush.bf16.msra.mxu0 %v1861
          %1933 = vmatpush.bf16.msra.mxu0 %v1858
          %1934 = vmatpush.bf16.msra.mxu0 %v1855
          %1935 = vmatmul.bf16.gmra.mxu0 %v1740
          %v1936 = vpop.f32.mrf.mxu0
          %v1937 = vadd.f32 0.0, %v1936
          %v1938 = vpop.f32.mrf.mxu0
          %1939 = vdwg.mxu0
          %v1972 = vunpack.c.l.b16 %v1708
          %v1973 = vunpack.c.h.b16 %v1708
          %v1974 = vunpack.c.l.b16 %v1709
          %v1975 = vunpack.c.l.b16 %v1710
          %v1976 = vunpack.c.h.b16 %v1710
          %v1977 = vunpack.c.l.b16 %v1711
          %v1978 = vunpack.c.l.b16 %v1712
          %v1979 = vunpack.c.h.b16 %v1712
          %v1980 = vunpack.c.l.b16 %v1713
          %v1981 = vunpack.c.l.b16 %v1714
          %v1982 = vunpack.c.h.b16 %v1714
          %v1983 = vunpack.c.l.b16 %v1715
          %v1984 = vunpack.c.l.b16 %v1716
          %v1985 = vunpack.c.h.b16 %v1716
          %v1986 = vunpack.c.l.b16 %v1717
          %v1987 = vunpack.c.l.b16 %v1718
          %v1988 = vunpack.c.h.b16 %v1718
          %v1989 = vunpack.c.l.b16 %v1719
          %v1990 = vunpack.c.l.b16 %v1720
          %v1991 = vunpack.c.h.b16 %v1720
          %v1992 = vunpack.c.l.b16 %v1721
          %v1993 = vunpack.c.l.b16 %v1722
          %v1994 = vunpack.c.h.b16 %v1722
          %v1995 = vunpack.c.l.b16 %v1723
          %v1996 = vunpack.c.l.b16 %v1724
          %v1997 = vunpack.c.h.b16 %v1724
          %v1998 = vunpack.c.l.b16 %v1725
          %v1999 = vunpack.c.l.b16 %v1726
          %v2000 = vunpack.c.h.b16 %v1726
          %v2001 = vunpack.c.l.b16 %v1727
          %v2002 = vunpack.c.l.b16 %v1728
          %v2003 = vunpack.c.h.b16 %v1728
          %v2004 = vunpack.c.l.b16 %v1729
          %v2005 = vunpack.c.l.b16 %v1730
          %v2006 = vunpack.c.h.b16 %v1730
          %v2007 = vunpack.c.l.b16 %v1731
          %v2008 = vunpack.c.l.b16 %v1732
          %v2009 = vunpack.c.h.b16 %v1732
          %v2010 = vunpack.c.l.b16 %v1733
          %v2011 = vunpack.c.l.b16 %v1734
          %v2012 = vunpack.c.h.b16 %v1734
          %v2013 = vunpack.c.l.b16 %v1735
          %v2014 = vunpack.c.l.b16 %v1736
          %v2015 = vunpack.c.h.b16 %v1736
          %v2016 = vunpack.c.l.b16 %v1737
          %v2017 = vunpack.c.l.b16 %v1738
          %v2018 = vunpack.c.h.b16 %v1738
          %v2019 = vunpack.c.l.b16 %v1739
          %v2020 = vpack.c.b16 %v1975, %v1972
          %v2021 = vpack.c.b16 %v1976, %v1973
          %v2022 = vpack.c.b16 %v1977, %v1974
          %v2023 = vpack.c.b16 %v1981, %v1978
          %v2024 = vpack.c.b16 %v1982, %v1979
          %v2025 = vpack.c.b16 %v1983, %v1980
          %v2026 = vpack.c.b16 %v1987, %v1984
          %v2027 = vpack.c.b16 %v1988, %v1985
          %v2028 = vpack.c.b16 %v1989, %v1986
          %v2029 = vpack.c.b16 %v1993, %v1990
          %v2030 = vpack.c.b16 %v1994, %v1991
          %v2031 = vpack.c.b16 %v1995, %v1992
          %v2032 = vpack.c.b16 %v1999, %v1996
          %v2033 = vpack.c.b16 %v2000, %v1997
          %v2034 = vpack.c.b16 %v2001, %v1998
          %v2035 = vpack.c.b16 %v2005, %v2002
          %v2036 = vpack.c.b16 %v2006, %v2003
          %v2037 = vpack.c.b16 %v2007, %v2004
          %v2038 = vpack.c.b16 %v2011, %v2008
          %v2039 = vpack.c.b16 %v2012, %v2009
          %v2040 = vpack.c.b16 %v2013, %v2010
          %v2041 = vpack.c.b16 %v2017, %v2014
          %v2042 = vpack.c.b16 %v2018, %v2015
          %v2043 = vpack.c.b16 %v2019, %v2016
          %2068 = vmatpush.bf16.msra.mxu0 %v2041
          %2069 = vmatpush.bf16.msra.mxu0 %v2038
          %2070 = vmatpush.bf16.msra.mxu0 %v2035
          %2071 = vmatpush.bf16.msra.mxu0 %v2032
          %2072 = vmatpush.bf16.msra.mxu0 %v2029
          %2073 = vmatpush.bf16.msra.mxu0 %v2026
          %2074 = vmatpush.bf16.msra.mxu0 %v2023
          %2075 = vmatpush.bf16.msra.mxu0 %v2020
          %2076 = vmatmul.bf16.gmra.mxu0 %v1707
          %v2077 = vpop.f32.mrf.mxu0
          %v2078 = vadd.f32 %v1911, %v2077
          %v2079 = vpop.f32.mrf.mxu0
          %2080 = vdwg.mxu0
          %2081 = vmatpush.bf16.msra.mxu0 %v2042
          %2082 = vmatpush.bf16.msra.mxu0 %v2039
          %2083 = vmatpush.bf16.msra.mxu0 %v2036
          %2084 = vmatpush.bf16.msra.mxu0 %v2033
          %2085 = vmatpush.bf16.msra.mxu0 %v2030
          %2086 = vmatpush.bf16.msra.mxu0 %v2027
          %2087 = vmatpush.bf16.msra.mxu0 %v2024
          %2088 = vmatpush.bf16.msra.mxu0 %v2021
          %2089 = vmatmul.bf16.gmra.mxu0 %v1707
          %v2090 = vpop.f32.mrf.mxu0
          %v2091 = vadd.f32 %v1924, %v2090
          %v2092 = vpop.f32.mrf.mxu0
          %2093 = vdwg.mxu0
          %2094 = vmatpush.bf16.msra.mxu0 %v2043
          %2095 = vmatpush.bf16.msra.mxu0 %v2040
          %2096 = vmatpush.bf16.msra.mxu0 %v2037
          %2097 = vmatpush.bf16.msra.mxu0 %v2034
          %2098 = vmatpush.bf16.msra.mxu0 %v2031
          %2099 = vmatpush.bf16.msra.mxu0 %v2028
          %2100 = vmatpush.bf16.msra.mxu0 %v2025
          %2101 = vmatpush.bf16.msra.mxu0 %v2022
          %2102 = vmatmul.bf16.gmra.mxu0 %v1707
          %v2103 = vpop.f32.mrf.mxu0
          %v2104 = vadd.f32 %v1937, %v2103
          %v2105 = vpop.f32.mrf.mxu0
          %2106 = vdwg.mxu0
          %v2107 = vpack.c.bf16 %v1594, %v1594
          %v2108 = vld [vmem:[#allocation20] sm:$0xff]
          %v2109 = vld [vmem:[#allocation20 + $0x8] sm:$0xf]
          %v2110 = vld [vmem:[#allocation20 + $0xc] sm:$0xff]
          %v2111 = vld [vmem:[#allocation20 + $0x14] sm:$0xf]
          %v2112 = vld [vmem:[#allocation20 + $0x18] sm:$0xff]
          %v2113 = vld [vmem:[#allocation20 + $0x20] sm:$0xf]
          %v2114 = vld [vmem:[#allocation20 + $0x24] sm:$0xff]
          %v2115 = vld [vmem:[#allocation20 + $0x2c] sm:$0xf]
          %v2116 = vld [vmem:[#allocation20 + $0x30] sm:$0xff]
          %v2117 = vld [vmem:[#allocation20 + $0x38] sm:$0xf]
          %v2118 = vld [vmem:[#allocation20 + $0x3c] sm:$0xff]
          %v2119 = vld [vmem:[#allocation20 + $0x44] sm:$0xf]
          %v2120 = vld [vmem:[#allocation20 + $0x48] sm:$0xff]
          %v2121 = vld [vmem:[#allocation20 + $0x50] sm:$0xf]
          %v2122 = vld [vmem:[#allocation20 + $0x54] sm:$0xff]
          %v2123 = vld [vmem:[#allocation20 + $0x5c] sm:$0xf]
          %v2124 = vld [vmem:[#allocation20 + $0x60] sm:$0xff]
          %v2125 = vld [vmem:[#allocation20 + $0x68] sm:$0xf]
          %v2126 = vld [vmem:[#allocation20 + $0x6c] sm:$0xff]
          %v2127 = vld [vmem:[#allocation20 + $0x74] sm:$0xf]
          %v2128 = vld [vmem:[#allocation20 + $0x78] sm:$0xff]
          %v2129 = vld [vmem:[#allocation20 + $0x80] sm:$0xf]
          %v2130 = vld [vmem:[#allocation20 + $0x84] sm:$0xff]
          %v2131 = vld [vmem:[#allocation20 + $0x8c] sm:$0xf]
          %v2132 = vld [vmem:[#allocation20 + $0x90] sm:$0xff]
          %v2133 = vld [vmem:[#allocation20 + $0x98] sm:$0xf]
          %v2134 = vld [vmem:[#allocation20 + $0x9c] sm:$0xff]
          %v2135 = vld [vmem:[#allocation20 + $0xa4] sm:$0xf]
          %v2136 = vld [vmem:[#allocation20 + $0xa8] sm:$0xff]
          %v2137 = vld [vmem:[#allocation20 + $0xb0] sm:$0xf]
          %v2138 = vld [vmem:[#allocation20 + $0xb4] sm:$0xff]
          %v2139 = vld [vmem:[#allocation20 + $0xbc] sm:$0xf]
          %v2172 = vunpack.c.l.b16 %v2108
          %v2173 = vunpack.c.h.b16 %v2108
          %v2174 = vunpack.c.l.b16 %v2109
          %v2175 = vunpack.c.l.b16 %v2110
          %v2176 = vunpack.c.h.b16 %v2110
          %v2177 = vunpack.c.l.b16 %v2111
          %v2178 = vunpack.c.l.b16 %v2112
          %v2179 = vunpack.c.h.b16 %v2112
          %v2180 = vunpack.c.l.b16 %v2113
          %v2181 = vunpack.c.l.b16 %v2114
          %v2182 = vunpack.c.h.b16 %v2114
          %v2183 = vunpack.c.l.b16 %v2115
          %v2184 = vunpack.c.l.b16 %v2116
          %v2185 = vunpack.c.h.b16 %v2116
          %v2186 = vunpack.c.l.b16 %v2117
          %v2187 = vunpack.c.l.b16 %v2118
          %v2188 = vunpack.c.h.b16 %v2118
          %v2189 = vunpack.c.l.b16 %v2119
          %v2190 = vunpack.c.l.b16 %v2120
          %v2191 = vunpack.c.h.b16 %v2120
          %v2192 = vunpack.c.l.b16 %v2121
          %v2193 = vunpack.c.l.b16 %v2122
          %v2194 = vunpack.c.h.b16 %v2122
          %v2195 = vunpack.c.l.b16 %v2123
          %v2196 = vunpack.c.l.b16 %v2124
          %v2197 = vunpack.c.h.b16 %v2124
          %v2198 = vunpack.c.l.b16 %v2125
          %v2199 = vunpack.c.l.b16 %v2126
          %v2200 = vunpack.c.h.b16 %v2126
          %v2201 = vunpack.c.l.b16 %v2127
          %v2202 = vunpack.c.l.b16 %v2128
          %v2203 = vunpack.c.h.b16 %v2128
          %v2204 = vunpack.c.l.b16 %v2129
          %v2205 = vunpack.c.l.b16 %v2130
          %v2206 = vunpack.c.h.b16 %v2130
          %v2207 = vunpack.c.l.b16 %v2131
          %v2208 = vunpack.c.l.b16 %v2132
          %v2209 = vunpack.c.h.b16 %v2132
          %v2210 = vunpack.c.l.b16 %v2133
          %v2211 = vunpack.c.l.b16 %v2134
          %v2212 = vunpack.c.h.b16 %v2134
          %v2213 = vunpack.c.l.b16 %v2135
          %v2214 = vunpack.c.l.b16 %v2136
          %v2215 = vunpack.c.h.b16 %v2136
          %v2216 = vunpack.c.l.b16 %v2137
          %v2217 = vunpack.c.l.b16 %v2138
          %v2218 = vunpack.c.h.b16 %v2138
          %v2219 = vunpack.c.l.b16 %v2139
          %v2220 = vpack.c.b16 %v2175, %v2172
          %v2221 = vpack.c.b16 %v2176, %v2173
          %v2222 = vpack.c.b16 %v2177, %v2174
          %v2223 = vpack.c.b16 %v2181, %v2178
          %v2224 = vpack.c.b16 %v2182, %v2179
          %v2225 = vpack.c.b16 %v2183, %v2180
          %v2226 = vpack.c.b16 %v2187, %v2184
          %v2227 = vpack.c.b16 %v2188, %v2185
          %v2228 = vpack.c.b16 %v2189, %v2186
          %v2229 = vpack.c.b16 %v2193, %v2190
          %v2230 = vpack.c.b16 %v2194, %v2191
          %v2231 = vpack.c.b16 %v2195, %v2192
          %v2232 = vpack.c.b16 %v2199, %v2196
          %v2233 = vpack.c.b16 %v2200, %v2197
          %v2234 = vpack.c.b16 %v2201, %v2198
          %v2235 = vpack.c.b16 %v2205, %v2202
          %v2236 = vpack.c.b16 %v2206, %v2203
          %v2237 = vpack.c.b16 %v2207, %v2204
          %v2238 = vpack.c.b16 %v2211, %v2208
          %v2239 = vpack.c.b16 %v2212, %v2209
          %v2240 = vpack.c.b16 %v2213, %v2210
          %v2241 = vpack.c.b16 %v2217, %v2214
          %v2242 = vpack.c.b16 %v2218, %v2215
          %v2243 = vpack.c.b16 %v2219, %v2216
          %2268 = vmatpush.bf16.msra.mxu0 %v2241
          %2269 = vmatpush.bf16.msra.mxu0 %v2238
          %2270 = vmatpush.bf16.msra.mxu0 %v2235
          %2271 = vmatpush.bf16.msra.mxu0 %v2232
          %2272 = vmatpush.bf16.msra.mxu0 %v2229
          %2273 = vmatpush.bf16.msra.mxu0 %v2226
          %2274 = vmatpush.bf16.msra.mxu0 %v2223
          %2275 = vmatpush.bf16.msra.mxu0 %v2220
          %2276 = vmatmul.bf16.gmra.mxu0 %v2107
          %v2277 = vpop.f32.mrf.mxu0
          %v2278 = vadd.f32 0.0, %v2277
          %v2279 = vpop.f32.mrf.mxu0
          %2280 = vdwg.mxu0
          %2281 = vmatpush.bf16.msra.mxu0 %v2242
          %2282 = vmatpush.bf16.msra.mxu0 %v2239
          %2283 = vmatpush.bf16.msra.mxu0 %v2236
          %2284 = vmatpush.bf16.msra.mxu0 %v2233
          %2285 = vmatpush.bf16.msra.mxu0 %v2230
          %2286 = vmatpush.bf16.msra.mxu0 %v2227
          %2287 = vmatpush.bf16.msra.mxu0 %v2224
          %2288 = vmatpush.bf16.msra.mxu0 %v2221
          %2289 = vmatmul.bf16.gmra.mxu0 %v2107
          %v2290 = vpop.f32.mrf.mxu0
          %v2291 = vadd.f32 0.0, %v2290
          %v2292 = vpop.f32.mrf.mxu0
          %2293 = vdwg.mxu0
          %2294 = vmatpush.bf16.msra.mxu0 %v2243
          %2295 = vmatpush.bf16.msra.mxu0 %v2240
          %2296 = vmatpush.bf16.msra.mxu0 %v2237
          %2297 = vmatpush.bf16.msra.mxu0 %v2234
          %2298 = vmatpush.bf16.msra.mxu0 %v2231
          %2299 = vmatpush.bf16.msra.mxu0 %v2228
          %2300 = vmatpush.bf16.msra.mxu0 %v2225
          %2301 = vmatpush.bf16.msra.mxu0 %v2222
          %2302 = vmatmul.bf16.gmra.mxu0 %v2107
          %v2303 = vpop.f32.mrf.mxu0
          %v2304 = vadd.f32 0.0, %v2303
          %v2305 = vpop.f32.mrf.mxu0
          %2306 = vdwg.mxu0
          %v2307 = vadd.f32 %v2078, %v2278
          %v2308 = vadd.f32 %v2091, %v2291
          %v2309 = vadd.f32 %v2104, %v2304
          %v2310 = vld [vmem:[%s14] ss:$2 sm:$0x7]
          %v2312 = vperm.slane %v2310, 0
          %v2313 = vperm.slane %v2310, 1
          %v2314 = vperm.slane %v2310, 2
          %v2318 = vadd.f32 %v2307, %v2312
          %v2319 = vadd.f32 %v2308, %v2313
          %v2320 = vadd.f32 %v2309, %v2314
          %v2321 = vld [vmem:[#allocation21] sm:$0xff]
          %v2322 = vld [vmem:[#allocation21 + $0x8] sm:$0xf]
          %v2323 = vld [vmem:[#allocation21 + $0xc] sm:$0xff]
          %v2324 = vld [vmem:[#allocation21 + $0x14] sm:$0xf]
          %v2325 = vld [vmem:[#allocation21 + $0x18] sm:$0xff]
          %v2326 = vld [vmem:[#allocation21 + $0x20] sm:$0xf]
          %v2327 = vld [vmem:[#allocation21 + $0x24] sm:$0xff]
          %v2328 = vld [vmem:[#allocation21 + $0x2c] sm:$0xf]
          %v2329 = vld [vmem:[#allocation21 + $0x30] sm:$0xff]
          %v2330 = vld [vmem:[#allocation21 + $0x38] sm:$0xf]
          %v2331 = vld [vmem:[#allocation21 + $0x3c] sm:$0xff]
          %v2332 = vld [vmem:[#allocation21 + $0x44] sm:$0xf]
          %v2333 = vld [vmem:[#allocation21 + $0x48] sm:$0xff]
          %v2334 = vld [vmem:[#allocation21 + $0x50] sm:$0xf]
          %v2335 = vld [vmem:[#allocation21 + $0x54] sm:$0xff]
          %v2336 = vld [vmem:[#allocation21 + $0x5c] sm:$0xf]
          %v2337 = vld [vmem:[#allocation21 + $0x60] sm:$0xff]
          %v2338 = vld [vmem:[#allocation21 + $0x68] sm:$0xf]
          %v2339 = vld [vmem:[#allocation21 + $0x6c] sm:$0xff]
          %v2340 = vld [vmem:[#allocation21 + $0x74] sm:$0xf]
          %v2341 = vld [vmem:[#allocation21 + $0x78] sm:$0xff]
          %v2342 = vld [vmem:[#allocation21 + $0x80] sm:$0xf]
          %v2343 = vld [vmem:[#allocation21 + $0x84] sm:$0xff]
          %v2344 = vld [vmem:[#allocation21 + $0x8c] sm:$0xf]
          %v2345 = vld [vmem:[#allocation21 + $0x90] sm:$0xff]
          %v2346 = vld [vmem:[#allocation21 + $0x98] sm:$0xf]
          %v2347 = vld [vmem:[#allocation21 + $0x9c] sm:$0xff]
          %v2348 = vld [vmem:[#allocation21 + $0xa4] sm:$0xf]
          %v2349 = vld [vmem:[#allocation21 + $0xa8] sm:$0xff]
          %v2350 = vld [vmem:[#allocation21 + $0xb0] sm:$0xf]
          %v2351 = vld [vmem:[#allocation21 + $0xb4] sm:$0xff]
          %v2352 = vld [vmem:[#allocation21 + $0xbc] sm:$0xf]
          %s2353 = scalar_lea.vmem %s14, 1
          %v2354 = vld [vmem:[%s2353] ss:$2 sm:$0x7]
          %v2356 = vperm.slane %v2354, 0
          %v2357 = vperm.slane %v2354, 1
          %v2358 = vperm.slane %v2354, 2
          %v2394 = vunpack.c.l.b16 %v2321
          %v2395 = vunpack.c.h.b16 %v2321
          %v2396 = vunpack.c.l.b16 %v2322
          %v2397 = vunpack.c.l.b16 %v2323
          %v2398 = vunpack.c.h.b16 %v2323
          %v2399 = vunpack.c.l.b16 %v2324
          %v2400 = vunpack.c.l.b16 %v2325
          %v2401 = vunpack.c.h.b16 %v2325
          %v2402 = vunpack.c.l.b16 %v2326
          %v2403 = vunpack.c.l.b16 %v2327
          %v2404 = vunpack.c.h.b16 %v2327
          %v2405 = vunpack.c.l.b16 %v2328
          %v2406 = vunpack.c.l.b16 %v2329
          %v2407 = vunpack.c.h.b16 %v2329
          %v2408 = vunpack.c.l.b16 %v2330
          %v2409 = vunpack.c.l.b16 %v2331
          %v2410 = vunpack.c.h.b16 %v2331
          %v2411 = vunpack.c.l.b16 %v2332
          %v2412 = vunpack.c.l.b16 %v2333
          %v2413 = vunpack.c.h.b16 %v2333
          %v2414 = vunpack.c.l.b16 %v2334
          %v2415 = vunpack.c.l.b16 %v2335
          %v2416 = vunpack.c.h.b16 %v2335
          %v2417 = vunpack.c.l.b16 %v2336
          %v2418 = vunpack.c.l.b16 %v2337
          %v2419 = vunpack.c.h.b16 %v2337
          %v2420 = vunpack.c.l.b16 %v2338
          %v2421 = vunpack.c.l.b16 %v2339
          %v2422 = vunpack.c.h.b16 %v2339
          %v2423 = vunpack.c.l.b16 %v2340
          %v2424 = vunpack.c.l.b16 %v2341
          %v2425 = vunpack.c.h.b16 %v2341
          %v2426 = vunpack.c.l.b16 %v2342
          %v2427 = vunpack.c.l.b16 %v2343
          %v2428 = vunpack.c.h.b16 %v2343
          %v2429 = vunpack.c.l.b16 %v2344
          %v2430 = vunpack.c.l.b16 %v2345
          %v2431 = vunpack.c.h.b16 %v2345
          %v2432 = vunpack.c.l.b16 %v2346
          %v2433 = vunpack.c.l.b16 %v2347
          %v2434 = vunpack.c.h.b16 %v2347
          %v2435 = vunpack.c.l.b16 %v2348
          %v2436 = vunpack.c.l.b16 %v2349
          %v2437 = vunpack.c.h.b16 %v2349
          %v2438 = vunpack.c.l.b16 %v2350
          %v2439 = vunpack.c.l.b16 %v2351
          %v2440 = vunpack.c.h.b16 %v2351
          %v2441 = vunpack.c.l.b16 %v2352
          %v2442 = vpack.c.b16 %v2397, %v2394
          %v2443 = vpack.c.b16 %v2398, %v2395
          %v2444 = vpack.c.b16 %v2399, %v2396
          %v2445 = vpack.c.b16 %v2403, %v2400
          %v2446 = vpack.c.b16 %v2404, %v2401
          %v2447 = vpack.c.b16 %v2405, %v2402
          %v2448 = vpack.c.b16 %v2409, %v2406
          %v2449 = vpack.c.b16 %v2410, %v2407
          %v2450 = vpack.c.b16 %v2411, %v2408
          %v2451 = vpack.c.b16 %v2415, %v2412
          %v2452 = vpack.c.b16 %v2416, %v2413
          %v2453 = vpack.c.b16 %v2417, %v2414
          %v2454 = vpack.c.b16 %v2421, %v2418
          %v2455 = vpack.c.b16 %v2422, %v2419
          %v2456 = vpack.c.b16 %v2423, %v2420
          %v2457 = vpack.c.b16 %v2427, %v2424
          %v2458 = vpack.c.b16 %v2428, %v2425
          %v2459 = vpack.c.b16 %v2429, %v2426
          %v2460 = vpack.c.b16 %v2433, %v2430
          %v2461 = vpack.c.b16 %v2434, %v2431
          %v2462 = vpack.c.b16 %v2435, %v2432
          %v2463 = vpack.c.b16 %v2439, %v2436
          %v2464 = vpack.c.b16 %v2440, %v2437
          %v2465 = vpack.c.b16 %v2441, %v2438
          %2490 = vmatpush.bf16.msra.mxu0 %v2463
          %2491 = vmatpush.bf16.msra.mxu0 %v2460
          %2492 = vmatpush.bf16.msra.mxu0 %v2457
          %2493 = vmatpush.bf16.msra.mxu0 %v2454
          %2494 = vmatpush.bf16.msra.mxu0 %v2451
          %2495 = vmatpush.bf16.msra.mxu0 %v2448
          %2496 = vmatpush.bf16.msra.mxu0 %v2445
          %2497 = vmatpush.bf16.msra.mxu0 %v2442
          %2498 = vmatmul.bf16.gmra.mxu0 %v998
          %v2499 = vpop.f32.mrf.mxu0
          %v2500 = vadd.f32 %v2356, %v2499
          %v2501 = vpop.f32.mrf.mxu0
          %2502 = vdwg.mxu0
          %2503 = vmatpush.bf16.msra.mxu0 %v2464
          %2504 = vmatpush.bf16.msra.mxu0 %v2461
          %2505 = vmatpush.bf16.msra.mxu0 %v2458
          %2506 = vmatpush.bf16.msra.mxu0 %v2455
          %2507 = vmatpush.bf16.msra.mxu0 %v2452
          %2508 = vmatpush.bf16.msra.mxu0 %v2449
          %2509 = vmatpush.bf16.msra.mxu0 %v2446
          %2510 = vmatpush.bf16.msra.mxu0 %v2443
          %2511 = vmatmul.bf16.gmra.mxu0 %v998
          %v2512 = vpop.f32.mrf.mxu0
          %v2513 = vadd.f32 %v2357, %v2512
          %v2514 = vpop.f32.mrf.mxu0
          %2515 = vdwg.mxu0
          %2516 = vmatpush.bf16.msra.mxu0 %v2465
          %2517 = vmatpush.bf16.msra.mxu0 %v2462
          %2518 = vmatpush.bf16.msra.mxu0 %v2459
          %2519 = vmatpush.bf16.msra.mxu0 %v2456
          %2520 = vmatpush.bf16.msra.mxu0 %v2453
          %2521 = vmatpush.bf16.msra.mxu0 %v2450
          %2522 = vmatpush.bf16.msra.mxu0 %v2447
          %2523 = vmatpush.bf16.msra.mxu0 %v2444
          %2524 = vmatmul.bf16.gmra.mxu0 %v998
          %v2525 = vpop.f32.mrf.mxu0
          %v2526 = vadd.f32 %v2358, %v2525
          %v2527 = vpop.f32.mrf.mxu0
          %2528 = vdwg.mxu0
          %v2529 = vadd.f32 %v2318, %v2500
          %v2530 = vxor.u32 %v2529, 2147483648
          %v2531 = vmul.f32 %v2530, 1.442695
          %v2532 = vpow.pop %v2531
          %v2533 = vadd.f32 %v2532, 1.0
          %v2534 = vrcp.pop %v2533
          %v2535 = vmul.f32 %v2533, %v2534
          %v2536 = vsub.f32 1.0, %v2535
          %v2537 = vmul.f32 %v2534, %v2536
          %v2538 = vadd.f32 %v2534, %v2537
          %vm2539 = vweird.f32 %v2533
          %vm2540 = vweird.f32 %v2534
          %vm2541 = vmor %vm2539, %vm2540
          %v2542 = vsel %vm2541, %v2534, %v2538
          %v2543 = vand.u32 2147483647, %v2533
          %vm2544 = vcmp.eq.f32.partialorder %v2543, 8.507059e+37
          %v2545 = vand.u32 %v2533, 2147483648
          %v2546 = vor.u32 1.1754944e-38, %v2545
          %v2547 = vsel %vm2544, %v2546, %v2542
          %v2548 = vmul.f32 1.0, %v2547
          %v2549 = vadd.f32 %v2319, %v2513
          %v2550 = vxor.u32 %v2549, 2147483648
          %v2551 = vmul.f32 %v2550, 1.442695
          %v2552 = vpow.pop %v2551
          %v2553 = vadd.f32 %v2552, 1.0
          %v2554 = vrcp.pop %v2553
          %v2555 = vmul.f32 %v2553, %v2554
          %v2556 = vsub.f32 1.0, %v2555
          %v2557 = vmul.f32 %v2554, %v2556
          %v2558 = vadd.f32 %v2554, %v2557
          %vm2559 = vweird.f32 %v2553
          %vm2560 = vweird.f32 %v2554
          %vm2561 = vmor %vm2559, %vm2560
          %v2562 = vsel %vm2561, %v2554, %v2558
          %v2563 = vand.u32 2147483647, %v2553
          %vm2564 = vcmp.eq.f32.partialorder %v2563, 8.507059e+37
          %v2565 = vand.u32 %v2553, 2147483648
          %v2566 = vor.u32 1.1754944e-38, %v2565
          %v2567 = vsel %vm2564, %v2566, %v2562
          %v2568 = vmul.f32 1.0, %v2567
          %v2569 = vmul.f32 %v2548, %v2526
          %v2570 = vadd.f32 %v2320, %v2569
          %v2571 = vtanh.pop %v2570
          %v2572 = vsub.f32 1.0, %v2568
          %v2573 = vmul.f32 %v2572, %v2571
          %v2574 = vmul.f32 %v2568, %v996
          %v2575 = vadd.f32 %v2573, %v2574
          %2576 = vst [vmem:[#allocation2] sm:$0xff] %v2575
          %2577 = vst [vmem:[%s964] sm:$0xff] %v2575
        $region144: #{tpu_custom_call.1} parent=87 // pred_fallthru
          _
        %v2578 = vld [vmem:[#allocation2] sm:$0xff]
        %v2579 = vpack.c.bf16 %v2578, %v2578
        %v2580 = vld [vmem:[%s882] sm:$0xf]
        %v2581 = vld [vmem:[%s882 + $0x4] sm:$0xf]
        %v2582 = vld [vmem:[%s882 + $0x8] sm:$0xf]
        %v2583 = vld [vmem:[%s882 + $0xc] sm:$0xf]
        %v2584 = vld [vmem:[%s882 + $0x10] sm:$0xf]
        %v2585 = vld [vmem:[%s882 + $0x14] sm:$0xf]
        %v2586 = vld [vmem:[%s882 + $0x18] sm:$0xf]
        %v2587 = vld [vmem:[%s882 + $0x1c] sm:$0xf]
        %v2588 = vld [vmem:[%s882 + $0x20] sm:$0xf]
        %v2589 = vld [vmem:[%s882 + $0x24] sm:$0xf]
        %v2590 = vld [vmem:[%s882 + $0x28] sm:$0xf]
        %v2591 = vld [vmem:[%s882 + $0x2c] sm:$0xf]
        %v2592 = vld [vmem:[%s882 + $0x30] sm:$0xf]
        %v2593 = vld [vmem:[%s882 + $0x34] sm:$0xf]
        %v2594 = vld [vmem:[%s882 + $0x38] sm:$0xf]
        %v2595 = vld [vmem:[%s882 + $0x3c] sm:$0xf]
        %v2596 = vld [vmem:[%s991] sm:$0x1]
        %v2598 = vperm.slane %v2596, 0
        %v2616 = vunpack.c.l.b16 %v2580
        %v2617 = vunpack.c.l.b16 %v2581
        %v2618 = vunpack.c.l.b16 %v2582
        %v2619 = vunpack.c.l.b16 %v2583
        %v2620 = vunpack.c.l.b16 %v2584
        %v2621 = vunpack.c.l.b16 %v2585
        %v2622 = vunpack.c.l.b16 %v2586
        %v2623 = vunpack.c.l.b16 %v2587
        %v2624 = vunpack.c.l.b16 %v2588
        %v2625 = vunpack.c.l.b16 %v2589
        %v2626 = vunpack.c.l.b16 %v2590
        %v2627 = vunpack.c.l.b16 %v2591
        %v2628 = vunpack.c.l.b16 %v2592
        %v2629 = vunpack.c.l.b16 %v2593
        %v2630 = vunpack.c.l.b16 %v2594
        %v2631 = vunpack.c.l.b16 %v2595
        %v2632 = vpack.c.b16 %v2617, %v2616
        %v2633 = vpack.c.b16 %v2619, %v2618
        %v2634 = vpack.c.b16 %v2621, %v2620
        %v2635 = vpack.c.b16 %v2623, %v2622
        %v2636 = vpack.c.b16 %v2625, %v2624
        %v2637 = vpack.c.b16 %v2627, %v2626
        %v2638 = vpack.c.b16 %v2629, %v2628
        %v2639 = vpack.c.b16 %v2631, %v2630
        %2648 = vmatpush.bf16.msra.mxu0 %v2639
        %2649 = vmatpush.bf16.msra.mxu0 %v2638
        %2650 = vmatpush.bf16.msra.mxu0 %v2637
        %2651 = vmatpush.bf16.msra.mxu0 %v2636
        %2652 = vmatpush.bf16.msra.mxu0 %v2635
        %2653 = vmatpush.bf16.msra.mxu0 %v2634
        %2654 = vmatpush.bf16.msra.mxu0 %v2633
        %2655 = vmatpush.bf16.msra.mxu0 %v2632
        %2656 = vmatmul.bf16.gmra.mxu0 %v2579
        %v2657 = vpop.f32.mrf.mxu0
        %v2658 = vadd.f32 %v2598, %v2657
        %v2659 = vpop.f32.mrf.mxu0
        %2660 = vdwg.mxu0
        %2661 = vst [vmem:[%s978] sm:$0xff] %v2658
        %s2662 = sand.u32 %s467, 1
        %s2663 = scalar_lea.sflag [#allocation5], %s2662
        %s2664 = sand.u32 %s467, 1
        %s2665 = smul.addr %s2664, 8
        %s2666 = scalar_lea.vmem [#allocation24], %s2665
        %s2667 = sand.u32 %s50, 1
        %s2668 = scalar_lea.sflag [#allocation26], %s2667
        %s2669 = sand.u32 %s493, 1
        %s2670 = smul.addr %s2669, 8
        %s2671 = scalar_lea.vmem [#allocation25], %s2670
        %s2672 = sand.u32 %s50, 1
        %s2673 = scalar_lea.sflag [#allocation26], %s2672
        %s2674 = sand.u32 %s521, 1
        %s2675 = smul.addr %s2674, 8
        %s2676 = scalar_lea.vmem [#allocation27], %s2675
        // Predicated region
        $region145: #{tpu_custom_call.1} parent=87 // pred_check
          %p2677 = pneg %p477
        $region146: #{tpu_custom_call.1} parent=87 // pred_check_branch
          %2679 = sbr.rel (%p2677) target = $region148
        $region147: #{tpu_custom_call.1} parent=87 // pred_region
          %2681 = vsyncadd %s2663, 0
          %s2682 = smul.addr %s54, 8
          %s2683 = scalar_lea.hbm %s17, %s2682
          %s2685 = sshll.u32 %s2666, 4
          %s2686 = int_to_ptr.vmem [resolvable:$true] %s2685
          %s2687 = sshll.u32 %s2683, 4
          %s2688 = int_to_ptr.hbm [resolvable:$true] %s2687
          %2690 = dma.vmem_to_hbm [thread:$0]  %s2686, 128, %s2688, %s2663
        $region148: #{tpu_custom_call.1} parent=87 // pred_fallthru
          _
        // Predicated region
        $region149: #{tpu_custom_call.1} parent=87 // pred_check
          %p2691 = pneg %p503
        $region150: #{tpu_custom_call.1} parent=87 // pred_check_branch
          %2693 = sbr.rel (%p2691) target = $region152
        $region151: #{tpu_custom_call.1} parent=87 // pred_region
          %2695 = vsyncadd %s2668, 0
          %s2696 = smul.addr %s54, 8
          %s2697 = scalar_lea.hbm %s18, %s2696
          %s2699 = sshll.u32 %s2671, 4
          %s2700 = int_to_ptr.vmem [resolvable:$true] %s2699
          %s2701 = sshll.u32 %s2697, 4
          %s2702 = int_to_ptr.hbm [resolvable:$true] %s2701
          %2704 = dma.vmem_to_hbm [thread:$0]  %s2700, 128, %s2702, %s2668
        $region152: #{tpu_custom_call.1} parent=87 // pred_fallthru
          _
        // Predicated region
        $region153: #{tpu_custom_call.1} parent=87 // pred_check
          %p2705 = pneg %p531
        $region154: #{tpu_custom_call.1} parent=87 // pred_check_branch
          %2707 = sbr.rel (%p2705) target = $region156
        $region155: #{tpu_custom_call.1} parent=87 // pred_region
          %2709 = vsyncadd %s2673, 0
          %s2710 = smul.addr %s54, 2
          %s2711 = sadd.s32 %s55, %s2710
          %s2712 = smul.addr %s2711, 8
          %s2713 = scalar_lea.hbm %s19, %s2712
          %s2715 = sshll.u32 %s2676, 4
          %s2716 = int_to_ptr.vmem [resolvable:$true] %s2715
          %s2717 = sshll.u32 %s2713, 4
          %s2718 = int_to_ptr.hbm [resolvable:$true] %s2717
          %2720 = dma.vmem_to_hbm [thread:$0]  %s2716, 128, %s2718, %s2673
        $region156: #{tpu_custom_call.1} parent=87 // pred_fallthru
          _
      $region88: #{tpu_custom_call.1} parent=5 // pred_fallthru
        _
      %p2721 = scmp.le.s32.totalorder 2, %s45
      // Predicated region
      $region157: #{tpu_custom_call.1} parent=5 // pred_check
        %p2722 = pneg %p2721
      $region158: #{tpu_custom_call.1} parent=5 // pred_check_branch
        %2724 = sbr.rel (%p2722) target = $region160
      $region159: #{tpu_custom_call.1} parent=5 // pred_region
        %s2725 = ssub.s32 %s45, 2
        // Predicated region
        $region161: #{tpu_custom_call.1} parent=159 // pred_check
          %p2726 = pneg %p483
        $region162: #{tpu_custom_call.1} parent=159 // pred_check_branch
          %2728 = sbr.rel (%p2726) target = $region164
        $region163: #{tpu_custom_call.1} parent=159 // pred_region
          %s2729 = sand.u32 %s468, 1
          %s2730 = scalar_lea.sflag [#allocation5], %s2729
          %s2731 = sand.u32 %s468, 1
          %s2732 = smul.addr %s2731, 8
          %s2733 = scalar_lea.vmem [#allocation24], %s2732
          %2735 = dma.done %s2730, 128
        $region164: #{tpu_custom_call.1} parent=159 // pred_fallthru
          _
        // Predicated region
        $region165: #{tpu_custom_call.1} parent=159 // pred_check
          %p2736 = pneg %p509
        $region166: #{tpu_custom_call.1} parent=159 // pred_check_branch
          %2738 = sbr.rel (%p2736) target = $region168
        $region167: #{tpu_custom_call.1} parent=159 // pred_region
          %s2739 = sand.u32 %s51, 1
          %s2740 = scalar_lea.sflag [#allocation26], %s2739
          %s2741 = sand.u32 %s494, 1
          %s2742 = smul.addr %s2741, 8
          %s2743 = scalar_lea.vmem [#allocation25], %s2742
          %2745 = dma.done %s2740, 128
        $region168: #{tpu_custom_call.1} parent=159 // pred_fallthru
          _
        // Predicated region
        $region169: #{tpu_custom_call.1} parent=159 // pred_check
          %p2746 = pneg %p537
        $region170: #{tpu_custom_call.1} parent=159 // pred_check_branch
          %2748 = sbr.rel (%p2746) target = $region172
        $region171: #{tpu_custom_call.1} parent=159 // pred_region
          %s2749 = sand.u32 %s51, 1
          %s2750 = scalar_lea.sflag [#allocation26], %s2749
          %s2751 = sand.u32 %s522, 1
          %s2752 = smul.addr %s2751, 8
          %s2753 = scalar_lea.vmem [#allocation27], %s2752
          %2755 = dma.done %s2750, 128
        $region172: #{tpu_custom_call.1} parent=159 // pred_fallthru
          _
      $region160: #{tpu_custom_call.1} parent=5 // pred_fallthru
        _
    $region6: #{tpu_custom_call.1} parent=1 // loop_footer
      %s49 = sadd.s32 1, %s45
    $region7: #{tpu_custom_call.1} parent=1 // loop_footer_branch
      %44 = sbr.rel target = $region3
    $region8: #{tpu_custom_call.1} parent=1 // loop_exit
      _
    %2756 = vsyncpa [#allocation4], 1
    %s2757 = scalar_lea.sflag [#allocation4], 1
    %2758 = vsyncpa %s2757, 1
    %2759 = vsyncpa [#allocation7], 1
    %s2760 = scalar_lea.sflag [#allocation7], 1
    %2761 = vsyncpa %s2760, 1
    %2762 = vsyncpa [#allocation10], 1
    %s2763 = scalar_lea.sflag [#allocation10], 1
    %2764 = vsyncpa %s2763, 1
    %2765 = vsyncpa [#allocation13], 1
    %2766 = vsyncpa [#allocation16], 1
    %2767 = vsyncpa [#allocation19], 1
    %2768 = vsyncpa [#allocation22], 1
    %2769 = vsyncpa [#allocation5], 1
    %s2770 = scalar_lea.sflag [#allocation5], 1
    %2771 = vsyncpa %s2770, 1
    %2772 = vsyncpa [#allocation26], 1
    %s2773 = scalar_lea.sflag [#allocation26], 1
    %2774 = vsyncpa %s2773, 1

</llo_original>
